<compile_context>
chip_gen: v6e
topology: v6e:2x2x1
jax: 0.10.0
libtpu: 0.0.40
codegen_flags: <defaults>
</compile_context>

<pallas_src>
import functools

import jax
import jax.numpy as jnp
from jax import lax
from jax.experimental import pallas as pl
from jax.experimental.pallas import tpu as pltpu


def _conv3x3_rows(slab, w_ref, out_rows, W, C, use_concat):
    """3x3 'same' conv over a padded slab.

    slab : (out_rows+2, W+2, C) value (already zero-padded where needed)
    w_ref: (9*C, Cout) ref (rows ordered dy,dx,c)  if use_concat
           (9, C, Cout) ref                        otherwise
    returns (out_rows*W, Cout) f32
    """
    if use_concat:
        # Shallow layers: fold all 9 taps into one K=9C MXU contraction.
        taps = [slab[dy:dy + out_rows, dx:dx + W, :]
                for dy in range(3) for dx in range(3)]
        patches = jnp.concatenate(taps, axis=-1).reshape(out_rows * W, 9 * C)
        return jnp.dot(patches, w_ref[...], preferred_element_type=jnp.float32)
    # Deep layers (C > ~32): K=C already fills the MXU; accumulate 9 dots and
    # skip the 9x materialized im2col copy (VMEM transient + vst/vld pressure).
    acc = None
    for dy in range(3):
        for dx in range(3):
            t = dy * 3 + dx
            tap = slab[dy:dy + out_rows, dx:dx + W, :].reshape(out_rows * W, C)
            part = jnp.dot(tap, w_ref[t], preferred_element_type=jnp.float32)
            acc = part if acc is None else acc + part
    return acc


def _double_conv_kernel(xa_ref, xb_ref, w1_ref, s1_ref, b1_ref,
                        w2_ref, s2_ref, b2_ref, o_ref, h_ref,
                        *, last_zero_row, conv1_concat, conv2_concat):
    """One (batch, row-tile) grid step.

    xa_ref : (1, rt, W+2, Cin)   main rows of the padded input for this tile
    xb_ref : (1, 4,  W+2, Cin)   4-row bottom halo of the padded input
    w*_ref : im2col / per-tap conv weights (see _conv3x3_rows)
    s*/b*  : (1, Cout) f32       folded eval-BN + conv-bias scale / bias
    o_ref  : (1, rt, W, Cout)
    h_ref  : VMEM (rt+2, W+2, Cout) padded conv1 activation scratch
    """
    _, rt, wp, _cin = xa_ref.shape
    W = wp - 2
    Cout = o_ref.shape[-1]
    cdt = h_ref.dtype
    r = pl.program_id(1)

    # Halo'd input slab: rt+4 padded rows = logical rows [r*rt-2, r*rt+rt+2).
    slab = jnp.concatenate([xa_ref[0], xb_ref[0]], axis=0)       # (rt+4, W+2, Cin)

    # ---- conv1 + BN(eval) + ReLU over rt+2 rows (1-row halo for conv2) ----
    h = _conv3x3_rows(slab, w1_ref, rt + 2, W, _cin, conv1_concat)
    h = jnp.maximum(h * s1_ref[...] + b1_ref[...], 0.0)          # ((rt+2)*W, Cout) f32

    # Padded intermediate scratch. Column borders re-zeroed every step (two
    # narrow stores) so correctness never depends on grid/core assignment;
    # the interior is fully overwritten each step.
    h_ref[:, 0:1, :] = jnp.zeros((rt + 2, 1, Cout), cdt)
    h_ref[:, W + 1:W + 2, :] = jnp.zeros((rt + 2, 1, Cout), cdt)
    h_ref[:, 1:W + 1, :] = h.reshape(rt + 2, W, Cout).astype(cdt)

    # conv1 halo rows that lie outside the real image must be ZERO (they are
    # conv2's zero padding), not conv1-of-zero-extended-input.
    @pl.when(r == 0)
    def _():
        h_ref[0:1, :, :] = jnp.zeros((1, W + 2, Cout), cdt)

    @pl.when(r == pl.num_programs(1) - 1)
    def _():
        h_ref[last_zero_row:last_zero_row + 1, :, :] = jnp.zeros((1, W + 2, Cout), cdt)

    # ---- conv2 + BN(eval) + ReLU over the rt output rows ----
    y = _conv3x3_rows(h_ref[...], w2_ref, rt, W, Cout, conv2_concat)
    y = jnp.maximum(y * s2_ref[...] + b2_ref[...], 0.0)
    o_ref[...] = y.reshape(1, rt, W, Cout).astype(o_ref.dtype)


def _pick_row_tile(H, W, Cin, Cout, compute_dtype, budget_bytes=6 * 1024 * 1024):
    """Channel-aware row tile: cap the per-tile transient footprint (patches /
    taps + f32 acc + slabs) at ~budget_bytes; keep rt a multiple of 4 and, when
    possible, a divisor of H."""
    itemsize = jnp.dtype(compute_dtype).itemsize
    cmax = max(Cin, Cout)
    per_row = W * (9 * cmax * itemsize + Cout * 4 + (Cin + Cout) * itemsize + Cout * 4)
    rt = budget_bytes // max(per_row, 1)
    rt = int(max(4, min(rt, max(H, 4))))
    rt = max(4, (rt // 4) * 4)
    if H % 4 == 0:
        while rt > 4 and H % rt != 0:
            rt -= 4
    return rt


def _vmem_limit_bytes():
    """Generation-aware scoped VMEM budget (v5e/v6e: 128 MiB physical, v7x: 64 MiB),
    with ~1/4 headroom for Mosaic-internal scratch."""
    try:
        cap = getattr(pltpu.get_tpu_info(), "vmem_capacity_bytes", None)
        if cap:
            return int(min(cap * 3 // 4, 96 * 1024 * 1024))
    except Exception:
        pass
    return 64 * 1024 * 1024


def double_conv_pallas_nhwc(x_nhwc, w1_2d, s1, b1, w2_2d, s2, b2, *,
                            compute_dtype=jnp.bfloat16, out_dtype=jnp.float32,
                            row_tile=None, im2col_concat_max_c=32):
    """DoubleConv forward, NHWC in / NHWC out (preferred entry point).

    x_nhwc : (N, H, W, Cin) float32
    w1_2d  : (9*Cin,  Cout) im2col-reshaped conv1 weight (rows = dy, dx, cin)
    w2_2d  : (9*Cout, Cout) im2col-reshaped conv2 weight
    s*, b* : (1, Cout) f32  folded eval-BN + conv-bias scale / bias
    out_dtype : pass jnp.bfloat16 when this feeds another bf16 layer to halve
                output writeback traffic.
    """
    N, H, W, Cin = x_nhwc.shape
    Cout = w1_2d.shape[-1]
    assert w1_2d.shape == (9 * Cin, Cout) and w2_2d.shape == (9 * Cout, Cout)

    rt = row_tile if row_tile is not None else _pick_row_tile(H, W, Cin, Cout, compute_dtype)
    rt = int(max(4, (rt // 4) * 4))          # bottom-halo block spec needs rt % 4 == 0
    h_tiles = pl.cdiv(H, rt)
    h_core = h_tiles * rt                     # grid-covered rows (>= H)

    # ONE fused pad+cast HBM pass: +2 rows on top (conv halo), enough rows on the
    # bottom to cover the last (possibly partial) tile plus its halo, +1 column on
    # each side.  Replaces the previous separate wrapper cast.
    xp = jnp.pad(x_nhwc, ((0, 0), (2, h_core - H + 2), (1, 1), (0, 0))).astype(compute_dtype)

    conv1_concat = Cin <= im2col_concat_max_c
    conv2_concat = Cout <= im2col_concat_max_c

    w1_c = w1_2d.astype(compute_dtype)
    w2_c = w2_2d.astype(compute_dtype)
    if not conv1_concat:
        w1_c = w1_c.reshape(9, Cin, Cout)     # per-tap weights for the 9-dot path
    if not conv2_concat:
        w2_c = w2_c.reshape(9, Cout, Cout)
    w1_spec = (pl.BlockSpec((9 * Cin, Cout), lambda n, r: (0, 0)) if conv1_concat
               else pl.BlockSpec((9, Cin, Cout), lambda n, r: (0, 0, 0)))
    w2_spec = (pl.BlockSpec((9 * Cout, Cout), lambda n, r: (0, 0)) if conv2_concat
               else pl.BlockSpec((9, Cout, Cout), lambda n, r: (0, 0, 0)))

    s1 = s1.astype(jnp.float32)
    b1 = b1.astype(jnp.float32)
    s2 = s2.astype(jnp.float32)
    b2 = b2.astype(jnp.float32)

    kernel = functools.partial(
        _double_conv_kernel,
        last_zero_row=H - (h_tiles - 1) * rt + 1,   # conv1 row "H" inside last tile
        conv1_concat=conv1_concat,
        conv2_concat=conv2_concat)

    wp = W + 2
    out = pl.pallas_call(
        kernel,
        out_shape=jax.ShapeDtypeStruct((N, h_core, W, Cout), out_dtype),
        grid_spec=pltpu.PrefetchScalarGridSpec(
            num_scalar_prefetch=0,
            grid=(N, h_tiles),
            in_specs=[
                # main rt rows of the padded input for this tile
                pl.BlockSpec((1, rt, wp, Cin), lambda n, r: (n, r, 0, 0)),
                # 4-row bottom halo: padded rows [(r+1)*rt, (r+1)*rt + 4)
                pl.BlockSpec((1, 4, wp, Cin), lambda n, r: (n, (r + 1) * (rt // 4), 0, 0)),
                w1_spec,
                pl.BlockSpec((1, Cout), lambda n, r: (0, 0)),
                pl.BlockSpec((1, Cout), lambda n, r: (0, 0)),
                w2_spec,
                pl.BlockSpec((1, Cout), lambda n, r: (0, 0)),
                pl.BlockSpec((1, Cout), lambda n, r: (0, 0)),
            ],
            out_specs=pl.BlockSpec((1, rt, W, Cout), lambda n, r: (n, r, 0, 0)),
            scratch_shapes=[
                pltpu.VMEM((rt + 2, W + 2, Cout), compute_dtype),   # padded conv1 act
            ],
        ),
        compiler_params=pltpu.CompilerParams(
            dimension_semantics=("parallel", "parallel"),
            vmem_limit_bytes=_vmem_limit_bytes()),
    )(xp, xp, w1_c, s1, b1, w2_c, s2, b2)

    return out if h_core == H else out[:, :H]


def double_conv_pallas_nchw(x_nchw, w1_2d, s1, b1, w2_2d, s2, b2, **kw):
    """PyTorch-layout (NCHW) drop-in wrapper.

    NOTE: costs two extra HBM layout passes; prefer double_conv_pallas_nhwc and
    keep the surrounding model NHWC.
    """
    x = jnp.transpose(x_nchw, (0, 2, 3, 1))
    y = double_conv_pallas_nhwc(x, w1_2d, s1, b1, w2_2d, s2, b2, **kw)
    return jnp.transpose(y, (0, 3, 1, 2))


def _fold_conv_bn(w_oihw, conv_bias, gamma, beta, mean, var, eps=1e-5):
    """PyTorch OIHW conv weight + eval-mode BN -> (im2col weight, scale, bias)."""
    w_hwio = jnp.transpose(w_oihw, (2, 3, 1, 0))                # (3, 3, Cin, Cout)
    kh, kw, cin, cout = w_hwio.shape
    w2d = w_hwio.reshape(kh * kw * cin, cout)                   # rows = (dy, dx, cin)
    scale = gamma / jnp.sqrt(var + eps)
    bias = beta + scale * (conv_bias - mean)
    return w2d, scale[None, :], bias[None, :]


def _ref_double_conv(x, w1_oihw, cb1, g1, bt1, m1, v1,
                     w2_oihw, cb2, g2, bt2, m2, v2, eps=1e-5):
    """Pure-JAX reference (NCHW, eval-mode BN), mirrors the PyTorch module."""
    def conv_bn_relu(x, w, cb, g, bt, m, v):
        y = lax.conv_general_dilated(
            x, w, window_strides=(1, 1), padding=((1, 1), (1, 1)),
            dimension_numbers=("NCHW", "OIHW", "NCHW"))
        y = y + cb[None, :, None, None]
        y = (g[None, :, None, None] * (y - m[None, :, None, None])
             / jnp.sqrt(v[None, :, None, None] + eps) + bt[None, :, None, None])
        return jnp.maximum(y, 0.0)

    h = conv_bn_relu(x, w1_oihw, cb1, g1, bt1, m1, v1)
    return conv_bn_relu(h, w2_oihw, cb2, g2, bt2, m2, v2)


if __name__ == "__main__":
    N, Cin, Cout, H, W = 2, 4, 8, 16, 16

    key = jax.random.PRNGKey(0)
    keys = jax.random.split(key, 12)

    # Conv2d(in_c, out_c, 3, 1, 1) weights — PyTorch OIHW layout
    w1_oihw = 0.1 * jax.random.normal(keys[0], (Cout, Cin, 3, 3), jnp.float32)
    cb1 = 0.1 * jax.random.normal(keys[1], (Cout,), jnp.float32)
    w2_oihw = 0.1 * jax.random.normal(keys[2], (Cout, Cout, 3, 3), jnp.float32)
    cb2 = 0.1 * jax.random.normal(keys[3], (Cout,), jnp.float32)

    # BatchNorm2d params (eval mode): gamma, beta, running_mean, running_var
    g1 = 1.0 + 0.1 * jax.random.normal(keys[4], (Cout,), jnp.float32)
    bt1 = 0.1 * jax.random.normal(keys[5], (Cout,), jnp.float32)
    m1 = 0.05 * jax.random.normal(keys[6], (Cout,), jnp.float32)
    v1 = 0.5 + jnp.abs(jax.random.normal(keys[7], (Cout,), jnp.float32))
    g2 = jnp.ones((Cout,), jnp.float32)
    bt2 = jnp.zeros((Cout,), jnp.float32)
    m2 = jnp.zeros((Cout,), jnp.float32)
    v2 = jnp.ones((Cout,), jnp.float32)

    x_nchw = jax.random.normal(keys[8], (N, Cin, H, W), jnp.float32)

    # Fold conv-bias + eval-BN into per-channel scale/bias; im2col weights.
    w1_2d, s1, b1 = _fold_conv_bn(w1_oihw, cb1, g1, bt1, m1, v1)
    w2_2d, s2, b2 = _fold_conv_bn(w2_oihw, cb2, g2, bt2, m2, v2)

    # Pure-JAX reference (eval-mode BN), NCHW like the PyTorch module.
    ref_nchw = jax.block_until_ready(
        _ref_double_conv(x_nchw, w1_oihw, cb1, g1, bt1, m1, v1,
                         w2_oihw, cb2, g2, bt2, m2, v2))
    ref_nhwc = jnp.transpose(ref_nchw, (0, 2, 3, 1))
    x_nhwc = jnp.transpose(x_nchw, (0, 2, 3, 1))   # test-harness layout change only

    # 1) f32 compute, default row tile (single tile), concat-im2col path (strict).
    out_a = jax.block_until_ready(
        double_conv_pallas_nhwc(x_nhwc, w1_2d, s1, b1, w2_2d, s2, b2,
                                compute_dtype=jnp.float32))
    assert out_a.shape == (N, H, W, Cout), out_a.shape
    assert jnp.allclose(out_a, ref_nhwc, atol=1e-4, rtol=1e-4), float(
        jnp.max(jnp.abs(out_a - ref_nhwc)))

    # 2) f32 compute, forced multi-row-tile grid + forced 9-dot path (strict):
    #    exercises the halo recompute and the accumulated-dot conv.
    out_b = jax.block_until_ready(
        double_conv_pallas_nhwc(x_nhwc, w1_2d, s1, b1, w2_2d, s2, b2,
                                compute_dtype=jnp.float32, row_tile=8,
                                im2col_concat_max_c=0))
    assert jnp.allclose(out_b, ref_nhwc, atol=1e-4, rtol=1e-4), float(
        jnp.max(jnp.abs(out_b - ref_nhwc)))

    # 3) f32 compute, H not divisible by the row tile (exercises the padded
    #    bottom tile + output slice path).
    H2 = 12
    x2_nhwc = jax.random.normal(keys[9], (N, H2, W, Cin), jnp.float32)
    x2_nchw = jnp.transpose(x2_nhwc, (0, 3, 1, 2))
    ref2_nhwc = jnp.transpose(
        _ref_double_conv(x2_nchw, w1_oihw, cb1, g1, bt1, m1, v1,
                         w2_oihw, cb2, g2, bt2, m2, v2), (0, 2, 3, 1))
    out_c = jax.block_until_ready(
        double_conv_pallas_nhwc(x2_nhwc, w1_2d, s1, b1, w2_2d, s2, b2,
                                compute_dtype=jnp.float32, row_tile=8))
    assert out_c.shape == (N, H2, W, Cout), out_c.shape
    assert jnp.allclose(out_c, ref2_nhwc, atol=1e-4, rtol=1e-4), float(
        jnp.max(jnp.abs(out_c - ref2_nhwc)))

    # 4) Default bf16 MXU path through the NCHW drop-in wrapper (loose check:
    #    bf16 inputs/weights/intermediate, f32 accumulation and epilogue).
    out_d = jax.block_until_ready(
        double_conv_pallas_nchw(x_nchw, w1_2d, s1, b1, w2_2d, s2, b2))
    assert out_d.shape == (N, Cout, H, W), out_d.shape
    assert jnp.allclose(out_d, ref_nchw, atol=7e-2, rtol=7e-2), float(
        jnp.max(jnp.abs(out_d - ref_nchw)))

    print("KERNEL_OK")
</pallas_src>

<mosaic_0001>
module attributes {stable_mosaic.version = 11 : i64} {
  func.func @_double_conv_kernel(%arg0: i32, %arg1: i32, %arg2: memref<1x16x18x4xf32, #tpu.memory_space<vmem>>, %arg3: memref<1x4x18x4xf32, #tpu.memory_space<vmem>>, %arg4: memref<36x8xf32, #tpu.memory_space<vmem>>, %arg5: memref<1x8xf32, #tpu.memory_space<vmem>>, %arg6: memref<1x8xf32, #tpu.memory_space<vmem>>, %arg7: memref<72x8xf32, #tpu.memory_space<vmem>>, %arg8: memref<1x8xf32, #tpu.memory_space<vmem>>, %arg9: memref<1x8xf32, #tpu.memory_space<vmem>>, %arg10: memref<1x16x16x8xf32, #tpu.memory_space<vmem>>, %arg11: memref<18x18x8xf32, #tpu.memory_space<vmem>>) attributes {dimension_semantics = [#tpu.dimension_semantics<parallel>, #tpu.dimension_semantics<parallel>], iteration_bounds = array<i64: 2, 1>, scalar_prefetch = 0 : i64, scratch_operands = 1 : i64, tpu.core_type = #tpu.core_type<tc>, window_params = [{transform_indices = @transform_0, window_bounds = array<i64: 1, 16, 18, 4>}, {transform_indices = @transform_1, window_bounds = array<i64: 1, 4, 18, 4>}, {pipeline_mode = #tpu.pipeline_mode<synchronous>, transform_indices = @transform_2, window_bounds = array<i64: 36, 8>}, {pipeline_mode = #tpu.pipeline_mode<synchronous>, transform_indices = @transform_3, window_bounds = array<i64: 1, 8>}, {pipeline_mode = #tpu.pipeline_mode<synchronous>, transform_indices = @transform_4, window_bounds = array<i64: 1, 8>}, {pipeline_mode = #tpu.pipeline_mode<synchronous>, transform_indices = @transform_5, window_bounds = array<i64: 72, 8>}, {pipeline_mode = #tpu.pipeline_mode<synchronous>, transform_indices = @transform_6, window_bounds = array<i64: 1, 8>}, {pipeline_mode = #tpu.pipeline_mode<synchronous>, transform_indices = @transform_7, window_bounds = array<i64: 1, 8>}, {transform_indices = @transform_8, window_bounds = array<i64: 1, 16, 16, 8>}]} {
    %c0 = arith.constant 0 : index
    %c0_0 = arith.constant 0 : index
    %c0_1 = arith.constant 0 : index
    %c0_2 = arith.constant 0 : index
    %0 = vector.load %arg2[%c0, %c0_0, %c0_1, %c0_2] : memref<1x16x18x4xf32, #tpu.memory_space<vmem>>, vector<1x16x18x4xf32>
    %1 = vector.shape_cast %0 : vector<1x16x18x4xf32> to vector<16x18x4xf32>
    %c0_3 = arith.constant 0 : index
    %c0_4 = arith.constant 0 : index
    %c0_5 = arith.constant 0 : index
    %c0_6 = arith.constant 0 : index
    %2 = vector.load %arg3[%c0_3, %c0_4, %c0_5, %c0_6] : memref<1x4x18x4xf32, #tpu.memory_space<vmem>>, vector<1x4x18x4xf32>
    %3 = vector.shape_cast %2 : vector<1x4x18x4xf32> to vector<4x18x4xf32>
    %4 = tpu.concatenate %1, %3 in 0 : vector<16x18x4xf32>, vector<4x18x4xf32> -> vector<20x18x4xf32>
    %5 = vector.extract_strided_slice %4 {offsets = [0, 0, 0], sizes = [18, 16, 4], strides = [1, 1, 1]} : vector<20x18x4xf32> to vector<18x16x4xf32>
    %6 = vector.extract_strided_slice %4 {offsets = [0, 1, 0], sizes = [18, 16, 4], strides = [1, 1, 1]} : vector<20x18x4xf32> to vector<18x16x4xf32>
    %7 = vector.extract_strided_slice %4 {offsets = [0, 2, 0], sizes = [18, 16, 4], strides = [1, 1, 1]} : vector<20x18x4xf32> to vector<18x16x4xf32>
    %8 = vector.extract_strided_slice %4 {offsets = [1, 0, 0], sizes = [18, 16, 4], strides = [1, 1, 1]} : vector<20x18x4xf32> to vector<18x16x4xf32>
    %9 = vector.extract_strided_slice %4 {offsets = [1, 1, 0], sizes = [18, 16, 4], strides = [1, 1, 1]} : vector<20x18x4xf32> to vector<18x16x4xf32>
    %10 = vector.extract_strided_slice %4 {offsets = [1, 2, 0], sizes = [18, 16, 4], strides = [1, 1, 1]} : vector<20x18x4xf32> to vector<18x16x4xf32>
    %11 = vector.extract_strided_slice %4 {offsets = [2, 0, 0], sizes = [18, 16, 4], strides = [1, 1, 1]} : vector<20x18x4xf32> to vector<18x16x4xf32>
    %12 = vector.extract_strided_slice %4 {offsets = [2, 1, 0], sizes = [18, 16, 4], strides = [1, 1, 1]} : vector<20x18x4xf32> to vector<18x16x4xf32>
    %13 = vector.extract_strided_slice %4 {offsets = [2, 2, 0], sizes = [18, 16, 4], strides = [1, 1, 1]} : vector<20x18x4xf32> to vector<18x16x4xf32>
    %14 = tpu.concatenate %5, %6, %7, %8, %9, %10, %11, %12, %13 in 2 : vector<18x16x4xf32>, vector<18x16x4xf32>, vector<18x16x4xf32>, vector<18x16x4xf32>, vector<18x16x4xf32>, vector<18x16x4xf32>, vector<18x16x4xf32>, vector<18x16x4xf32>, vector<18x16x4xf32> -> vector<18x16x36xf32>
    %15 = vector.shape_cast %14 : vector<18x16x36xf32> to vector<288x36xf32>
    %c0_7 = arith.constant 0 : index
    %c0_8 = arith.constant 0 : index
    %16 = vector.load %arg4[%c0_7, %c0_8] : memref<36x8xf32, #tpu.memory_space<vmem>>, vector<36x8xf32>
    %cst = arith.constant dense<0.000000e+00> : vector<288x8xf32>
    %17 = tpu.matmul %15, %16, %cst {dimension_numbers = #tpu.dot_dimension_numbers<[1], [0], [0], [1], [0, 0, 1, 1], [], []>} : vector<288x36xf32>, vector<36x8xf32>, vector<288x8xf32> -> vector<288x8xf32>
    %c0_9 = arith.constant 0 : index
    %c0_10 = arith.constant 0 : index
    %18 = vector.load %arg5[%c0_9, %c0_10] : memref<1x8xf32, #tpu.memory_space<vmem>>, vector<1x8xf32>
    %19 = vector.broadcast %18 : vector<1x8xf32> to vector<288x8xf32>
    %20 = arith.mulf %17, %19 : vector<288x8xf32>
    %c0_11 = arith.constant 0 : index
    %c0_12 = arith.constant 0 : index
    %21 = vector.load %arg6[%c0_11, %c0_12] : memref<1x8xf32, #tpu.memory_space<vmem>>, vector<1x8xf32>
    %22 = vector.broadcast %21 : vector<1x8xf32> to vector<288x8xf32>
    %23 = arith.addf %20, %22 : vector<288x8xf32>
    %cst_13 = arith.constant 0.000000e+00 : f32
    %24 = vector.broadcast %cst_13 : f32 to vector<288x8xf32>
    %25 = arith.maximumf %23, %24 : vector<288x8xf32>
    %cst_14 = arith.constant 0.000000e+00 : f32
    %26 = vector.broadcast %cst_14 : f32 to vector<18x1x8xf32>
    %c0_15 = arith.constant 0 : index
    %c0_16 = arith.constant 0 : index
    %c0_17 = arith.constant 0 : index
    %27 = vector.load %arg11[%c0_15, %c0_16, %c0_17] : memref<18x18x8xf32, #tpu.memory_space<vmem>>, vector<18x1x8xf32>
    tpu.vector_store %arg11[%c0_15, %c0_16, %c0_17], %26 {strides = array<i32>} : memref<18x18x8xf32, #tpu.memory_space<vmem>>, vector<18x1x8xf32>,
    %cst_18 = arith.constant 0.000000e+00 : f32
    %28 = vector.broadcast %cst_18 : f32 to vector<18x1x8xf32>
    %c0_19 = arith.constant 0 : index
    %c17 = arith.constant 17 : index
    %c0_20 = arith.constant 0 : index
    %29 = vector.load %arg11[%c0_19, %c17, %c0_20] : memref<18x18x8xf32, #tpu.memory_space<vmem>>, vector<18x1x8xf32>
    tpu.vector_store %arg11[%c0_19, %c17, %c0_20], %28 {strides = array<i32>} : memref<18x18x8xf32, #tpu.memory_space<vmem>>, vector<18x1x8xf32>,
    %30 = vector.shape_cast %25 : vector<288x8xf32> to vector<18x16x8xf32>
    %c0_21 = arith.constant 0 : index
    %c1 = arith.constant 1 : index
    %c0_22 = arith.constant 0 : index
    %31 = vector.load %arg11[%c0_21, %c1, %c0_22] : memref<18x18x8xf32, #tpu.memory_space<vmem>>, vector<18x16x8xf32>
    tpu.vector_store %arg11[%c0_21, %c1, %c0_22], %30 {strides = array<i32>} : memref<18x18x8xf32, #tpu.memory_space<vmem>>, vector<18x16x8xf32>,
    %c0_i32 = arith.constant 0 : i32
    %32 = arith.cmpi eq, %arg1, %c0_i32 : i32
    %33 = arith.extui %32 : i1 to i32
    %c0_i32_23 = arith.constant 0 : i32
    %34 = arith.cmpi ne, %33, %c0_i32_23 : i32
    scf.if %34 {
      %cst_41 = arith.constant 0.000000e+00 : f32
      %62 = vector.broadcast %cst_41 : f32 to vector<1x18x8xf32>
      %c0_42 = arith.constant 0 : index
      %c0_43 = arith.constant 0 : index
      %c0_44 = arith.constant 0 : index
      %63 = vector.load %arg11[%c0_42, %c0_43, %c0_44] : memref<18x18x8xf32, #tpu.memory_space<vmem>>, vector<1x18x8xf32>
      tpu.vector_store %arg11[%c0_42, %c0_43, %c0_44], %62 {strides = array<i32>} : memref<18x18x8xf32, #tpu.memory_space<vmem>>, vector<1x18x8xf32>,
    } else {
    }
    %c0_i32_24 = arith.constant 0 : i32
    %35 = arith.cmpi eq, %arg1, %c0_i32_24 : i32
    %36 = arith.extui %35 : i1 to i32
    %c0_i32_25 = arith.constant 0 : i32
    %37 = arith.cmpi ne, %36, %c0_i32_25 : i32
    scf.if %37 {
      %cst_41 = arith.constant 0.000000e+00 : f32
      %62 = vector.broadcast %cst_41 : f32 to vector<1x18x8xf32>
      %c17_42 = arith.constant 17 : index
      %c0_43 = arith.constant 0 : index
      %c0_44 = arith.constant 0 : index
      %63 = vector.load %arg11[%c17_42, %c0_43, %c0_44] : memref<18x18x8xf32, #tpu.memory_space<vmem>>, vector<1x18x8xf32>
      tpu.vector_store %arg11[%c17_42, %c0_43, %c0_44], %62 {strides = array<i32>} : memref<18x18x8xf32, #tpu.memory_space<vmem>>, vector<1x18x8xf32>,
    } else {
    }
    %c0_26 = arith.constant 0 : index
    %c0_27 = arith.constant 0 : index
    %c0_28 = arith.constant 0 : index
    %38 = vector.load %arg11[%c0_26, %c0_27, %c0_28] : memref<18x18x8xf32, #tpu.memory_space<vmem>>, vector<18x18x8xf32>
    %39 = vector.extract_strided_slice %38 {offsets = [0, 0, 0], sizes = [16, 16, 8], strides = [1, 1, 1]} : vector<18x18x8xf32> to vector<16x16x8xf32>
    %40 = vector.extract_strided_slice %38 {offsets = [0, 1, 0], sizes = [16, 16, 8], strides = [1, 1, 1]} : vector<18x18x8xf32> to vector<16x16x8xf32>
    %41 = vector.extract_strided_slice %38 {offsets = [0, 2, 0], sizes = [16, 16, 8], strides = [1, 1, 1]} : vector<18x18x8xf32> to vector<16x16x8xf32>
    %42 = vector.extract_strided_slice %38 {offsets = [1, 0, 0], sizes = [16, 16, 8], strides = [1, 1, 1]} : vector<18x18x8xf32> to vector<16x16x8xf32>
    %43 = vector.extract_strided_slice %38 {offsets = [1, 1, 0], sizes = [16, 16, 8], strides = [1, 1, 1]} : vector<18x18x8xf32> to vector<16x16x8xf32>
    %44 = vector.extract_strided_slice %38 {offsets = [1, 2, 0], sizes = [16, 16, 8], strides = [1, 1, 1]} : vector<18x18x8xf32> to vector<16x16x8xf32>
    %45 = vector.extract_strided_slice %38 {offsets = [2, 0, 0], sizes = [16, 16, 8], strides = [1, 1, 1]} : vector<18x18x8xf32> to vector<16x16x8xf32>
    %46 = vector.extract_strided_slice %38 {offsets = [2, 1, 0], sizes = [16, 16, 8], strides = [1, 1, 1]} : vector<18x18x8xf32> to vector<16x16x8xf32>
    %47 = vector.extract_strided_slice %38 {offsets = [2, 2, 0], sizes = [16, 16, 8], strides = [1, 1, 1]} : vector<18x18x8xf32> to vector<16x16x8xf32>
    %48 = tpu.concatenate %39, %40, %41, %42, %43, %44, %45, %46, %47 in 2 : vector<16x16x8xf32>, vector<16x16x8xf32>, vector<16x16x8xf32>, vector<16x16x8xf32>, vector<16x16x8xf32>, vector<16x16x8xf32>, vector<16x16x8xf32>, vector<16x16x8xf32>, vector<16x16x8xf32> -> vector<16x16x72xf32>
    %49 = vector.shape_cast %48 : vector<16x16x72xf32> to vector<256x72xf32>
    %c0_29 = arith.constant 0 : index
    %c0_30 = arith.constant 0 : index
    %50 = vector.load %arg7[%c0_29, %c0_30] : memref<72x8xf32, #tpu.memory_space<vmem>>, vector<72x8xf32>
    %cst_31 = arith.constant dense<0.000000e+00> : vector<256x8xf32>
    %51 = tpu.matmul %49, %50, %cst_31 {dimension_numbers = #tpu.dot_dimension_numbers<[1], [0], [0], [1], [0, 0, 1, 1], [], []>} : vector<256x72xf32>, vector<72x8xf32>, vector<256x8xf32> -> vector<256x8xf32>
    %c0_32 = arith.constant 0 : index
    %c0_33 = arith.constant 0 : index
    %52 = vector.load %arg8[%c0_32, %c0_33] : memref<1x8xf32, #tpu.memory_space<vmem>>, vector<1x8xf32>
    %53 = vector.broadcast %52 : vector<1x8xf32> to vector<256x8xf32>
    %54 = arith.mulf %51, %53 : vector<256x8xf32>
    %c0_34 = arith.constant 0 : index
    %c0_35 = arith.constant 0 : index
    %55 = vector.load %arg9[%c0_34, %c0_35] : memref<1x8xf32, #tpu.memory_space<vmem>>, vector<1x8xf32>
    %56 = vector.broadcast %55 : vector<1x8xf32> to vector<256x8xf32>
    %57 = arith.addf %54, %56 : vector<256x8xf32>
    %cst_36 = arith.constant 0.000000e+00 : f32
    %58 = vector.broadcast %cst_36 : f32 to vector<256x8xf32>
    %59 = arith.maximumf %57, %58 : vector<256x8xf32>
    %60 = vector.shape_cast %59 : vector<256x8xf32> to vector<1x16x16x8xf32>
    %c0_37 = arith.constant 0 : index
    %c0_38 = arith.constant 0 : index
    %c0_39 = arith.constant 0 : index
    %c0_40 = arith.constant 0 : index
    %61 = vector.load %arg10[%c0_37, %c0_38, %c0_39, %c0_40] : memref<1x16x16x8xf32, #tpu.memory_space<vmem>>, vector<1x16x16x8xf32>
    tpu.vector_store %arg10[%c0_37, %c0_38, %c0_39, %c0_40], %60 {strides = array<i32>} : memref<1x16x16x8xf32, #tpu.memory_space<vmem>>, vector<1x16x16x8xf32>,
    return
  }
  func.func @transform_0(%arg0: i32, %arg1: i32) -> (i32, i32, i32, i32) {
    %c0_i32 = arith.constant 0 : i32
    %c0_i32_0 = arith.constant 0 : i32
    %c0_i32_1 = arith.constant 0 : i32
    return %arg0, %arg1, %c0_i32, %c0_i32_0 : i32, i32, i32, i32
  }
  func.func @transform_1(%arg0: i32, %arg1: i32) -> (i32, i32, i32, i32) {
    %c1_i32 = arith.constant 1 : i32
    %0 = arith.addi %arg1, %c1_i32 : i32
    %c4_i32 = arith.constant 4 : i32
    %1 = arith.muli %0, %c4_i32 : i32
    %c0_i32 = arith.constant 0 : i32
    %c0_i32_0 = arith.constant 0 : i32
    %c0_i32_1 = arith.constant 0 : i32
    return %arg0, %1, %c0_i32, %c0_i32_0 : i32, i32, i32, i32
  }
  func.func @transform_2(%arg0: i32, %arg1: i32) -> (i32, i32) {
    %c0_i32 = arith.constant 0 : i32
    %c0_i32_0 = arith.constant 0 : i32
    %c0_i32_1 = arith.constant 0 : i32
    return %c0_i32, %c0_i32_0 : i32, i32
  }
  func.func @transform_3(%arg0: i32, %arg1: i32) -> (i32, i32) {
    %c0_i32 = arith.constant 0 : i32
    %c0_i32_0 = arith.constant 0 : i32
    %c0_i32_1 = arith.constant 0 : i32
    return %c0_i32, %c0_i32_0 : i32, i32
  }
  func.func @transform_4(%arg0: i32, %arg1: i32) -> (i32, i32) {
    %c0_i32 = arith.constant 0 : i32
    %c0_i32_0 = arith.constant 0 : i32
    %c0_i32_1 = arith.constant 0 : i32
    return %c0_i32, %c0_i32_0 : i32, i32
  }
  func.func @transform_5(%arg0: i32, %arg1: i32) -> (i32, i32) {
    %c0_i32 = arith.constant 0 : i32
    %c0_i32_0 = arith.constant 0 : i32
    %c0_i32_1 = arith.constant 0 : i32
    return %c0_i32, %c0_i32_0 : i32, i32
  }
  func.func @transform_6(%arg0: i32, %arg1: i32) -> (i32, i32) {
    %c0_i32 = arith.constant 0 : i32
    %c0_i32_0 = arith.constant 0 : i32
    %c0_i32_1 = arith.constant 0 : i32
    return %c0_i32, %c0_i32_0 : i32, i32
  }
  func.func @transform_7(%arg0: i32, %arg1: i32) -> (i32, i32) {
    %c0_i32 = arith.constant 0 : i32
    %c0_i32_0 = arith.constant 0 : i32
    %c0_i32_1 = arith.constant 0 : i32
    return %c0_i32, %c0_i32_0 : i32, i32
  }
  func.func @transform_8(%arg0: i32, %arg1: i32) -> (i32, i32, i32, i32) {
    %c0_i32 = arith.constant 0 : i32
    %c0_i32_0 = arith.constant 0 : i32
    %c0_i32_1 = arith.constant 0 : i32
    return %arg0, %arg1, %c0_i32, %c0_i32_0 : i32, i32, i32, i32
  }
}

</mosaic_0001>

<llo_original>
// kernel: tpu_custom_call.1
$region0: #{tpu_custom_call.1}
  #allocation0 [shape = 'u32[]', space=smem, size = 0x4, offset = 0x4, fixed_abs, tag = 'smem constant byte address 0x4 - core index']
  #allocation1 [shape = 'u32[144,128]{1,0:T(1,128)}', space=vmem, size = 0x12000, scoped, tag = 'internal scratch']
  #allocation2 [shape = 'f32[18,18,8]{2,1,0:T(8,128)}', space=vmem, size = 0x36000, scoped, tag = 'scratch operand']
  %s0 = inlined_call_operand.vmem [shape: f32[2,20,18,4], index: 0, kind: input, shape index: {}]
  %s1 = inlined_call_operand.vmem [shape: f32[2,20,18,4], index: 1, kind: input, shape index: {}]
  %s2 = inlined_call_operand.vmem [shape: f32[36,8], index: 2, kind: input, shape index: {}]
  %s3 = inlined_call_operand.vmem [shape: f32[1,8], index: 3, kind: input, shape index: {}]
  %s4 = inlined_call_operand.vmem [shape: f32[1,8], index: 4, kind: input, shape index: {}]
  %s5 = inlined_call_operand.vmem [shape: f32[72,8], index: 5, kind: input, shape index: {}]
  %s6 = inlined_call_operand.vmem [shape: f32[1,8], index: 6, kind: input, shape index: {}]
  %s7 = inlined_call_operand.vmem [shape: f32[1,8], index: 7, kind: input, shape index: {}]
  %s8 = inlined_call_operand.vmem [shape: f32[2,16,16,8], index: 8, kind: output, shape index: {}]
  %s9 = sld [smem:[#allocation0]]
  $region69: #{tpu_custom_call.1} parent=0
    _
  %s11 = ssub.s32 1, %s9
  %s12 = scalar_select 0, %s11, %s9
  loop: start=0, step=1, limit=4
  $region2: #{tpu_custom_call.1} parent=0 // loop_pre_header
    _
  $region3: #{tpu_custom_call.1} parent=0 // loop_header
    %s14 = sphi 0, %s18
    %p15 = scmp.ge.s32.totalorder %s14, 4
    %s21 = sphi 0, %s33
    %s22 = sphi 0, %s29
    %s23 = sphi 0, %s21
    %s24 = sphi 0, %s22
    %s25 = sphi 0, %s23
    %s26 = sphi 0, %s24
    %s38 = sphi 0, %s40
    %s41 = sphi 0, %s38
    %s42 = sphi 0, %s41
    %s58 = sphi 0, %s42
    %s70 = sphi 0, %s72
    %s73 = sphi 0, %s70
    %s74 = sphi 0, %s73
    %s90 = sphi 0, %s74
    %s94 = sphi 0, %s94
    %s96 = sphi 0, %s94
    %s97 = sphi 0, %s96
    %s111 = sphi 0, %s97
    %s115 = sphi 0, %s115
    %s117 = sphi 0, %s115
    %s118 = sphi 0, %s117
    %s132 = sphi 0, %s118
    %s136 = sphi 0, %s136
    %s138 = sphi 0, %s136
    %s139 = sphi 0, %s138
    %s153 = sphi 0, %s139
    %s157 = sphi 0, %s157
    %s159 = sphi 0, %s157
    %s160 = sphi 0, %s159
    %s174 = sphi 0, %s160
    %s178 = sphi 0, %s178
    %s180 = sphi 0, %s178
    %s181 = sphi 0, %s180
    %s195 = sphi 0, %s181
    %s199 = sphi 0, %s199
    %s201 = sphi 0, %s199
    %s202 = sphi 0, %s201
    %s216 = sphi 0, %s202
    %s224 = sphi 0, %s226
    %s227 = sphi 0, %s224
    %s228 = sphi 0, %s227
    %s244 = sphi 0, %s228
  $region4: #{tpu_custom_call.1} parent=0 // loop_header_branch
    %17 = sbr.rel (%p15) target = $region8
  $region5: #{tpu_custom_call.1} parent=0 // loop_body
    %s19 = ssub.s32 %s14, 1
    %s20 = ssub.s32 %s14, 2
    %s27 = sadd.s32 1, %s22
    %p28 = scmp.ge.s32.totalorder %s27, 1
    %s29 = scalar_select %p28, 0, %s27
    %s30 = sadd.s32 1, %s21
    %s31 = scalar_select %p28, %s30, %s21
    %p32 = scmp.ge.s32.totalorder %s31, 2
    %s33 = scalar_select %p32, 0, %s31
    %s34 = ssub.s32 %s21, %s33
    %s35 = ssub.s32 %s22, %s29
    %s36 = sor.u32 %s34, %s35
    %p37 = scmp.eq.s32.totalorder %s36, 0
    %s39 = sadd.s32 %s38, 1
    %s40 = scalar_select %p37, %s38, %s39
    %p43 = pneg %p37
    %p44 = scmp.eq.s32.totalorder %s14, 1
    %p45 = por %p43, %p44
    %p46 = scmp.ne.s32.totalorder %s38, %s41
    %p47 = scmp.eq.s32.totalorder %s14, 0
    %p48 = por %p46, %p47
    %p49 = scmp.ne.s32.totalorder %s38, %s41
    %p50 = scmp.eq.s32.totalorder %s19, 1
    %p51 = por %p49, %p50
    %p52 = scmp.ne.s32.totalorder %s41, %s42
    %p53 = scmp.eq.s32.totalorder %s19, 0
    %p54 = por %p52, %p53
    %p55 = scmp.ne.s32.totalorder %s41, %s42
    %p56 = scmp.eq.s32.totalorder %s20, 1
    %p57 = por %p55, %p56
    %p59 = scmp.ne.s32.totalorder %s42, %s58
    %p60 = scmp.eq.s32.totalorder %s20, 0
    %p61 = por %p59, %p60
    %s62 = sadd.s32 %s22, 1
    %s63 = smul.u32 %s62, 4
    %s64 = sadd.s32 %s29, 1
    %s65 = smul.u32 %s64, 4
    %s66 = ssub.s32 %s21, %s33
    %s67 = ssub.s32 %s63, %s65
    %s68 = sor.u32 %s66, %s67
    %p69 = scmp.eq.s32.totalorder %s68, 0
    %s71 = sadd.s32 %s70, 1
    %s72 = scalar_select %p69, %s70, %s71
    %p75 = pneg %p69
    %p76 = scmp.eq.s32.totalorder %s14, 1
    %p77 = por %p75, %p76
    %p78 = scmp.ne.s32.totalorder %s70, %s73
    %p79 = scmp.eq.s32.totalorder %s14, 0
    %p80 = por %p78, %p79
    %p81 = scmp.ne.s32.totalorder %s70, %s73
    %p82 = scmp.eq.s32.totalorder %s19, 1
    %p83 = por %p81, %p82
    %p84 = scmp.ne.s32.totalorder %s73, %s74
    %p85 = scmp.eq.s32.totalorder %s19, 0
    %p86 = por %p84, %p85
    %p87 = scmp.ne.s32.totalorder %s73, %s74
    %p88 = scmp.eq.s32.totalorder %s20, 1
    %p89 = por %p87, %p88
    %p91 = scmp.ne.s32.totalorder %s74, %s90
    %p92 = scmp.eq.s32.totalorder %s20, 0
    %p93 = por %p91, %p92
    %s95 = sadd.s32 %s94, 1
    %p98 = scmp.eq.s32.totalorder %s14, 1
    %p99 = scmp.ne.s32.totalorder %s94, %s96
    %p100 = scmp.eq.s32.totalorder %s14, 0
    %p101 = por %p99, %p100
    %p102 = scmp.ne.s32.totalorder %s94, %s96
    %p103 = scmp.eq.s32.totalorder %s19, 1
    %p104 = por %p102, %p103
    %p105 = scmp.ne.s32.totalorder %s96, %s97
    %p106 = scmp.eq.s32.totalorder %s19, 0
    %p107 = por %p105, %p106
    %p108 = scmp.ne.s32.totalorder %s96, %s97
    %p109 = scmp.eq.s32.totalorder %s20, 1
    %p110 = por %p108, %p109
    %p112 = scmp.ne.s32.totalorder %s97, %s111
    %p113 = scmp.eq.s32.totalorder %s20, 0
    %p114 = por %p112, %p113
    %s116 = sadd.s32 %s115, 1
    %p119 = scmp.eq.s32.totalorder %s14, 1
    %p120 = scmp.ne.s32.totalorder %s115, %s117
    %p121 = scmp.eq.s32.totalorder %s14, 0
    %p122 = por %p120, %p121
    %p123 = scmp.ne.s32.totalorder %s115, %s117
    %p124 = scmp.eq.s32.totalorder %s19, 1
    %p125 = por %p123, %p124
    %p126 = scmp.ne.s32.totalorder %s117, %s118
    %p127 = scmp.eq.s32.totalorder %s19, 0
    %p128 = por %p126, %p127
    %p129 = scmp.ne.s32.totalorder %s117, %s118
    %p130 = scmp.eq.s32.totalorder %s20, 1
    %p131 = por %p129, %p130
    %p133 = scmp.ne.s32.totalorder %s118, %s132
    %p134 = scmp.eq.s32.totalorder %s20, 0
    %p135 = por %p133, %p134
    %s137 = sadd.s32 %s136, 1
    %p140 = scmp.eq.s32.totalorder %s14, 1
    %p141 = scmp.ne.s32.totalorder %s136, %s138
    %p142 = scmp.eq.s32.totalorder %s14, 0
    %p143 = por %p141, %p142
    %p144 = scmp.ne.s32.totalorder %s136, %s138
    %p145 = scmp.eq.s32.totalorder %s19, 1
    %p146 = por %p144, %p145
    %p147 = scmp.ne.s32.totalorder %s138, %s139
    %p148 = scmp.eq.s32.totalorder %s19, 0
    %p149 = por %p147, %p148
    %p150 = scmp.ne.s32.totalorder %s138, %s139
    %p151 = scmp.eq.s32.totalorder %s20, 1
    %p152 = por %p150, %p151
    %p154 = scmp.ne.s32.totalorder %s139, %s153
    %p155 = scmp.eq.s32.totalorder %s20, 0
    %p156 = por %p154, %p155
    %s158 = sadd.s32 %s157, 1
    %p161 = scmp.eq.s32.totalorder %s14, 1
    %p162 = scmp.ne.s32.totalorder %s157, %s159
    %p163 = scmp.eq.s32.totalorder %s14, 0
    %p164 = por %p162, %p163
    %p165 = scmp.ne.s32.totalorder %s157, %s159
    %p166 = scmp.eq.s32.totalorder %s19, 1
    %p167 = por %p165, %p166
    %p168 = scmp.ne.s32.totalorder %s159, %s160
    %p169 = scmp.eq.s32.totalorder %s19, 0
    %p170 = por %p168, %p169
    %p171 = scmp.ne.s32.totalorder %s159, %s160
    %p172 = scmp.eq.s32.totalorder %s20, 1
    %p173 = por %p171, %p172
    %p175 = scmp.ne.s32.totalorder %s160, %s174
    %p176 = scmp.eq.s32.totalorder %s20, 0
    %p177 = por %p175, %p176
    %s179 = sadd.s32 %s178, 1
    %p182 = scmp.eq.s32.totalorder %s14, 1
    %p183 = scmp.ne.s32.totalorder %s178, %s180
    %p184 = scmp.eq.s32.totalorder %s14, 0
    %p185 = por %p183, %p184
    %p186 = scmp.ne.s32.totalorder %s178, %s180
    %p187 = scmp.eq.s32.totalorder %s19, 1
    %p188 = por %p186, %p187
    %p189 = scmp.ne.s32.totalorder %s180, %s181
    %p190 = scmp.eq.s32.totalorder %s19, 0
    %p191 = por %p189, %p190
    %p192 = scmp.ne.s32.totalorder %s180, %s181
    %p193 = scmp.eq.s32.totalorder %s20, 1
    %p194 = por %p192, %p193
    %p196 = scmp.ne.s32.totalorder %s181, %s195
    %p197 = scmp.eq.s32.totalorder %s20, 0
    %p198 = por %p196, %p197
    %s200 = sadd.s32 %s199, 1
    %p203 = scmp.eq.s32.totalorder %s14, 1
    %p204 = scmp.ne.s32.totalorder %s199, %s201
    %p205 = scmp.eq.s32.totalorder %s14, 0
    %p206 = por %p204, %p205
    %p207 = scmp.ne.s32.totalorder %s199, %s201
    %p208 = scmp.eq.s32.totalorder %s19, 1
    %p209 = por %p207, %p208
    %p210 = scmp.ne.s32.totalorder %s201, %s202
    %p211 = scmp.eq.s32.totalorder %s19, 0
    %p212 = por %p210, %p211
    %p213 = scmp.ne.s32.totalorder %s201, %s202
    %p214 = scmp.eq.s32.totalorder %s20, 1
    %p215 = por %p213, %p214
    %p217 = scmp.ne.s32.totalorder %s202, %s216
    %p218 = scmp.eq.s32.totalorder %s20, 0
    %p219 = por %p217, %p218
    %s220 = ssub.s32 %s21, %s33
    %s221 = ssub.s32 %s22, %s29
    %s222 = sor.u32 %s220, %s221
    %p223 = scmp.eq.s32.totalorder %s222, 0
    %s225 = sadd.s32 %s224, 1
    %s226 = scalar_select %p223, %s224, %s225
    %p229 = pneg %p223
    %p230 = scmp.eq.s32.totalorder %s14, 1
    %p231 = por %p229, %p230
    %p232 = scmp.ne.s32.totalorder %s224, %s227
    %p233 = scmp.eq.s32.totalorder %s14, 0
    %p234 = por %p232, %p233
    %p235 = scmp.ne.s32.totalorder %s224, %s227
    %p236 = scmp.eq.s32.totalorder %s19, 1
    %p237 = por %p235, %p236
    %p238 = scmp.ne.s32.totalorder %s227, %s228
    %p239 = scmp.eq.s32.totalorder %s19, 0
    %p240 = por %p238, %p239
    %p241 = scmp.ne.s32.totalorder %s227, %s228
    %p242 = scmp.eq.s32.totalorder %s20, 1
    %p243 = por %p241, %p242
    %p245 = scmp.ne.s32.totalorder %s228, %s244
    %p246 = scmp.eq.s32.totalorder %s20, 0
    %p247 = por %p245, %p246
    %p248 = scmp.le.s32.totalorder 1, %s14
    %p249 = scmp.lt.s32.totalorder %s14, 3
    %p250 = pnand %p248, %p249
    %p251 = pneg %p250
    // Predicated region
    $region9: #{tpu_custom_call.1} parent=5 // pred_check
      _
    $region10: #{tpu_custom_call.1} parent=5 // pred_check_branch
      %253 = sbr.rel (%p250) target = $region12
    $region11: #{tpu_custom_call.1} parent=5 // pred_region
      %s254 = ssub.s32 %s14, 1
      // Predicated region
      $region13: #{tpu_custom_call.1} parent=11 // pred_check
        %p255 = pneg %p107
      $region14: #{tpu_custom_call.1} parent=11 // pred_check_branch
        %257 = sbr.rel (%p255) target = $region16
      $region15: #{tpu_custom_call.1} parent=11 // pred_region
        _
      $region16: #{tpu_custom_call.1} parent=11 // pred_fallthru
        _
      // Predicated region
      $region17: #{tpu_custom_call.1} parent=11 // pred_check
        %p258 = pneg %p128
      $region18: #{tpu_custom_call.1} parent=11 // pred_check_branch
        %260 = sbr.rel (%p258) target = $region20
      $region19: #{tpu_custom_call.1} parent=11 // pred_region
        _
      $region20: #{tpu_custom_call.1} parent=11 // pred_fallthru
        _
      // Predicated region
      $region21: #{tpu_custom_call.1} parent=11 // pred_check
        %p261 = pneg %p149
      $region22: #{tpu_custom_call.1} parent=11 // pred_check_branch
        %263 = sbr.rel (%p261) target = $region24
      $region23: #{tpu_custom_call.1} parent=11 // pred_region
        _
      $region24: #{tpu_custom_call.1} parent=11 // pred_fallthru
        _
      // Predicated region
      $region25: #{tpu_custom_call.1} parent=11 // pred_check
        %p264 = pneg %p170
      $region26: #{tpu_custom_call.1} parent=11 // pred_check_branch
        %266 = sbr.rel (%p264) target = $region28
      $region27: #{tpu_custom_call.1} parent=11 // pred_region
        _
      $region28: #{tpu_custom_call.1} parent=11 // pred_fallthru
        _
      // Predicated region
      $region29: #{tpu_custom_call.1} parent=11 // pred_check
        %p267 = pneg %p191
      $region30: #{tpu_custom_call.1} parent=11 // pred_check_branch
        %269 = sbr.rel (%p267) target = $region32
      $region31: #{tpu_custom_call.1} parent=11 // pred_region
        _
      $region32: #{tpu_custom_call.1} parent=11 // pred_fallthru
        _
      // Predicated region
      $region33: #{tpu_custom_call.1} parent=11 // pred_check
        %p270 = pneg %p212
      $region34: #{tpu_custom_call.1} parent=11 // pred_check_branch
        %272 = sbr.rel (%p270) target = $region36
      $region35: #{tpu_custom_call.1} parent=11 // pred_region
        _
      $region36: #{tpu_custom_call.1} parent=11 // pred_fallthru
        _
    $region12: #{tpu_custom_call.1} parent=5 // pred_fallthru
      _
    %p273 = scmp.lt.s32.totalorder %s14, 2
    // Predicated region
    $region37: #{tpu_custom_call.1} parent=5 // pred_check
      %p274 = pneg %p273
    $region38: #{tpu_custom_call.1} parent=5 // pred_check_branch
      %276 = sbr.rel (%p274) target = $region40
    $region39: #{tpu_custom_call.1} parent=5 // pred_region
      // Predicated region
      $region41: #{tpu_custom_call.1} parent=39 // pred_check
        %p277 = pneg %p48
      $region42: #{tpu_custom_call.1} parent=39 // pred_check_branch
        %279 = sbr.rel (%p277) target = $region44
      $region43: #{tpu_custom_call.1} parent=39 // pred_region
        %s280 = smul.u32 16, %s22
        %s281 = ssub.s32 20, %s280
        %p282 = scmp.lt.s32.totalorder %s281, 16
        %s283 = scalar_select %p282, %s281, 16
        %s284 = smul.u32 128, %s283
        %s285 = smul.u32 %s284, 3
        %p286 = scmp.lt.s32.totalorder %s21, 1
        %s287 = scalar_select %p286, %s21, 1
        %p288 = scmp.lt.s32.totalorder %s280, 19
        %s289 = scalar_select %p288, %s280, 19
        %s290 = smul.addr %s289, 3
        %s291 = smul.addr %s287, 60
        %s292 = sadd.s32 %s290, %s291
        %s293 = smul.addr %s292, 8
        %s294 = scalar_lea.vmem %s0, %s293
        %s295 = smul.u32 16, %s22
        %s296 = ssub.s32 20, %s295
        %p297 = scmp.lt.s32.totalorder %s296, 16
        %s298 = scalar_select %p297, %s296, 16
        %s299 = smul.u32 128, %s298
        %s300 = smul.u32 %s299, 3
      $region44: #{tpu_custom_call.1} parent=39 // pred_fallthru
        _
      // Predicated region
      $region45: #{tpu_custom_call.1} parent=39 // pred_check
        %p301 = pneg %p80
      $region46: #{tpu_custom_call.1} parent=39 // pred_check_branch
        %303 = sbr.rel (%p301) target = $region48
      $region47: #{tpu_custom_call.1} parent=39 // pred_region
        %s304 = sadd.s32 %s22, 1
        %s305 = smul.u32 %s304, 4
        %s306 = smul.u32 4, %s305
        %p307 = scmp.lt.s32.totalorder %s21, 1
        %s308 = scalar_select %p307, %s21, 1
        %p309 = scmp.lt.s32.totalorder %s306, 19
        %s310 = scalar_select %p309, %s306, 19
        %s311 = smul.addr %s310, 3
        %s312 = smul.addr %s308, 60
        %s313 = sadd.s32 %s311, %s312
        %s314 = smul.addr %s313, 8
        %s315 = scalar_lea.vmem %s1, %s314
        %s316 = sadd.s32 %s22, 1
        %s317 = smul.u32 %s316, 4
        %s318 = smul.u32 4, %s317
      $region48: #{tpu_custom_call.1} parent=39 // pred_fallthru
        _
    $region40: #{tpu_custom_call.1} parent=5 // pred_fallthru
      _
    %p319 = scmp.le.s32.totalorder 1, %s14
    %p320 = scmp.lt.s32.totalorder %s14, 3
    %p321 = pnand %p319, %p320
    %p322 = pneg %p321
    // Predicated region
    $region49: #{tpu_custom_call.1} parent=5 // pred_check
      _
    $region50: #{tpu_custom_call.1} parent=5 // pred_check_branch
      %324 = sbr.rel (%p321) target = $region52
    $region51: #{tpu_custom_call.1} parent=5 // pred_region
      %s325 = ssub.s32 %s14, 1
      %s326 = smul.u32 16, %s24
      %s327 = ssub.s32 20, %s326
      %p328 = scmp.lt.s32.totalorder %s327, 16
      %s329 = scalar_select %p328, %s327, 16
      %s330 = smul.u32 128, %s329
      %s331 = smul.u32 %s330, 3
      %p332 = scmp.lt.s32.totalorder %s23, 1
      %s333 = scalar_select %p332, %s23, 1
      %p334 = scmp.lt.s32.totalorder %s326, 19
      %s335 = scalar_select %p334, %s326, 19
      %s336 = smul.addr %s335, 3
      %s337 = smul.addr %s333, 60
      %s338 = sadd.s32 %s336, %s337
      %s339 = smul.addr %s338, 8
      %s340 = scalar_lea.vmem %s0, %s339
      %p341 = pneg %p54
      %p342 = pneg %p51
      %s343 = sadd.s32 %s24, 1
      %s344 = smul.u32 %s343, 4
      %s345 = smul.u32 4, %s344
      %p346 = scmp.lt.s32.totalorder %s23, 1
      %s347 = scalar_select %p346, %s23, 1
      %p348 = scmp.lt.s32.totalorder %s345, 19
      %s349 = scalar_select %p348, %s345, 19
      %s350 = smul.addr %s349, 3
      %s351 = smul.addr %s347, 60
      %s352 = sadd.s32 %s350, %s351
      %s353 = smul.addr %s352, 8
      %s354 = scalar_lea.vmem %s1, %s353
      %p355 = pneg %p86
      %p356 = pneg %p83
      %p357 = pneg %p107
      %p358 = pneg %p104
      %p359 = pneg %p128
      %p360 = pneg %p125
      %p361 = pneg %p149
      %p362 = pneg %p146
      %p363 = pneg %p170
      %p364 = pneg %p167
      %p365 = pneg %p191
      %p366 = pneg %p188
      %p367 = pneg %p212
      %p368 = pneg %p209
      %p369 = pneg %p240
      %p370 = pneg %p237
      %s371 = smul.u32 16, %s24
      %p372 = scmp.lt.s32.totalorder %s23, 1
      %s373 = scalar_select %p372, %s23, 1
      %p374 = scmp.lt.s32.totalorder %s371, 15
      %s375 = scalar_select %p374, %s371, 15
      %s376 = smul.addr %s375, 2
      %s377 = smul.addr %s373, 32
      %s378 = sadd.s32 %s376, %s377
      %s379 = smul.addr %s378, 8
      %s380 = scalar_lea.vmem %s8, %s379
      %s381 = smul.u32 16, %s24
      %s382 = ssub.s32 20, %s381
      %p383 = scmp.lt.s32.totalorder %s382, 16
      %s384 = scalar_select %p383, %s382, 16
      %s385 = smul.u32 128, %s384
      %s386 = smul.u32 %s385, 3
      %p387 = scmp.lt.s32.totalorder %s23, 1
      %s388 = scalar_select %p387, %s23, 1
      %p389 = scmp.lt.s32.totalorder %s381, 19
      %s390 = scalar_select %p389, %s381, 19
      %s391 = smul.addr %s390, 3
      %s392 = smul.addr %s388, 60
      %s393 = sadd.s32 %s391, %s392
      %s394 = smul.addr %s393, 8
      %s395 = scalar_lea.vmem %s0, %s394
      %s396 = smul.u32 16, %s24
      %s397 = ssub.s32 20, %s396
      %p398 = scmp.lt.s32.totalorder %s397, 16
      %s399 = scalar_select %p398, %s397, 16
      %s400 = smul.u32 128, %s399
      %s401 = smul.u32 %s400, 3
      %s402 = sadd.s32 %s24, 1
      %s403 = smul.u32 %s402, 4
      %s404 = smul.u32 4, %s403
      %p405 = scmp.lt.s32.totalorder %s23, 1
      %s406 = scalar_select %p405, %s23, 1
      %p407 = scmp.lt.s32.totalorder %s404, 19
      %s408 = scalar_select %p407, %s404, 19
      %s409 = smul.addr %s408, 3
      %s410 = smul.addr %s406, 60
      %s411 = sadd.s32 %s409, %s410
      %s412 = smul.addr %s411, 8
      %s413 = scalar_lea.vmem %s1, %s412
      %s414 = sadd.s32 %s24, 1
      %s415 = smul.u32 %s414, 4
      %s416 = smul.u32 4, %s415
      %s417 = smul.u32 16, %s24
      %p418 = scmp.lt.s32.totalorder %s23, 1
      %s419 = scalar_select %p418, %s23, 1
      %p420 = scmp.lt.s32.totalorder %s417, 15
      %s421 = scalar_select %p420, %s417, 15
      %s422 = smul.addr %s421, 2
      %s423 = smul.addr %s419, 32
      %s424 = sadd.s32 %s422, %s423
      %s425 = smul.addr %s424, 8
      %s426 = scalar_lea.vmem %s8, %s425
      %s427 = smul.u32 16, %s24
      %v428 = vld [vmem:[%s395] sm:$0xff]
      %v429 = vld [vmem:[%s395 + $0x8] sm:$0xff]
      %v430 = vld [vmem:[%s395 + $0x10] sm:$0x3]
      %v431 = vld [vmem:[%s395 + $0x18] sm:$0xff]
      %v432 = vld [vmem:[%s395 + $0x20] sm:$0xff]
      %v433 = vld [vmem:[%s395 + $0x28] sm:$0x3]
      %v434 = vld [vmem:[%s395 + $0x30] sm:$0xff]
      %v435 = vld [vmem:[%s395 + $0x38] sm:$0xff]
      %v436 = vld [vmem:[%s395 + $0x40] sm:$0x3]
      %v437 = vld [vmem:[%s395 + $0x48] sm:$0xff]
      %v438 = vld [vmem:[%s395 + $0x50] sm:$0xff]
      %v439 = vld [vmem:[%s395 + $0x58] sm:$0x3]
      %v440 = vld [vmem:[%s395 + $0x60] sm:$0xff]
      %v441 = vld [vmem:[%s395 + $0x68] sm:$0xff]
      %v442 = vld [vmem:[%s395 + $0x70] sm:$0x3]
      %v443 = vld [vmem:[%s395 + $0x78] sm:$0xff]
      %v444 = vld [vmem:[%s395 + $0x80] sm:$0xff]
      %v445 = vld [vmem:[%s395 + $0x88] sm:$0x3]
      %v446 = vld [vmem:[%s395 + $0x90] sm:$0xff]
      %v447 = vld [vmem:[%s395 + $0x98] sm:$0xff]
      %v448 = vld [vmem:[%s395 + $0xa0] sm:$0x3]
      %v449 = vld [vmem:[%s395 + $0xa8] sm:$0xff]
      %v450 = vld [vmem:[%s395 + $0xb0] sm:$0xff]
      %v451 = vld [vmem:[%s395 + $0xb8] sm:$0x3]
      %v452 = vld [vmem:[%s395 + $0xc0] sm:$0xff]
      %v453 = vld [vmem:[%s395 + $0xc8] sm:$0xff]
      %v454 = vld [vmem:[%s395 + $0xd0] sm:$0x3]
      %v455 = vld [vmem:[%s395 + $0xd8] sm:$0xff]
      %v456 = vld [vmem:[%s395 + $0xe0] sm:$0xff]
      %v457 = vld [vmem:[%s395 + $0xe8] sm:$0x3]
      %v458 = vld [vmem:[%s395 + $0xf0] sm:$0xff]
      %v459 = vld [vmem:[%s395 + $0xf8] sm:$0xff]
      %v460 = vld [vmem:[%s395 + $0x100] sm:$0x3]
      %v461 = vld [vmem:[%s395 + $0x108] sm:$0xff]
      %v462 = vld [vmem:[%s395 + $0x110] sm:$0xff]
      %v463 = vld [vmem:[%s395 + $0x118] sm:$0x3]
      %v464 = vld [vmem:[%s395 + $0x120] sm:$0xff]
      %v465 = vld [vmem:[%s395 + $0x128] sm:$0xff]
      %v466 = vld [vmem:[%s395 + $0x130] sm:$0x3]
      %v467 = vld [vmem:[%s395 + $0x138] sm:$0xff]
      %v468 = vld [vmem:[%s395 + $0x140] sm:$0xff]
      %v469 = vld [vmem:[%s395 + $0x148] sm:$0x3]
      %v470 = vld [vmem:[%s395 + $0x150] sm:$0xff]
      %v471 = vld [vmem:[%s395 + $0x158] sm:$0xff]
      %v472 = vld [vmem:[%s395 + $0x160] sm:$0x3]
      %v473 = vld [vmem:[%s395 + $0x168] sm:$0xff]
      %v474 = vld [vmem:[%s395 + $0x170] sm:$0xff]
      %v475 = vld [vmem:[%s395 + $0x178] sm:$0x3]
      %v476 = vld [vmem:[%s413] sm:$0xff]
      %v477 = vld [vmem:[%s413 + $0x8] sm:$0xff]
      %v478 = vld [vmem:[%s413 + $0x10] sm:$0x3]
      %v479 = vld [vmem:[%s413 + $0x18] sm:$0xff]
      %v480 = vld [vmem:[%s413 + $0x20] sm:$0xff]
      %v481 = vld [vmem:[%s413 + $0x28] sm:$0x3]
      %v482 = vld [vmem:[%s413 + $0x30] sm:$0xff]
      %v483 = vld [vmem:[%s413 + $0x38] sm:$0xff]
      %v484 = vld [vmem:[%s413 + $0x40] sm:$0x3]
      %v485 = vld [vmem:[%s413 + $0x48] sm:$0xff]
      %v486 = vld [vmem:[%s413 + $0x50] sm:$0xff]
      %v487 = vld [vmem:[%s413 + $0x58] sm:$0x3]
      %vm542 = vcmask 1046528
      %v543 = vrot.slane %v428, 1
      %v544 = vrot.slane %v429, 1
      %v545 = vsel %vm542, %v543, %v544
      %v546 = vrot.slane %v430, 1
      %v547 = vsel %vm542, %v544, %v546
      %v548 = vrot.slane %v431, 1
      %v549 = vrot.slane %v432, 1
      %v550 = vsel %vm542, %v548, %v549
      %v551 = vrot.slane %v433, 1
      %v552 = vsel %vm542, %v549, %v551
      %v553 = vrot.slane %v434, 1
      %v554 = vrot.slane %v435, 1
      %v555 = vsel %vm542, %v553, %v554
      %v556 = vrot.slane %v436, 1
      %v557 = vsel %vm542, %v554, %v556
      %v558 = vrot.slane %v437, 1
      %v559 = vrot.slane %v438, 1
      %v560 = vsel %vm542, %v558, %v559
      %v561 = vrot.slane %v439, 1
      %v562 = vsel %vm542, %v559, %v561
      %v563 = vrot.slane %v440, 1
      %v564 = vrot.slane %v441, 1
      %v565 = vsel %vm542, %v563, %v564
      %v566 = vrot.slane %v442, 1
      %v567 = vsel %vm542, %v564, %v566
      %v568 = vrot.slane %v443, 1
      %v569 = vrot.slane %v444, 1
      %v570 = vsel %vm542, %v568, %v569
      %v571 = vrot.slane %v445, 1
      %v572 = vsel %vm542, %v569, %v571
      %v573 = vrot.slane %v446, 1
      %v574 = vrot.slane %v447, 1
      %v575 = vsel %vm542, %v573, %v574
      %v576 = vrot.slane %v448, 1
      %v577 = vsel %vm542, %v574, %v576
      %v578 = vrot.slane %v449, 1
      %v579 = vrot.slane %v450, 1
      %v580 = vsel %vm542, %v578, %v579
      %v581 = vrot.slane %v451, 1
      %v582 = vsel %vm542, %v579, %v581
      %v583 = vrot.slane %v452, 1
      %v584 = vrot.slane %v453, 1
      %v585 = vsel %vm542, %v583, %v584
      %v586 = vrot.slane %v454, 1
      %v587 = vsel %vm542, %v584, %v586
      %v588 = vrot.slane %v455, 1
      %v589 = vrot.slane %v456, 1
      %v590 = vsel %vm542, %v588, %v589
      %v591 = vrot.slane %v457, 1
      %v592 = vsel %vm542, %v589, %v591
      %v593 = vrot.slane %v458, 1
      %v594 = vrot.slane %v459, 1
      %v595 = vsel %vm542, %v593, %v594
      %v596 = vrot.slane %v460, 1
      %v597 = vsel %vm542, %v594, %v596
      %v598 = vrot.slane %v461, 1
      %v599 = vrot.slane %v462, 1
      %v600 = vsel %vm542, %v598, %v599
      %v601 = vrot.slane %v463, 1
      %v602 = vsel %vm542, %v599, %v601
      %v603 = vrot.slane %v464, 1
      %v604 = vrot.slane %v465, 1
      %v605 = vsel %vm542, %v603, %v604
      %v606 = vrot.slane %v466, 1
      %v607 = vsel %vm542, %v604, %v606
      %v608 = vrot.slane %v467, 1
      %v609 = vrot.slane %v468, 1
      %v610 = vsel %vm542, %v608, %v609
      %v611 = vrot.slane %v469, 1
      %v612 = vsel %vm542, %v609, %v611
      %v613 = vrot.slane %v470, 1
      %v614 = vrot.slane %v471, 1
      %v615 = vsel %vm542, %v613, %v614
      %v616 = vrot.slane %v472, 1
      %v617 = vsel %vm542, %v614, %v616
      %v618 = vrot.slane %v473, 1
      %v619 = vrot.slane %v474, 1
      %v620 = vsel %vm542, %v618, %v619
      %v621 = vrot.slane %v475, 1
      %v622 = vsel %vm542, %v619, %v621
      %v623 = vrot.slane %v476, 1
      %v624 = vrot.slane %v477, 1
      %v625 = vsel %vm542, %v623, %v624
      %v626 = vrot.slane %v478, 1
      %v627 = vsel %vm542, %v624, %v626
      %v628 = vrot.slane %v479, 1
      %v629 = vrot.slane %v480, 1
      %v630 = vsel %vm542, %v628, %v629
      %v631 = vrot.slane %v481, 1
      %v632 = vsel %vm542, %v629, %v631
      %633 = vrot.lane.b32.xlu0 %v545, 4
      %v634 = vpop.permute.xlu0 %633
      %635 = vrot.lane.b32.xlu0 %v547, 4
      %v636 = vpop.permute.xlu0 %635
      %637 = vrot.lane.b32.xlu0 %v550, 4
      %v638 = vpop.permute.xlu0 %637
      %639 = vrot.lane.b32.xlu0 %v552, 4
      %v640 = vpop.permute.xlu0 %639
      %641 = vrot.lane.b32.xlu0 %v555, 4
      %v642 = vpop.permute.xlu0 %641
      %643 = vrot.lane.b32.xlu0 %v557, 4
      %v644 = vpop.permute.xlu0 %643
      %645 = vrot.lane.b32.xlu0 %v560, 4
      %v646 = vpop.permute.xlu0 %645
      %647 = vrot.lane.b32.xlu0 %v562, 4
      %v648 = vpop.permute.xlu0 %647
      %649 = vrot.lane.b32.xlu0 %v565, 4
      %v650 = vpop.permute.xlu0 %649
      %651 = vrot.lane.b32.xlu0 %v567, 4
      %v652 = vpop.permute.xlu0 %651
      %653 = vrot.lane.b32.xlu0 %v570, 4
      %v654 = vpop.permute.xlu0 %653
      %655 = vrot.lane.b32.xlu0 %v572, 4
      %v656 = vpop.permute.xlu0 %655
      %657 = vrot.lane.b32.xlu0 %v575, 4
      %v658 = vpop.permute.xlu0 %657
      %659 = vrot.lane.b32.xlu0 %v577, 4
      %v660 = vpop.permute.xlu0 %659
      %661 = vrot.lane.b32.xlu0 %v580, 4
      %v662 = vpop.permute.xlu0 %661
      %663 = vrot.lane.b32.xlu0 %v582, 4
      %v664 = vpop.permute.xlu0 %663
      %665 = vrot.lane.b32.xlu0 %v585, 4
      %v666 = vpop.permute.xlu0 %665
      %667 = vrot.lane.b32.xlu0 %v587, 4
      %v668 = vpop.permute.xlu0 %667
      %669 = vrot.lane.b32.xlu0 %v590, 4
      %v670 = vpop.permute.xlu0 %669
      %671 = vrot.lane.b32.xlu0 %v592, 4
      %v672 = vpop.permute.xlu0 %671
      %673 = vrot.lane.b32.xlu0 %v595, 4
      %v674 = vpop.permute.xlu0 %673
      %675 = vrot.lane.b32.xlu0 %v597, 4
      %v676 = vpop.permute.xlu0 %675
      %677 = vrot.lane.b32.xlu0 %v600, 4
      %v678 = vpop.permute.xlu0 %677
      %679 = vrot.lane.b32.xlu0 %v602, 4
      %v680 = vpop.permute.xlu0 %679
      %681 = vrot.lane.b32.xlu0 %v605, 4
      %v682 = vpop.permute.xlu0 %681
      %683 = vrot.lane.b32.xlu0 %v607, 4
      %v684 = vpop.permute.xlu0 %683
      %685 = vrot.lane.b32.xlu0 %v610, 4
      %v686 = vpop.permute.xlu0 %685
      %687 = vrot.lane.b32.xlu0 %v612, 4
      %v688 = vpop.permute.xlu0 %687
      %689 = vrot.lane.b32.xlu0 %v615, 4
      %v690 = vpop.permute.xlu0 %689
      %691 = vrot.lane.b32.xlu0 %v617, 4
      %v692 = vpop.permute.xlu0 %691
      %693 = vrot.lane.b32.xlu0 %v620, 4
      %v694 = vpop.permute.xlu0 %693
      %695 = vrot.lane.b32.xlu0 %v622, 4
      %v696 = vpop.permute.xlu0 %695
      %697 = vrot.lane.b32.xlu0 %v625, 4
      %v698 = vpop.permute.xlu0 %697
      %699 = vrot.lane.b32.xlu0 %v627, 4
      %v700 = vpop.permute.xlu0 %699
      %701 = vrot.lane.b32.xlu0 %v630, 4
      %v702 = vpop.permute.xlu0 %701
      %703 = vrot.lane.b32.xlu0 %v632, 4
      %v704 = vpop.permute.xlu0 %703
      %vm741 = vcmask 1045504
      %v742 = vrot.slane %v428, 2
      %v743 = vrot.slane %v429, 2
      %v744 = vsel %vm741, %v742, %v743
      %v745 = vrot.slane %v430, 2
      %v746 = vsel %vm741, %v743, %v745
      %v747 = vrot.slane %v431, 2
      %v748 = vrot.slane %v432, 2
      %v749 = vsel %vm741, %v747, %v748
      %v750 = vrot.slane %v433, 2
      %v751 = vsel %vm741, %v748, %v750
      %v752 = vrot.slane %v434, 2
      %v753 = vrot.slane %v435, 2
      %v754 = vsel %vm741, %v752, %v753
      %v755 = vrot.slane %v436, 2
      %v756 = vsel %vm741, %v753, %v755
      %v757 = vrot.slane %v437, 2
      %v758 = vrot.slane %v438, 2
      %v759 = vsel %vm741, %v757, %v758
      %v760 = vrot.slane %v439, 2
      %v761 = vsel %vm741, %v758, %v760
      %v762 = vrot.slane %v440, 2
      %v763 = vrot.slane %v441, 2
      %v764 = vsel %vm741, %v762, %v763
      %v765 = vrot.slane %v442, 2
      %v766 = vsel %vm741, %v763, %v765
      %v767 = vrot.slane %v443, 2
      %v768 = vrot.slane %v444, 2
      %v769 = vsel %vm741, %v767, %v768
      %v770 = vrot.slane %v445, 2
      %v771 = vsel %vm741, %v768, %v770
      %v772 = vrot.slane %v446, 2
      %v773 = vrot.slane %v447, 2
      %v774 = vsel %vm741, %v772, %v773
      %v775 = vrot.slane %v448, 2
      %v776 = vsel %vm741, %v773, %v775
      %v777 = vrot.slane %v449, 2
      %v778 = vrot.slane %v450, 2
      %v779 = vsel %vm741, %v777, %v778
      %v780 = vrot.slane %v451, 2
      %v781 = vsel %vm741, %v778, %v780
      %v782 = vrot.slane %v452, 2
      %v783 = vrot.slane %v453, 2
      %v784 = vsel %vm741, %v782, %v783
      %v785 = vrot.slane %v454, 2
      %v786 = vsel %vm741, %v783, %v785
      %v787 = vrot.slane %v455, 2
      %v788 = vrot.slane %v456, 2
      %v789 = vsel %vm741, %v787, %v788
      %v790 = vrot.slane %v457, 2
      %v791 = vsel %vm741, %v788, %v790
      %v792 = vrot.slane %v458, 2
      %v793 = vrot.slane %v459, 2
      %v794 = vsel %vm741, %v792, %v793
      %v795 = vrot.slane %v460, 2
      %v796 = vsel %vm741, %v793, %v795
      %v797 = vrot.slane %v461, 2
      %v798 = vrot.slane %v462, 2
      %v799 = vsel %vm741, %v797, %v798
      %v800 = vrot.slane %v463, 2
      %v801 = vsel %vm741, %v798, %v800
      %v802 = vrot.slane %v464, 2
      %v803 = vrot.slane %v465, 2
      %v804 = vsel %vm741, %v802, %v803
      %v805 = vrot.slane %v466, 2
      %v806 = vsel %vm741, %v803, %v805
      %v807 = vrot.slane %v467, 2
      %v808 = vrot.slane %v468, 2
      %v809 = vsel %vm741, %v807, %v808
      %v810 = vrot.slane %v469, 2
      %v811 = vsel %vm741, %v808, %v810
      %v812 = vrot.slane %v470, 2
      %v813 = vrot.slane %v471, 2
      %v814 = vsel %vm741, %v812, %v813
      %v815 = vrot.slane %v472, 2
      %v816 = vsel %vm741, %v813, %v815
      %v817 = vrot.slane %v473, 2
      %v818 = vrot.slane %v474, 2
      %v819 = vsel %vm741, %v817, %v818
      %v820 = vrot.slane %v475, 2
      %v821 = vsel %vm741, %v818, %v820
      %v822 = vrot.slane %v476, 2
      %v823 = vrot.slane %v477, 2
      %v824 = vsel %vm741, %v822, %v823
      %v825 = vrot.slane %v478, 2
      %v826 = vsel %vm741, %v823, %v825
      %v827 = vrot.slane %v479, 2
      %v828 = vrot.slane %v480, 2
      %v829 = vsel %vm741, %v827, %v828
      %v830 = vrot.slane %v481, 2
      %v831 = vsel %vm741, %v828, %v830
      %832 = vrot.lane.b32.xlu0 %v744, 8
      %v833 = vpop.permute.xlu0 %832
      %834 = vrot.lane.b32.xlu0 %v746, 8
      %v835 = vpop.permute.xlu0 %834
      %836 = vrot.lane.b32.xlu0 %v749, 8
      %v837 = vpop.permute.xlu0 %836
      %838 = vrot.lane.b32.xlu0 %v751, 8
      %v839 = vpop.permute.xlu0 %838
      %840 = vrot.lane.b32.xlu0 %v754, 8
      %v841 = vpop.permute.xlu0 %840
      %842 = vrot.lane.b32.xlu0 %v756, 8
      %v843 = vpop.permute.xlu0 %842
      %844 = vrot.lane.b32.xlu0 %v759, 8
      %v845 = vpop.permute.xlu0 %844
      %846 = vrot.lane.b32.xlu0 %v761, 8
      %v847 = vpop.permute.xlu0 %846
      %848 = vrot.lane.b32.xlu0 %v764, 8
      %v849 = vpop.permute.xlu0 %848
      %850 = vrot.lane.b32.xlu0 %v766, 8
      %v851 = vpop.permute.xlu0 %850
      %852 = vrot.lane.b32.xlu0 %v769, 8
      %v853 = vpop.permute.xlu0 %852
      %854 = vrot.lane.b32.xlu0 %v771, 8
      %v855 = vpop.permute.xlu0 %854
      %856 = vrot.lane.b32.xlu0 %v774, 8
      %v857 = vpop.permute.xlu0 %856
      %858 = vrot.lane.b32.xlu0 %v776, 8
      %v859 = vpop.permute.xlu0 %858
      %860 = vrot.lane.b32.xlu0 %v779, 8
      %v861 = vpop.permute.xlu0 %860
      %862 = vrot.lane.b32.xlu0 %v781, 8
      %v863 = vpop.permute.xlu0 %862
      %864 = vrot.lane.b32.xlu0 %v784, 8
      %v865 = vpop.permute.xlu0 %864
      %866 = vrot.lane.b32.xlu0 %v786, 8
      %v867 = vpop.permute.xlu0 %866
      %868 = vrot.lane.b32.xlu0 %v789, 8
      %v869 = vpop.permute.xlu0 %868
      %870 = vrot.lane.b32.xlu0 %v791, 8
      %v871 = vpop.permute.xlu0 %870
      %872 = vrot.lane.b32.xlu0 %v794, 8
      %v873 = vpop.permute.xlu0 %872
      %874 = vrot.lane.b32.xlu0 %v796, 8
      %v875 = vpop.permute.xlu0 %874
      %876 = vrot.lane.b32.xlu0 %v799, 8
      %v877 = vpop.permute.xlu0 %876
      %878 = vrot.lane.b32.xlu0 %v801, 8
      %v879 = vpop.permute.xlu0 %878
      %880 = vrot.lane.b32.xlu0 %v804, 8
      %v881 = vpop.permute.xlu0 %880
      %882 = vrot.lane.b32.xlu0 %v806, 8
      %v883 = vpop.permute.xlu0 %882
      %884 = vrot.lane.b32.xlu0 %v809, 8
      %v885 = vpop.permute.xlu0 %884
      %886 = vrot.lane.b32.xlu0 %v811, 8
      %v887 = vpop.permute.xlu0 %886
      %888 = vrot.lane.b32.xlu0 %v814, 8
      %v889 = vpop.permute.xlu0 %888
      %890 = vrot.lane.b32.xlu0 %v816, 8
      %v891 = vpop.permute.xlu0 %890
      %892 = vrot.lane.b32.xlu0 %v819, 8
      %v893 = vpop.permute.xlu0 %892
      %894 = vrot.lane.b32.xlu0 %v821, 8
      %v895 = vpop.permute.xlu0 %894
      %896 = vrot.lane.b32.xlu0 %v824, 8
      %v897 = vpop.permute.xlu0 %896
      %898 = vrot.lane.b32.xlu0 %v826, 8
      %v899 = vpop.permute.xlu0 %898
      %900 = vrot.lane.b32.xlu0 %v829, 8
      %v901 = vpop.permute.xlu0 %900
      %902 = vrot.lane.b32.xlu0 %v831, 8
      %v903 = vpop.permute.xlu0 %902
      %942 = vrot.lane.b32.xlu0 %v431, 12
      %v943 = vpop.permute.xlu0 %942
      %944 = vrot.lane.b32.xlu0 %v432, 12
      %v945 = vpop.permute.xlu0 %944
      %946 = vrot.lane.b32.xlu0 %v434, 12
      %v947 = vpop.permute.xlu0 %946
      %948 = vrot.lane.b32.xlu0 %v435, 12
      %v949 = vpop.permute.xlu0 %948
      %950 = vrot.lane.b32.xlu0 %v437, 12
      %v951 = vpop.permute.xlu0 %950
      %952 = vrot.lane.b32.xlu0 %v438, 12
      %v953 = vpop.permute.xlu0 %952
      %954 = vrot.lane.b32.xlu0 %v440, 12
      %v955 = vpop.permute.xlu0 %954
      %956 = vrot.lane.b32.xlu0 %v441, 12
      %v957 = vpop.permute.xlu0 %956
      %958 = vrot.lane.b32.xlu0 %v443, 12
      %v959 = vpop.permute.xlu0 %958
      %960 = vrot.lane.b32.xlu0 %v444, 12
      %v961 = vpop.permute.xlu0 %960
      %962 = vrot.lane.b32.xlu0 %v446, 12
      %v963 = vpop.permute.xlu0 %962
      %964 = vrot.lane.b32.xlu0 %v447, 12
      %v965 = vpop.permute.xlu0 %964
      %966 = vrot.lane.b32.xlu0 %v449, 12
      %v967 = vpop.permute.xlu0 %966
      %968 = vrot.lane.b32.xlu0 %v450, 12
      %v969 = vpop.permute.xlu0 %968
      %970 = vrot.lane.b32.xlu0 %v452, 12
      %v971 = vpop.permute.xlu0 %970
      %972 = vrot.lane.b32.xlu0 %v453, 12
      %v973 = vpop.permute.xlu0 %972
      %974 = vrot.lane.b32.xlu0 %v455, 12
      %v975 = vpop.permute.xlu0 %974
      %976 = vrot.lane.b32.xlu0 %v456, 12
      %v977 = vpop.permute.xlu0 %976
      %978 = vrot.lane.b32.xlu0 %v458, 12
      %v979 = vpop.permute.xlu0 %978
      %980 = vrot.lane.b32.xlu0 %v459, 12
      %v981 = vpop.permute.xlu0 %980
      %982 = vrot.lane.b32.xlu0 %v461, 12
      %v983 = vpop.permute.xlu0 %982
      %984 = vrot.lane.b32.xlu0 %v462, 12
      %v985 = vpop.permute.xlu0 %984
      %986 = vrot.lane.b32.xlu0 %v464, 12
      %v987 = vpop.permute.xlu0 %986
      %988 = vrot.lane.b32.xlu0 %v465, 12
      %v989 = vpop.permute.xlu0 %988
      %990 = vrot.lane.b32.xlu0 %v467, 12
      %v991 = vpop.permute.xlu0 %990
      %992 = vrot.lane.b32.xlu0 %v468, 12
      %v993 = vpop.permute.xlu0 %992
      %994 = vrot.lane.b32.xlu0 %v470, 12
      %v995 = vpop.permute.xlu0 %994
      %996 = vrot.lane.b32.xlu0 %v471, 12
      %v997 = vpop.permute.xlu0 %996
      %998 = vrot.lane.b32.xlu0 %v473, 12
      %v999 = vpop.permute.xlu0 %998
      %1000 = vrot.lane.b32.xlu0 %v474, 12
      %v1001 = vpop.permute.xlu0 %1000
      %1002 = vrot.lane.b32.xlu0 %v476, 12
      %v1003 = vpop.permute.xlu0 %1002
      %1004 = vrot.lane.b32.xlu0 %v477, 12
      %v1005 = vpop.permute.xlu0 %1004
      %1006 = vrot.lane.b32.xlu0 %v479, 12
      %v1007 = vpop.permute.xlu0 %1006
      %1008 = vrot.lane.b32.xlu0 %v480, 12
      %v1009 = vpop.permute.xlu0 %1008
      %1010 = vrot.lane.b32.xlu0 %v482, 12
      %v1011 = vpop.permute.xlu0 %1010
      %1012 = vrot.lane.b32.xlu0 %v483, 12
      %v1013 = vpop.permute.xlu0 %1012
      %v1051 = vrot.slane %v482, 1
      %v1052 = vrot.slane %v483, 1
      %v1053 = vsel %vm542, %v1051, %v1052
      %v1054 = vrot.slane %v484, 1
      %v1055 = vsel %vm542, %v1052, %v1054
      %1056 = vrot.lane.b32.xlu0 %v550, 16
      %v1057 = vpop.permute.xlu0 %1056
      %1058 = vrot.lane.b32.xlu0 %v552, 16
      %v1059 = vpop.permute.xlu0 %1058
      %1060 = vrot.lane.b32.xlu0 %v555, 16
      %v1061 = vpop.permute.xlu0 %1060
      %1062 = vrot.lane.b32.xlu0 %v557, 16
      %v1063 = vpop.permute.xlu0 %1062
      %1064 = vrot.lane.b32.xlu0 %v560, 16
      %v1065 = vpop.permute.xlu0 %1064
      %1066 = vrot.lane.b32.xlu0 %v562, 16
      %v1067 = vpop.permute.xlu0 %1066
      %1068 = vrot.lane.b32.xlu0 %v565, 16
      %v1069 = vpop.permute.xlu0 %1068
      %1070 = vrot.lane.b32.xlu0 %v567, 16
      %v1071 = vpop.permute.xlu0 %1070
      %1072 = vrot.lane.b32.xlu0 %v570, 16
      %v1073 = vpop.permute.xlu0 %1072
      %1074 = vrot.lane.b32.xlu0 %v572, 16
      %v1075 = vpop.permute.xlu0 %1074
      %1076 = vrot.lane.b32.xlu0 %v575, 16
      %v1077 = vpop.permute.xlu0 %1076
      %1078 = vrot.lane.b32.xlu0 %v577, 16
      %v1079 = vpop.permute.xlu0 %1078
      %1080 = vrot.lane.b32.xlu0 %v580, 16
      %v1081 = vpop.permute.xlu0 %1080
      %1082 = vrot.lane.b32.xlu0 %v582, 16
      %v1083 = vpop.permute.xlu0 %1082
      %1084 = vrot.lane.b32.xlu0 %v585, 16
      %v1085 = vpop.permute.xlu0 %1084
      %1086 = vrot.lane.b32.xlu0 %v587, 16
      %v1087 = vpop.permute.xlu0 %1086
      %1088 = vrot.lane.b32.xlu0 %v590, 16
      %v1089 = vpop.permute.xlu0 %1088
      %1090 = vrot.lane.b32.xlu0 %v592, 16
      %v1091 = vpop.permute.xlu0 %1090
      %1092 = vrot.lane.b32.xlu0 %v595, 16
      %v1093 = vpop.permute.xlu0 %1092
      %1094 = vrot.lane.b32.xlu0 %v597, 16
      %v1095 = vpop.permute.xlu0 %1094
      %1096 = vrot.lane.b32.xlu0 %v600, 16
      %v1097 = vpop.permute.xlu0 %1096
      %1098 = vrot.lane.b32.xlu0 %v602, 16
      %v1099 = vpop.permute.xlu0 %1098
      %1100 = vrot.lane.b32.xlu0 %v605, 16
      %v1101 = vpop.permute.xlu0 %1100
      %1102 = vrot.lane.b32.xlu0 %v607, 16
      %v1103 = vpop.permute.xlu0 %1102
      %1104 = vrot.lane.b32.xlu0 %v610, 16
      %v1105 = vpop.permute.xlu0 %1104
      %1106 = vrot.lane.b32.xlu0 %v612, 16
      %v1107 = vpop.permute.xlu0 %1106
      %1108 = vrot.lane.b32.xlu0 %v615, 16
      %v1109 = vpop.permute.xlu0 %1108
      %1110 = vrot.lane.b32.xlu0 %v617, 16
      %v1111 = vpop.permute.xlu0 %1110
      %1112 = vrot.lane.b32.xlu0 %v620, 16
      %v1113 = vpop.permute.xlu0 %1112
      %1114 = vrot.lane.b32.xlu0 %v622, 16
      %v1115 = vpop.permute.xlu0 %1114
      %1116 = vrot.lane.b32.xlu0 %v625, 16
      %v1117 = vpop.permute.xlu0 %1116
      %1118 = vrot.lane.b32.xlu0 %v627, 16
      %v1119 = vpop.permute.xlu0 %1118
      %1120 = vrot.lane.b32.xlu0 %v630, 16
      %v1121 = vpop.permute.xlu0 %1120
      %1122 = vrot.lane.b32.xlu0 %v632, 16
      %v1123 = vpop.permute.xlu0 %1122
      %1124 = vrot.lane.b32.xlu0 %v1053, 16
      %v1125 = vpop.permute.xlu0 %1124
      %1126 = vrot.lane.b32.xlu0 %v1055, 16
      %v1127 = vpop.permute.xlu0 %1126
      %v1164 = vrot.slane %v482, 2
      %v1165 = vrot.slane %v483, 2
      %v1166 = vsel %vm741, %v1164, %v1165
      %v1167 = vrot.slane %v484, 2
      %v1168 = vsel %vm741, %v1165, %v1167
      %1169 = vrot.lane.b32.xlu0 %v749, 20
      %v1170 = vpop.permute.xlu0 %1169
      %1171 = vrot.lane.b32.xlu0 %v751, 20
      %v1172 = vpop.permute.xlu0 %1171
      %1173 = vrot.lane.b32.xlu0 %v754, 20
      %v1174 = vpop.permute.xlu0 %1173
      %1175 = vrot.lane.b32.xlu0 %v756, 20
      %v1176 = vpop.permute.xlu0 %1175
      %1177 = vrot.lane.b32.xlu0 %v759, 20
      %v1178 = vpop.permute.xlu0 %1177
      %1179 = vrot.lane.b32.xlu0 %v761, 20
      %v1180 = vpop.permute.xlu0 %1179
      %1181 = vrot.lane.b32.xlu0 %v764, 20
      %v1182 = vpop.permute.xlu0 %1181
      %1183 = vrot.lane.b32.xlu0 %v766, 20
      %v1184 = vpop.permute.xlu0 %1183
      %1185 = vrot.lane.b32.xlu0 %v769, 20
      %v1186 = vpop.permute.xlu0 %1185
      %1187 = vrot.lane.b32.xlu0 %v771, 20
      %v1188 = vpop.permute.xlu0 %1187
      %1189 = vrot.lane.b32.xlu0 %v774, 20
      %v1190 = vpop.permute.xlu0 %1189
      %1191 = vrot.lane.b32.xlu0 %v776, 20
      %v1192 = vpop.permute.xlu0 %1191
      %1193 = vrot.lane.b32.xlu0 %v779, 20
      %v1194 = vpop.permute.xlu0 %1193
      %1195 = vrot.lane.b32.xlu0 %v781, 20
      %v1196 = vpop.permute.xlu0 %1195
      %1197 = vrot.lane.b32.xlu0 %v784, 20
      %v1198 = vpop.permute.xlu0 %1197
      %1199 = vrot.lane.b32.xlu0 %v786, 20
      %v1200 = vpop.permute.xlu0 %1199
      %1201 = vrot.lane.b32.xlu0 %v789, 20
      %v1202 = vpop.permute.xlu0 %1201
      %1203 = vrot.lane.b32.xlu0 %v791, 20
      %v1204 = vpop.permute.xlu0 %1203
      %1205 = vrot.lane.b32.xlu0 %v794, 20
      %v1206 = vpop.permute.xlu0 %1205
      %1207 = vrot.lane.b32.xlu0 %v796, 20
      %v1208 = vpop.permute.xlu0 %1207
      %1209 = vrot.lane.b32.xlu0 %v799, 20
      %v1210 = vpop.permute.xlu0 %1209
      %1211 = vrot.lane.b32.xlu0 %v801, 20
      %v1212 = vpop.permute.xlu0 %1211
      %1213 = vrot.lane.b32.xlu0 %v804, 20
      %v1214 = vpop.permute.xlu0 %1213
      %1215 = vrot.lane.b32.xlu0 %v806, 20
      %v1216 = vpop.permute.xlu0 %1215
      %1217 = vrot.lane.b32.xlu0 %v809, 20
      %v1218 = vpop.permute.xlu0 %1217
      %1219 = vrot.lane.b32.xlu0 %v811, 20
      %v1220 = vpop.permute.xlu0 %1219
      %1221 = vrot.lane.b32.xlu0 %v814, 20
      %v1222 = vpop.permute.xlu0 %1221
      %1223 = vrot.lane.b32.xlu0 %v816, 20
      %v1224 = vpop.permute.xlu0 %1223
      %1225 = vrot.lane.b32.xlu0 %v819, 20
      %v1226 = vpop.permute.xlu0 %1225
      %1227 = vrot.lane.b32.xlu0 %v821, 20
      %v1228 = vpop.permute.xlu0 %1227
      %1229 = vrot.lane.b32.xlu0 %v824, 20
      %v1230 = vpop.permute.xlu0 %1229
      %1231 = vrot.lane.b32.xlu0 %v826, 20
      %v1232 = vpop.permute.xlu0 %1231
      %1233 = vrot.lane.b32.xlu0 %v829, 20
      %v1234 = vpop.permute.xlu0 %1233
      %1235 = vrot.lane.b32.xlu0 %v831, 20
      %v1236 = vpop.permute.xlu0 %1235
      %1237 = vrot.lane.b32.xlu0 %v1166, 20
      %v1238 = vpop.permute.xlu0 %1237
      %1239 = vrot.lane.b32.xlu0 %v1168, 20
      %v1240 = vpop.permute.xlu0 %1239
      %1279 = vrot.lane.b32.xlu0 %v434, 24
      %v1280 = vpop.permute.xlu0 %1279
      %1281 = vrot.lane.b32.xlu0 %v435, 24
      %v1282 = vpop.permute.xlu0 %1281
      %1283 = vrot.lane.b32.xlu0 %v437, 24
      %v1284 = vpop.permute.xlu0 %1283
      %1285 = vrot.lane.b32.xlu0 %v438, 24
      %v1286 = vpop.permute.xlu0 %1285
      %1287 = vrot.lane.b32.xlu0 %v440, 24
      %v1288 = vpop.permute.xlu0 %1287
      %1289 = vrot.lane.b32.xlu0 %v441, 24
      %v1290 = vpop.permute.xlu0 %1289
      %1291 = vrot.lane.b32.xlu0 %v443, 24
      %v1292 = vpop.permute.xlu0 %1291
      %1293 = vrot.lane.b32.xlu0 %v444, 24
      %v1294 = vpop.permute.xlu0 %1293
      %1295 = vrot.lane.b32.xlu0 %v446, 24
      %v1296 = vpop.permute.xlu0 %1295
      %1297 = vrot.lane.b32.xlu0 %v447, 24
      %v1298 = vpop.permute.xlu0 %1297
      %1299 = vrot.lane.b32.xlu0 %v449, 24
      %v1300 = vpop.permute.xlu0 %1299
      %1301 = vrot.lane.b32.xlu0 %v450, 24
      %v1302 = vpop.permute.xlu0 %1301
      %1303 = vrot.lane.b32.xlu0 %v452, 24
      %v1304 = vpop.permute.xlu0 %1303
      %1305 = vrot.lane.b32.xlu0 %v453, 24
      %v1306 = vpop.permute.xlu0 %1305
      %1307 = vrot.lane.b32.xlu0 %v455, 24
      %v1308 = vpop.permute.xlu0 %1307
      %1309 = vrot.lane.b32.xlu0 %v456, 24
      %v1310 = vpop.permute.xlu0 %1309
      %1311 = vrot.lane.b32.xlu0 %v458, 24
      %v1312 = vpop.permute.xlu0 %1311
      %1313 = vrot.lane.b32.xlu0 %v459, 24
      %v1314 = vpop.permute.xlu0 %1313
      %1315 = vrot.lane.b32.xlu0 %v461, 24
      %v1316 = vpop.permute.xlu0 %1315
      %1317 = vrot.lane.b32.xlu0 %v462, 24
      %v1318 = vpop.permute.xlu0 %1317
      %1319 = vrot.lane.b32.xlu0 %v464, 24
      %v1320 = vpop.permute.xlu0 %1319
      %1321 = vrot.lane.b32.xlu0 %v465, 24
      %v1322 = vpop.permute.xlu0 %1321
      %1323 = vrot.lane.b32.xlu0 %v467, 24
      %v1324 = vpop.permute.xlu0 %1323
      %1325 = vrot.lane.b32.xlu0 %v468, 24
      %v1326 = vpop.permute.xlu0 %1325
      %1327 = vrot.lane.b32.xlu0 %v470, 24
      %v1328 = vpop.permute.xlu0 %1327
      %1329 = vrot.lane.b32.xlu0 %v471, 24
      %v1330 = vpop.permute.xlu0 %1329
      %1331 = vrot.lane.b32.xlu0 %v473, 24
      %v1332 = vpop.permute.xlu0 %1331
      %1333 = vrot.lane.b32.xlu0 %v474, 24
      %v1334 = vpop.permute.xlu0 %1333
      %1335 = vrot.lane.b32.xlu0 %v476, 24
      %v1336 = vpop.permute.xlu0 %1335
      %1337 = vrot.lane.b32.xlu0 %v477, 24
      %v1338 = vpop.permute.xlu0 %1337
      %1339 = vrot.lane.b32.xlu0 %v479, 24
      %v1340 = vpop.permute.xlu0 %1339
      %1341 = vrot.lane.b32.xlu0 %v480, 24
      %v1342 = vpop.permute.xlu0 %1341
      %1343 = vrot.lane.b32.xlu0 %v482, 24
      %v1344 = vpop.permute.xlu0 %1343
      %1345 = vrot.lane.b32.xlu0 %v483, 24
      %v1346 = vpop.permute.xlu0 %1345
      %1347 = vrot.lane.b32.xlu0 %v485, 24
      %v1348 = vpop.permute.xlu0 %1347
      %1349 = vrot.lane.b32.xlu0 %v486, 24
      %v1350 = vpop.permute.xlu0 %1349
      %v1388 = vrot.slane %v485, 1
      %v1389 = vrot.slane %v486, 1
      %v1390 = vsel %vm542, %v1388, %v1389
      %v1391 = vrot.slane %v487, 1
      %v1392 = vsel %vm542, %v1389, %v1391
      %1393 = vrot.lane.b32.xlu0 %v555, 28
      %v1394 = vpop.permute.xlu0 %1393
      %1395 = vrot.lane.b32.xlu0 %v557, 28
      %v1396 = vpop.permute.xlu0 %1395
      %1397 = vrot.lane.b32.xlu0 %v560, 28
      %v1398 = vpop.permute.xlu0 %1397
      %1399 = vrot.lane.b32.xlu0 %v562, 28
      %v1400 = vpop.permute.xlu0 %1399
      %1401 = vrot.lane.b32.xlu0 %v565, 28
      %v1402 = vpop.permute.xlu0 %1401
      %1403 = vrot.lane.b32.xlu0 %v567, 28
      %v1404 = vpop.permute.xlu0 %1403
      %1405 = vrot.lane.b32.xlu0 %v570, 28
      %v1406 = vpop.permute.xlu0 %1405
      %1407 = vrot.lane.b32.xlu0 %v572, 28
      %v1408 = vpop.permute.xlu0 %1407
      %1409 = vrot.lane.b32.xlu0 %v575, 28
      %v1410 = vpop.permute.xlu0 %1409
      %1411 = vrot.lane.b32.xlu0 %v577, 28
      %v1412 = vpop.permute.xlu0 %1411
      %1413 = vrot.lane.b32.xlu0 %v580, 28
      %v1414 = vpop.permute.xlu0 %1413
      %1415 = vrot.lane.b32.xlu0 %v582, 28
      %v1416 = vpop.permute.xlu0 %1415
      %1417 = vrot.lane.b32.xlu0 %v585, 28
      %v1418 = vpop.permute.xlu0 %1417
      %1419 = vrot.lane.b32.xlu0 %v587, 28
      %v1420 = vpop.permute.xlu0 %1419
      %1421 = vrot.lane.b32.xlu0 %v590, 28
      %v1422 = vpop.permute.xlu0 %1421
      %1423 = vrot.lane.b32.xlu0 %v592, 28
      %v1424 = vpop.permute.xlu0 %1423
      %1425 = vrot.lane.b32.xlu0 %v595, 28
      %v1426 = vpop.permute.xlu0 %1425
      %1427 = vrot.lane.b32.xlu0 %v597, 28
      %v1428 = vpop.permute.xlu0 %1427
      %1429 = vrot.lane.b32.xlu0 %v600, 28
      %v1430 = vpop.permute.xlu0 %1429
      %1431 = vrot.lane.b32.xlu0 %v602, 28
      %v1432 = vpop.permute.xlu0 %1431
      %1433 = vrot.lane.b32.xlu0 %v605, 28
      %v1434 = vpop.permute.xlu0 %1433
      %1435 = vrot.lane.b32.xlu0 %v607, 28
      %v1436 = vpop.permute.xlu0 %1435
      %1437 = vrot.lane.b32.xlu0 %v610, 28
      %v1438 = vpop.permute.xlu0 %1437
      %1439 = vrot.lane.b32.xlu0 %v612, 28
      %v1440 = vpop.permute.xlu0 %1439
      %1441 = vrot.lane.b32.xlu0 %v615, 28
      %v1442 = vpop.permute.xlu0 %1441
      %1443 = vrot.lane.b32.xlu0 %v617, 28
      %v1444 = vpop.permute.xlu0 %1443
      %1445 = vrot.lane.b32.xlu0 %v620, 28
      %v1446 = vpop.permute.xlu0 %1445
      %1447 = vrot.lane.b32.xlu0 %v622, 28
      %v1448 = vpop.permute.xlu0 %1447
      %1449 = vrot.lane.b32.xlu0 %v625, 28
      %v1450 = vpop.permute.xlu0 %1449
      %1451 = vrot.lane.b32.xlu0 %v627, 28
      %v1452 = vpop.permute.xlu0 %1451
      %1453 = vrot.lane.b32.xlu0 %v630, 28
      %v1454 = vpop.permute.xlu0 %1453
      %1455 = vrot.lane.b32.xlu0 %v632, 28
      %v1456 = vpop.permute.xlu0 %1455
      %1457 = vrot.lane.b32.xlu0 %v1053, 28
      %v1458 = vpop.permute.xlu0 %1457
      %1459 = vrot.lane.b32.xlu0 %v1055, 28
      %v1460 = vpop.permute.xlu0 %1459
      %1461 = vrot.lane.b32.xlu0 %v1390, 28
      %v1462 = vpop.permute.xlu0 %1461
      %1463 = vrot.lane.b32.xlu0 %v1392, 28
      %v1464 = vpop.permute.xlu0 %1463
      %v1501 = vrot.slane %v485, 2
      %v1502 = vrot.slane %v486, 2
      %v1503 = vsel %vm741, %v1501, %v1502
      %v1504 = vrot.slane %v487, 2
      %v1505 = vsel %vm741, %v1502, %v1504
      %1506 = vrot.lane.b32.xlu0 %v754, 32
      %v1507 = vpop.permute.xlu0 %1506
      %1508 = vrot.lane.b32.xlu0 %v756, 32
      %v1509 = vpop.permute.xlu0 %1508
      %1510 = vrot.lane.b32.xlu0 %v759, 32
      %v1511 = vpop.permute.xlu0 %1510
      %1512 = vrot.lane.b32.xlu0 %v761, 32
      %v1513 = vpop.permute.xlu0 %1512
      %1514 = vrot.lane.b32.xlu0 %v764, 32
      %v1515 = vpop.permute.xlu0 %1514
      %1516 = vrot.lane.b32.xlu0 %v766, 32
      %v1517 = vpop.permute.xlu0 %1516
      %1518 = vrot.lane.b32.xlu0 %v769, 32
      %v1519 = vpop.permute.xlu0 %1518
      %1520 = vrot.lane.b32.xlu0 %v771, 32
      %v1521 = vpop.permute.xlu0 %1520
      %1522 = vrot.lane.b32.xlu0 %v774, 32
      %v1523 = vpop.permute.xlu0 %1522
      %1524 = vrot.lane.b32.xlu0 %v776, 32
      %v1525 = vpop.permute.xlu0 %1524
      %1526 = vrot.lane.b32.xlu0 %v779, 32
      %v1527 = vpop.permute.xlu0 %1526
      %1528 = vrot.lane.b32.xlu0 %v781, 32
      %v1529 = vpop.permute.xlu0 %1528
      %1530 = vrot.lane.b32.xlu0 %v784, 32
      %v1531 = vpop.permute.xlu0 %1530
      %1532 = vrot.lane.b32.xlu0 %v786, 32
      %v1533 = vpop.permute.xlu0 %1532
      %1534 = vrot.lane.b32.xlu0 %v789, 32
      %v1535 = vpop.permute.xlu0 %1534
      %1536 = vrot.lane.b32.xlu0 %v791, 32
      %v1537 = vpop.permute.xlu0 %1536
      %1538 = vrot.lane.b32.xlu0 %v794, 32
      %v1539 = vpop.permute.xlu0 %1538
      %1540 = vrot.lane.b32.xlu0 %v796, 32
      %v1541 = vpop.permute.xlu0 %1540
      %1542 = vrot.lane.b32.xlu0 %v799, 32
      %v1543 = vpop.permute.xlu0 %1542
      %1544 = vrot.lane.b32.xlu0 %v801, 32
      %v1545 = vpop.permute.xlu0 %1544
      %1546 = vrot.lane.b32.xlu0 %v804, 32
      %v1547 = vpop.permute.xlu0 %1546
      %1548 = vrot.lane.b32.xlu0 %v806, 32
      %v1549 = vpop.permute.xlu0 %1548
      %1550 = vrot.lane.b32.xlu0 %v809, 32
      %v1551 = vpop.permute.xlu0 %1550
      %1552 = vrot.lane.b32.xlu0 %v811, 32
      %v1553 = vpop.permute.xlu0 %1552
      %1554 = vrot.lane.b32.xlu0 %v814, 32
      %v1555 = vpop.permute.xlu0 %1554
      %1556 = vrot.lane.b32.xlu0 %v816, 32
      %v1557 = vpop.permute.xlu0 %1556
      %1558 = vrot.lane.b32.xlu0 %v819, 32
      %v1559 = vpop.permute.xlu0 %1558
      %1560 = vrot.lane.b32.xlu0 %v821, 32
      %v1561 = vpop.permute.xlu0 %1560
      %1562 = vrot.lane.b32.xlu0 %v824, 32
      %v1563 = vpop.permute.xlu0 %1562
      %1564 = vrot.lane.b32.xlu0 %v826, 32
      %v1565 = vpop.permute.xlu0 %1564
      %1566 = vrot.lane.b32.xlu0 %v829, 32
      %v1567 = vpop.permute.xlu0 %1566
      %1568 = vrot.lane.b32.xlu0 %v831, 32
      %v1569 = vpop.permute.xlu0 %1568
      %1570 = vrot.lane.b32.xlu0 %v1166, 32
      %v1571 = vpop.permute.xlu0 %1570
      %1572 = vrot.lane.b32.xlu0 %v1168, 32
      %v1573 = vpop.permute.xlu0 %1572
      %1574 = vrot.lane.b32.xlu0 %v1503, 32
      %v1575 = vpop.permute.xlu0 %1574
      %1576 = vrot.lane.b32.xlu0 %v1505, 32
      %v1577 = vpop.permute.xlu0 %1576
      %vm1614 = vcmask 31744
      %v1615 = vsel %vm1614, %v428, %v634
      %v1616 = vsel %vm1614, %v429, %v636
      %v1617 = vsel %vm1614, %v431, %v638
      %v1618 = vsel %vm1614, %v432, %v640
      %v1619 = vsel %vm1614, %v434, %v642
      %v1620 = vsel %vm1614, %v435, %v644
      %v1621 = vsel %vm1614, %v437, %v646
      %v1622 = vsel %vm1614, %v438, %v648
      %v1623 = vsel %vm1614, %v440, %v650
      %v1624 = vsel %vm1614, %v441, %v652
      %v1625 = vsel %vm1614, %v443, %v654
      %v1626 = vsel %vm1614, %v444, %v656
      %v1627 = vsel %vm1614, %v446, %v658
      %v1628 = vsel %vm1614, %v447, %v660
      %v1629 = vsel %vm1614, %v449, %v662
      %v1630 = vsel %vm1614, %v450, %v664
      %v1631 = vsel %vm1614, %v452, %v666
      %v1632 = vsel %vm1614, %v453, %v668
      %v1633 = vsel %vm1614, %v455, %v670
      %v1634 = vsel %vm1614, %v456, %v672
      %v1635 = vsel %vm1614, %v458, %v674
      %v1636 = vsel %vm1614, %v459, %v676
      %v1637 = vsel %vm1614, %v461, %v678
      %v1638 = vsel %vm1614, %v462, %v680
      %v1639 = vsel %vm1614, %v464, %v682
      %v1640 = vsel %vm1614, %v465, %v684
      %v1641 = vsel %vm1614, %v467, %v686
      %v1642 = vsel %vm1614, %v468, %v688
      %v1643 = vsel %vm1614, %v470, %v690
      %v1644 = vsel %vm1614, %v471, %v692
      %v1645 = vsel %vm1614, %v473, %v694
      %v1646 = vsel %vm1614, %v474, %v696
      %v1647 = vsel %vm1614, %v476, %v698
      %v1648 = vsel %vm1614, %v477, %v700
      %v1649 = vsel %vm1614, %v479, %v702
      %v1650 = vsel %vm1614, %v480, %v704
      %vm1651 = vcmask 64512
      %v1652 = vsel %vm1651, %v1615, %v833
      %v1653 = vsel %vm1651, %v1616, %v835
      %v1654 = vsel %vm1651, %v1617, %v837
      %v1655 = vsel %vm1651, %v1618, %v839
      %v1656 = vsel %vm1651, %v1619, %v841
      %v1657 = vsel %vm1651, %v1620, %v843
      %v1658 = vsel %vm1651, %v1621, %v845
      %v1659 = vsel %vm1651, %v1622, %v847
      %v1660 = vsel %vm1651, %v1623, %v849
      %v1661 = vsel %vm1651, %v1624, %v851
      %v1662 = vsel %vm1651, %v1625, %v853
      %v1663 = vsel %vm1651, %v1626, %v855
      %v1664 = vsel %vm1651, %v1627, %v857
      %v1665 = vsel %vm1651, %v1628, %v859
      %v1666 = vsel %vm1651, %v1629, %v861
      %v1667 = vsel %vm1651, %v1630, %v863
      %v1668 = vsel %vm1651, %v1631, %v865
      %v1669 = vsel %vm1651, %v1632, %v867
      %v1670 = vsel %vm1651, %v1633, %v869
      %v1671 = vsel %vm1651, %v1634, %v871
      %v1672 = vsel %vm1651, %v1635, %v873
      %v1673 = vsel %vm1651, %v1636, %v875
      %v1674 = vsel %vm1651, %v1637, %v877
      %v1675 = vsel %vm1651, %v1638, %v879
      %v1676 = vsel %vm1651, %v1639, %v881
      %v1677 = vsel %vm1651, %v1640, %v883
      %v1678 = vsel %vm1651, %v1641, %v885
      %v1679 = vsel %vm1651, %v1642, %v887
      %v1680 = vsel %vm1651, %v1643, %v889
      %v1681 = vsel %vm1651, %v1644, %v891
      %v1682 = vsel %vm1651, %v1645, %v893
      %v1683 = vsel %vm1651, %v1646, %v895
      %v1684 = vsel %vm1651, %v1647, %v897
      %v1685 = vsel %vm1651, %v1648, %v899
      %v1686 = vsel %vm1651, %v1649, %v901
      %v1687 = vsel %vm1651, %v1650, %v903
      %vm1688 = vcmask 97280
      %v1689 = vsel %vm1688, %v1652, %v943
      %v1690 = vsel %vm1688, %v1653, %v945
      %v1691 = vsel %vm1688, %v1654, %v947
      %v1692 = vsel %vm1688, %v1655, %v949
      %v1693 = vsel %vm1688, %v1656, %v951
      %v1694 = vsel %vm1688, %v1657, %v953
      %v1695 = vsel %vm1688, %v1658, %v955
      %v1696 = vsel %vm1688, %v1659, %v957
      %v1697 = vsel %vm1688, %v1660, %v959
      %v1698 = vsel %vm1688, %v1661, %v961
      %v1699 = vsel %vm1688, %v1662, %v963
      %v1700 = vsel %vm1688, %v1663, %v965
      %v1701 = vsel %vm1688, %v1664, %v967
      %v1702 = vsel %vm1688, %v1665, %v969
      %v1703 = vsel %vm1688, %v1666, %v971
      %v1704 = vsel %vm1688, %v1667, %v973
      %v1705 = vsel %vm1688, %v1668, %v975
      %v1706 = vsel %vm1688, %v1669, %v977
      %v1707 = vsel %vm1688, %v1670, %v979
      %v1708 = vsel %vm1688, %v1671, %v981
      %v1709 = vsel %vm1688, %v1672, %v983
      %v1710 = vsel %vm1688, %v1673, %v985
      %v1711 = vsel %vm1688, %v1674, %v987
      %v1712 = vsel %vm1688, %v1675, %v989
      %v1713 = vsel %vm1688, %v1676, %v991
      %v1714 = vsel %vm1688, %v1677, %v993
      %v1715 = vsel %vm1688, %v1678, %v995
      %v1716 = vsel %vm1688, %v1679, %v997
      %v1717 = vsel %vm1688, %v1680, %v999
      %v1718 = vsel %vm1688, %v1681, %v1001
      %v1719 = vsel %vm1688, %v1682, %v1003
      %v1720 = vsel %vm1688, %v1683, %v1005
      %v1721 = vsel %vm1688, %v1684, %v1007
      %v1722 = vsel %vm1688, %v1685, %v1009
      %v1723 = vsel %vm1688, %v1686, %v1011
      %v1724 = vsel %vm1688, %v1687, %v1013
      %vm1725 = vcmask 130048
      %v1726 = vsel %vm1725, %v1689, %v1057
      %v1727 = vsel %vm1725, %v1690, %v1059
      %v1728 = vsel %vm1725, %v1691, %v1061
      %v1729 = vsel %vm1725, %v1692, %v1063
      %v1730 = vsel %vm1725, %v1693, %v1065
      %v1731 = vsel %vm1725, %v1694, %v1067
      %v1732 = vsel %vm1725, %v1695, %v1069
      %v1733 = vsel %vm1725, %v1696, %v1071
      %v1734 = vsel %vm1725, %v1697, %v1073
      %v1735 = vsel %vm1725, %v1698, %v1075
      %v1736 = vsel %vm1725, %v1699, %v1077
      %v1737 = vsel %vm1725, %v1700, %v1079
      %v1738 = vsel %vm1725, %v1701, %v1081
      %v1739 = vsel %vm1725, %v1702, %v1083
      %v1740 = vsel %vm1725, %v1703, %v1085
      %v1741 = vsel %vm1725, %v1704, %v1087
      %v1742 = vsel %vm1725, %v1705, %v1089
      %v1743 = vsel %vm1725, %v1706, %v1091
      %v1744 = vsel %vm1725, %v1707, %v1093
      %v1745 = vsel %vm1725, %v1708, %v1095
      %v1746 = vsel %vm1725, %v1709, %v1097
      %v1747 = vsel %vm1725, %v1710, %v1099
      %v1748 = vsel %vm1725, %v1711, %v1101
      %v1749 = vsel %vm1725, %v1712, %v1103
      %v1750 = vsel %vm1725, %v1713, %v1105
      %v1751 = vsel %vm1725, %v1714, %v1107
      %v1752 = vsel %vm1725, %v1715, %v1109
      %v1753 = vsel %vm1725, %v1716, %v1111
      %v1754 = vsel %vm1725, %v1717, %v1113
      %v1755 = vsel %vm1725, %v1718, %v1115
      %v1756 = vsel %vm1725, %v1719, %v1117
      %v1757 = vsel %vm1725, %v1720, %v1119
      %v1758 = vsel %vm1725, %v1721, %v1121
      %v1759 = vsel %vm1725, %v1722, %v1123
      %v1760 = vsel %vm1725, %v1723, %v1125
      %v1761 = vsel %vm1725, %v1724, %v1127
      %vm1762 = vcmask 162816
      %v1763 = vsel %vm1762, %v1726, %v1170
      %v1764 = vsel %vm1762, %v1727, %v1172
      %v1765 = vsel %vm1762, %v1728, %v1174
      %v1766 = vsel %vm1762, %v1729, %v1176
      %v1767 = vsel %vm1762, %v1730, %v1178
      %v1768 = vsel %vm1762, %v1731, %v1180
      %v1769 = vsel %vm1762, %v1732, %v1182
      %v1770 = vsel %vm1762, %v1733, %v1184
      %v1771 = vsel %vm1762, %v1734, %v1186
      %v1772 = vsel %vm1762, %v1735, %v1188
      %v1773 = vsel %vm1762, %v1736, %v1190
      %v1774 = vsel %vm1762, %v1737, %v1192
      %v1775 = vsel %vm1762, %v1738, %v1194
      %v1776 = vsel %vm1762, %v1739, %v1196
      %v1777 = vsel %vm1762, %v1740, %v1198
      %v1778 = vsel %vm1762, %v1741, %v1200
      %v1779 = vsel %vm1762, %v1742, %v1202
      %v1780 = vsel %vm1762, %v1743, %v1204
      %v1781 = vsel %vm1762, %v1744, %v1206
      %v1782 = vsel %vm1762, %v1745, %v1208
      %v1783 = vsel %vm1762, %v1746, %v1210
      %v1784 = vsel %vm1762, %v1747, %v1212
      %v1785 = vsel %vm1762, %v1748, %v1214
      %v1786 = vsel %vm1762, %v1749, %v1216
      %v1787 = vsel %vm1762, %v1750, %v1218
      %v1788 = vsel %vm1762, %v1751, %v1220
      %v1789 = vsel %vm1762, %v1752, %v1222
      %v1790 = vsel %vm1762, %v1753, %v1224
      %v1791 = vsel %vm1762, %v1754, %v1226
      %v1792 = vsel %vm1762, %v1755, %v1228
      %v1793 = vsel %vm1762, %v1756, %v1230
      %v1794 = vsel %vm1762, %v1757, %v1232
      %v1795 = vsel %vm1762, %v1758, %v1234
      %v1796 = vsel %vm1762, %v1759, %v1236
      %v1797 = vsel %vm1762, %v1760, %v1238
      %v1798 = vsel %vm1762, %v1761, %v1240
      %vm1799 = vcmask 195584
      %v1800 = vsel %vm1799, %v1763, %v1280
      %v1801 = vsel %vm1799, %v1764, %v1282
      %v1802 = vsel %vm1799, %v1765, %v1284
      %v1803 = vsel %vm1799, %v1766, %v1286
      %v1804 = vsel %vm1799, %v1767, %v1288
      %v1805 = vsel %vm1799, %v1768, %v1290
      %v1806 = vsel %vm1799, %v1769, %v1292
      %v1807 = vsel %vm1799, %v1770, %v1294
      %v1808 = vsel %vm1799, %v1771, %v1296
      %v1809 = vsel %vm1799, %v1772, %v1298
      %v1810 = vsel %vm1799, %v1773, %v1300
      %v1811 = vsel %vm1799, %v1774, %v1302
      %v1812 = vsel %vm1799, %v1775, %v1304
      %v1813 = vsel %vm1799, %v1776, %v1306
      %v1814 = vsel %vm1799, %v1777, %v1308
      %v1815 = vsel %vm1799, %v1778, %v1310
      %v1816 = vsel %vm1799, %v1779, %v1312
      %v1817 = vsel %vm1799, %v1780, %v1314
      %v1818 = vsel %vm1799, %v1781, %v1316
      %v1819 = vsel %vm1799, %v1782, %v1318
      %v1820 = vsel %vm1799, %v1783, %v1320
      %v1821 = vsel %vm1799, %v1784, %v1322
      %v1822 = vsel %vm1799, %v1785, %v1324
      %v1823 = vsel %vm1799, %v1786, %v1326
      %v1824 = vsel %vm1799, %v1787, %v1328
      %v1825 = vsel %vm1799, %v1788, %v1330
      %v1826 = vsel %vm1799, %v1789, %v1332
      %v1827 = vsel %vm1799, %v1790, %v1334
      %v1828 = vsel %vm1799, %v1791, %v1336
      %v1829 = vsel %vm1799, %v1792, %v1338
      %v1830 = vsel %vm1799, %v1793, %v1340
      %v1831 = vsel %vm1799, %v1794, %v1342
      %v1832 = vsel %vm1799, %v1795, %v1344
      %v1833 = vsel %vm1799, %v1796, %v1346
      %v1834 = vsel %vm1799, %v1797, %v1348
      %v1835 = vsel %vm1799, %v1798, %v1350
      %vm1836 = vcmask 228352
      %v1837 = vsel %vm1836, %v1800, %v1394
      %v1838 = vsel %vm1836, %v1801, %v1396
      %v1839 = vsel %vm1836, %v1802, %v1398
      %v1840 = vsel %vm1836, %v1803, %v1400
      %v1841 = vsel %vm1836, %v1804, %v1402
      %v1842 = vsel %vm1836, %v1805, %v1404
      %v1843 = vsel %vm1836, %v1806, %v1406
      %v1844 = vsel %vm1836, %v1807, %v1408
      %v1845 = vsel %vm1836, %v1808, %v1410
      %v1846 = vsel %vm1836, %v1809, %v1412
      %v1847 = vsel %vm1836, %v1810, %v1414
      %v1848 = vsel %vm1836, %v1811, %v1416
      %v1849 = vsel %vm1836, %v1812, %v1418
      %v1850 = vsel %vm1836, %v1813, %v1420
      %v1851 = vsel %vm1836, %v1814, %v1422
      %v1852 = vsel %vm1836, %v1815, %v1424
      %v1853 = vsel %vm1836, %v1816, %v1426
      %v1854 = vsel %vm1836, %v1817, %v1428
      %v1855 = vsel %vm1836, %v1818, %v1430
      %v1856 = vsel %vm1836, %v1819, %v1432
      %v1857 = vsel %vm1836, %v1820, %v1434
      %v1858 = vsel %vm1836, %v1821, %v1436
      %v1859 = vsel %vm1836, %v1822, %v1438
      %v1860 = vsel %vm1836, %v1823, %v1440
      %v1861 = vsel %vm1836, %v1824, %v1442
      %v1862 = vsel %vm1836, %v1825, %v1444
      %v1863 = vsel %vm1836, %v1826, %v1446
      %v1864 = vsel %vm1836, %v1827, %v1448
      %v1865 = vsel %vm1836, %v1828, %v1450
      %v1866 = vsel %vm1836, %v1829, %v1452
      %v1867 = vsel %vm1836, %v1830, %v1454
      %v1868 = vsel %vm1836, %v1831, %v1456
      %v1869 = vsel %vm1836, %v1832, %v1458
      %v1870 = vsel %vm1836, %v1833, %v1460
      %v1871 = vsel %vm1836, %v1834, %v1462
      %v1872 = vsel %vm1836, %v1835, %v1464
      %vm1873 = vcmask 261120
      %v1874 = vsel %vm1873, %v1837, %v1507
      %v1875 = vsel %vm1873, %v1838, %v1509
      %v1876 = vsel %vm1873, %v1839, %v1511
      %v1877 = vsel %vm1873, %v1840, %v1513
      %v1878 = vsel %vm1873, %v1841, %v1515
      %v1879 = vsel %vm1873, %v1842, %v1517
      %v1880 = vsel %vm1873, %v1843, %v1519
      %v1881 = vsel %vm1873, %v1844, %v1521
      %v1882 = vsel %vm1873, %v1845, %v1523
      %v1883 = vsel %vm1873, %v1846, %v1525
      %v1884 = vsel %vm1873, %v1847, %v1527
      %v1885 = vsel %vm1873, %v1848, %v1529
      %v1886 = vsel %vm1873, %v1849, %v1531
      %v1887 = vsel %vm1873, %v1850, %v1533
      %v1888 = vsel %vm1873, %v1851, %v1535
      %v1889 = vsel %vm1873, %v1852, %v1537
      %v1890 = vsel %vm1873, %v1853, %v1539
      %v1891 = vsel %vm1873, %v1854, %v1541
      %v1892 = vsel %vm1873, %v1855, %v1543
      %v1893 = vsel %vm1873, %v1856, %v1545
      %v1894 = vsel %vm1873, %v1857, %v1547
      %v1895 = vsel %vm1873, %v1858, %v1549
      %v1896 = vsel %vm1873, %v1859, %v1551
      %v1897 = vsel %vm1873, %v1860, %v1553
      %v1898 = vsel %vm1873, %v1861, %v1555
      %v1899 = vsel %vm1873, %v1862, %v1557
      %v1900 = vsel %vm1873, %v1863, %v1559
      %v1901 = vsel %vm1873, %v1864, %v1561
      %v1902 = vsel %vm1873, %v1865, %v1563
      %v1903 = vsel %vm1873, %v1866, %v1565
      %v1904 = vsel %vm1873, %v1867, %v1567
      %v1905 = vsel %vm1873, %v1868, %v1569
      %v1906 = vsel %vm1873, %v1869, %v1571
      %v1907 = vsel %vm1873, %v1870, %v1573
      %v1908 = vsel %vm1873, %v1871, %v1575
      %v1909 = vsel %vm1873, %v1872, %v1577
      %v1910 = vld [vmem:[%s2] sm:$0xff]
      %v1911 = vld [vmem:[%s2 + $0x8] sm:$0xff]
      %v1912 = vld [vmem:[%s2 + $0x10] sm:$0xff]
      %v1913 = vld [vmem:[%s2 + $0x18] sm:$0xff]
      %v1914 = vld [vmem:[%s2 + $0x20] sm:$0xf]
      %vm1915 = vcmask 293888
      %v1917 = vsel %vm1915, %v1874, 0
      %v1920 = vsel %vm1915, %v1875, 0
      %v1923 = vsel %vm1915, %v1876, 0
      %v1926 = vsel %vm1915, %v1877, 0
      %v1929 = vsel %vm1915, %v1878, 0
      %v1932 = vsel %vm1915, %v1879, 0
      %v1935 = vsel %vm1915, %v1880, 0
      %v1938 = vsel %vm1915, %v1881, 0
      %v1941 = vsel %vm1915, %v1882, 0
      %v1944 = vsel %vm1915, %v1883, 0
      %v1947 = vsel %vm1915, %v1884, 0
      %v1950 = vsel %vm1915, %v1885, 0
      %v1953 = vsel %vm1915, %v1886, 0
      %v1956 = vsel %vm1915, %v1887, 0
      %v1959 = vsel %vm1915, %v1888, 0
      %v1962 = vsel %vm1915, %v1889, 0
      %v1965 = vsel %vm1915, %v1890, 0
      %v1968 = vsel %vm1915, %v1891, 0
      %v1971 = vsel %vm1915, %v1892, 0
      %v1974 = vsel %vm1915, %v1893, 0
      %v1977 = vsel %vm1915, %v1894, 0
      %v1980 = vsel %vm1915, %v1895, 0
      %v1983 = vsel %vm1915, %v1896, 0
      %v1986 = vsel %vm1915, %v1897, 0
      %v1989 = vsel %vm1915, %v1898, 0
      %v1992 = vsel %vm1915, %v1899, 0
      %v1995 = vsel %vm1915, %v1900, 0
      %v1998 = vsel %vm1915, %v1901, 0
      %v2001 = vsel %vm1915, %v1902, 0
      %v2004 = vsel %vm1915, %v1903, 0
      %v2007 = vsel %vm1915, %v1904, 0
      %v2010 = vsel %vm1915, %v1905, 0
      %v2013 = vsel %vm1915, %v1906, 0
      %v2016 = vsel %vm1915, %v1907, 0
      %v2019 = vsel %vm1915, %v1908, 0
      %v2022 = vsel %vm1915, %v1909, 0
      %vm2024 = vcmask 1043456
      %v2026 = vsel %vm2024, %v1914, 0
      %2028 = vmatprep.subr.mxu0 0.0
      %2029 = vmatpush1.msra.mxu0 0.0
      %2030 = vmatprep.subr.mxu0 0.0
      %2031 = vmatpush1.msra.mxu0 0.0
      %2032 = vmatprep.subr.mxu0 0.0
      %2033 = vmatpush1.msra.mxu0 0.0
      %2034 = vmatprep.subr.mxu0 0.0
      %2035 = vmatpush1.msra.mxu0 0.0
      %2036 = vmatprep.subr.mxu0 0.0
      %2037 = vmatpush1.msra.mxu0 0.0
      %2038 = vmatprep.subr.mxu0 0.0
      %2039 = vmatpush1.msra.mxu0 0.0
      %2040 = vmatprep.subr.mxu0 0.0
      %2041 = vmatpush1.msra.mxu0 0.0
      %2042 = vmatprep.subr.mxu0 0.0
      %2043 = vmatpush1.msra.mxu0 0.0
      %2044 = vmatprep.subr.mxu0 0.0
      %2045 = vmatpush1.msra.mxu0 0.0
      %2046 = vmatprep.subr.mxu0 0.0
      %2047 = vmatpush1.msra.mxu0 0.0
      %2048 = vmatprep.subr.mxu0 0.0
      %2049 = vmatpush1.msra.mxu0 0.0
      %2050 = vmatprep.subr.mxu0 0.0
      %2051 = vmatpush1.msra.mxu0 %v2026
      %2052 = vmatprep.subr.mxu0 0.0
      %2053 = vmatpush1.msra.mxu0 %v1913
      %2054 = vmatprep.subr.mxu0 0.0
      %2055 = vmatpush1.msra.mxu0 %v1912
      %2056 = vmatprep.subr.mxu0 0.0
      %2057 = vmatpush1.msra.mxu0 %v1911
      %2058 = vmatprep.subr.mxu0 0.0
      %2059 = vmatpush1.msra.mxu0 %v1910
      %2060 = vmatprep.subr.mxu0 0.0
      %2061 = vmatpush2.msra.mxu0 0.0
      %2062 = vmatprep.subr.mxu0 0.0
      %2063 = vmatpush2.msra.mxu0 0.0
      %2064 = vmatprep.subr.mxu0 0.0
      %2065 = vmatpush2.msra.mxu0 0.0
      %2066 = vmatprep.subr.mxu0 0.0
      %2067 = vmatpush2.msra.mxu0 0.0
      %2068 = vmatprep.subr.mxu0 0.0
      %2069 = vmatpush2.msra.mxu0 0.0
      %2070 = vmatprep.subr.mxu0 0.0
      %2071 = vmatpush2.msra.mxu0 0.0
      %2072 = vmatprep.subr.mxu0 0.0
      %2073 = vmatpush2.msra.mxu0 0.0
      %2074 = vmatprep.subr.mxu0 0.0
      %2075 = vmatpush2.msra.mxu0 0.0
      %2076 = vmatprep.subr.mxu0 0.0
      %2077 = vmatpush2.msra.mxu0 0.0
      %2078 = vmatprep.subr.mxu0 0.0
      %2079 = vmatpush2.msra.mxu0 0.0
      %2080 = vmatprep.subr.mxu0 0.0
      %2081 = vmatpush2.msra.mxu0 0.0
      %2082 = vmatprep.subr.mxu0 0.0
      %2083 = vmatpush2.msra.mxu0 0.0
      %2084 = vmatprep.subr.mxu0 0.0
      %2085 = vmatpush2.msra.mxu0 0.0
      %2086 = vmatprep.subr.mxu0 0.0
      %2087 = vmatpush2.msra.mxu0 0.0
      %2088 = vmatprep.subr.mxu0 0.0
      %2089 = vmatpush2.msra.mxu0 0.0
      %2090 = vmatprep.subr.mxu0 0.0
      %2091 = vmatpush2.msra.mxu0 0.0
      %2092 = vmatprep.mubr.f32.mxu0 0.0
      %2093 = vmatmul.mubr.f32.gmra.mxu0 %v1917
      %v2094 = vpop.f32.mrf.mxu0
      %v2095 = vadd.f32 0.0, %v2094
      %v2096 = vpop.f32.mrf.mxu0
      %2097 = vmatprep.mubr.f32.mxu0 0.0
      %2098 = vmatmul.mubr.f32.gmra.mxu0 %v1920
      %v2099 = vpop.f32.mrf.mxu0
      %v2100 = vadd.f32 0.0, %v2099
      %v2101 = vpop.f32.mrf.mxu0
      %2102 = vmatprep.mubr.f32.mxu0 0.0
      %2103 = vmatmul.mubr.f32.gmra.mxu0 %v1923
      %v2104 = vpop.f32.mrf.mxu0
      %v2105 = vadd.f32 0.0, %v2104
      %v2106 = vpop.f32.mrf.mxu0
      %2107 = vmatprep.mubr.f32.mxu0 0.0
      %2108 = vmatmul.mubr.f32.gmra.mxu0 %v1926
      %v2109 = vpop.f32.mrf.mxu0
      %v2110 = vadd.f32 0.0, %v2109
      %v2111 = vpop.f32.mrf.mxu0
      %2112 = vmatprep.mubr.f32.mxu0 0.0
      %2113 = vmatmul.mubr.f32.gmra.mxu0 %v1929
      %v2114 = vpop.f32.mrf.mxu0
      %v2115 = vadd.f32 0.0, %v2114
      %v2116 = vpop.f32.mrf.mxu0
      %2117 = vmatprep.mubr.f32.mxu0 0.0
      %2118 = vmatmul.mubr.f32.gmra.mxu0 %v1932
      %v2119 = vpop.f32.mrf.mxu0
      %v2120 = vadd.f32 0.0, %v2119
      %v2121 = vpop.f32.mrf.mxu0
      %2122 = vmatprep.mubr.f32.mxu0 0.0
      %2123 = vmatmul.mubr.f32.gmra.mxu0 %v1935
      %v2124 = vpop.f32.mrf.mxu0
      %v2125 = vadd.f32 0.0, %v2124
      %v2126 = vpop.f32.mrf.mxu0
      %2127 = vmatprep.mubr.f32.mxu0 0.0
      %2128 = vmatmul.mubr.f32.gmra.mxu0 %v1938
      %v2129 = vpop.f32.mrf.mxu0
      %v2130 = vadd.f32 0.0, %v2129
      %v2131 = vpop.f32.mrf.mxu0
      %2132 = vmatprep.mubr.f32.mxu0 0.0
      %2133 = vmatmul.mubr.f32.gmra.mxu0 %v1941
      %v2134 = vpop.f32.mrf.mxu0
      %v2135 = vadd.f32 0.0, %v2134
      %v2136 = vpop.f32.mrf.mxu0
      %2137 = vmatprep.mubr.f32.mxu0 0.0
      %2138 = vmatmul.mubr.f32.gmra.mxu0 %v1944
      %v2139 = vpop.f32.mrf.mxu0
      %v2140 = vadd.f32 0.0, %v2139
      %v2141 = vpop.f32.mrf.mxu0
      %2142 = vmatprep.mubr.f32.mxu0 0.0
      %2143 = vmatmul.mubr.f32.gmra.mxu0 %v1947
      %v2144 = vpop.f32.mrf.mxu0
      %v2145 = vadd.f32 0.0, %v2144
      %v2146 = vpop.f32.mrf.mxu0
      %2147 = vmatprep.mubr.f32.mxu0 0.0
      %2148 = vmatmul.mubr.f32.gmra.mxu0 %v1950
      %v2149 = vpop.f32.mrf.mxu0
      %v2150 = vadd.f32 0.0, %v2149
      %v2151 = vpop.f32.mrf.mxu0
      %2152 = vmatprep.mubr.f32.mxu0 0.0
      %2153 = vmatmul.mubr.f32.gmra.mxu0 %v1953
      %v2154 = vpop.f32.mrf.mxu0
      %v2155 = vadd.f32 0.0, %v2154
      %v2156 = vpop.f32.mrf.mxu0
      %2157 = vmatprep.mubr.f32.mxu0 0.0
      %2158 = vmatmul.mubr.f32.gmra.mxu0 %v1956
      %v2159 = vpop.f32.mrf.mxu0
      %v2160 = vadd.f32 0.0, %v2159
      %v2161 = vpop.f32.mrf.mxu0
      %2162 = vmatprep.mubr.f32.mxu0 0.0
      %2163 = vmatmul.mubr.f32.gmra.mxu0 %v1959
      %v2164 = vpop.f32.mrf.mxu0
      %v2165 = vadd.f32 0.0, %v2164
      %v2166 = vpop.f32.mrf.mxu0
      %2167 = vmatprep.mubr.f32.mxu0 0.0
      %2168 = vmatmul.mubr.f32.gmra.mxu0 %v1962
      %v2169 = vpop.f32.mrf.mxu0
      %v2170 = vadd.f32 0.0, %v2169
      %v2171 = vpop.f32.mrf.mxu0
      %2172 = vmatprep.mubr.f32.mxu0 0.0
      %2173 = vmatmul.mubr.f32.gmra.mxu0 %v1965
      %v2174 = vpop.f32.mrf.mxu0
      %v2175 = vadd.f32 0.0, %v2174
      %v2176 = vpop.f32.mrf.mxu0
      %2177 = vmatprep.mubr.f32.mxu0 0.0
      %2178 = vmatmul.mubr.f32.gmra.mxu0 %v1968
      %v2179 = vpop.f32.mrf.mxu0
      %v2180 = vadd.f32 0.0, %v2179
      %v2181 = vpop.f32.mrf.mxu0
      %2182 = vmatprep.mubr.f32.mxu0 0.0
      %2183 = vmatmul.mubr.f32.gmra.mxu0 %v1971
      %v2184 = vpop.f32.mrf.mxu0
      %v2185 = vadd.f32 0.0, %v2184
      %v2186 = vpop.f32.mrf.mxu0
      %2187 = vmatprep.mubr.f32.mxu0 0.0
      %2188 = vmatmul.mubr.f32.gmra.mxu0 %v1974
      %v2189 = vpop.f32.mrf.mxu0
      %v2190 = vadd.f32 0.0, %v2189
      %v2191 = vpop.f32.mrf.mxu0
      %2192 = vmatprep.mubr.f32.mxu0 0.0
      %2193 = vmatmul.mubr.f32.gmra.mxu0 %v1977
      %v2194 = vpop.f32.mrf.mxu0
      %v2195 = vadd.f32 0.0, %v2194
      %v2196 = vpop.f32.mrf.mxu0
      %2197 = vmatprep.mubr.f32.mxu0 0.0
      %2198 = vmatmul.mubr.f32.gmra.mxu0 %v1980
      %v2199 = vpop.f32.mrf.mxu0
      %v2200 = vadd.f32 0.0, %v2199
      %v2201 = vpop.f32.mrf.mxu0
      %2202 = vmatprep.mubr.f32.mxu0 0.0
      %2203 = vmatmul.mubr.f32.gmra.mxu0 %v1983
      %v2204 = vpop.f32.mrf.mxu0
      %v2205 = vadd.f32 0.0, %v2204
      %v2206 = vpop.f32.mrf.mxu0
      %2207 = vmatprep.mubr.f32.mxu0 0.0
      %2208 = vmatmul.mubr.f32.gmra.mxu0 %v1986
      %v2209 = vpop.f32.mrf.mxu0
      %v2210 = vadd.f32 0.0, %v2209
      %v2211 = vpop.f32.mrf.mxu0
      %2212 = vmatprep.mubr.f32.mxu0 0.0
      %2213 = vmatmul.mubr.f32.gmra.mxu0 %v1989
      %v2214 = vpop.f32.mrf.mxu0
      %v2215 = vadd.f32 0.0, %v2214
      %v2216 = vpop.f32.mrf.mxu0
      %2217 = vmatprep.mubr.f32.mxu0 0.0
      %2218 = vmatmul.mubr.f32.gmra.mxu0 %v1992
      %v2219 = vpop.f32.mrf.mxu0
      %v2220 = vadd.f32 0.0, %v2219
      %v2221 = vpop.f32.mrf.mxu0
      %2222 = vmatprep.mubr.f32.mxu0 0.0
      %2223 = vmatmul.mubr.f32.gmra.mxu0 %v1995
      %v2224 = vpop.f32.mrf.mxu0
      %v2225 = vadd.f32 0.0, %v2224
      %v2226 = vpop.f32.mrf.mxu0
      %2227 = vmatprep.mubr.f32.mxu0 0.0
      %2228 = vmatmul.mubr.f32.gmra.mxu0 %v1998
      %v2229 = vpop.f32.mrf.mxu0
      %v2230 = vadd.f32 0.0, %v2229
      %v2231 = vpop.f32.mrf.mxu0
      %2232 = vmatprep.mubr.f32.mxu0 0.0
      %2233 = vmatmul.mubr.f32.gmra.mxu0 %v2001
      %v2234 = vpop.f32.mrf.mxu0
      %v2235 = vadd.f32 0.0, %v2234
      %v2236 = vpop.f32.mrf.mxu0
      %2237 = vmatprep.mubr.f32.mxu0 0.0
      %2238 = vmatmul.mubr.f32.gmra.mxu0 %v2004
      %v2239 = vpop.f32.mrf.mxu0
      %v2240 = vadd.f32 0.0, %v2239
      %v2241 = vpop.f32.mrf.mxu0
      %2242 = vmatprep.mubr.f32.mxu0 0.0
      %2243 = vmatmul.mubr.f32.gmra.mxu0 %v2007
      %v2244 = vpop.f32.mrf.mxu0
      %v2245 = vadd.f32 0.0, %v2244
      %v2246 = vpop.f32.mrf.mxu0
      %2247 = vmatprep.mubr.f32.mxu0 0.0
      %2248 = vmatmul.mubr.f32.gmra.mxu0 %v2010
      %v2249 = vpop.f32.mrf.mxu0
      %v2250 = vadd.f32 0.0, %v2249
      %v2251 = vpop.f32.mrf.mxu0
      %2252 = vmatprep.mubr.f32.mxu0 0.0
      %2253 = vmatmul.mubr.f32.gmra.mxu0 %v2013
      %v2254 = vpop.f32.mrf.mxu0
      %v2255 = vadd.f32 0.0, %v2254
      %v2256 = vpop.f32.mrf.mxu0
      %2257 = vmatprep.mubr.f32.mxu0 0.0
      %2258 = vmatmul.mubr.f32.gmra.mxu0 %v2016
      %v2259 = vpop.f32.mrf.mxu0
      %v2260 = vadd.f32 0.0, %v2259
      %v2261 = vpop.f32.mrf.mxu0
      %2262 = vmatprep.mubr.f32.mxu0 0.0
      %2263 = vmatmul.mubr.f32.gmra.mxu0 %v2019
      %v2264 = vpop.f32.mrf.mxu0
      %v2265 = vadd.f32 0.0, %v2264
      %v2266 = vpop.f32.mrf.mxu0
      %2267 = vmatprep.mubr.f32.mxu0 0.0
      %2268 = vmatmul.mubr.f32.gmra.mxu0 %v2022
      %v2269 = vpop.f32.mrf.mxu0
      %v2270 = vadd.f32 0.0, %v2269
      %v2271 = vpop.f32.mrf.mxu0
      %2272 = vdwg.mxu0
      %v2273 = vld [vmem:[%s3] sm:$0x1]
      %v2275 = vlaneseq
      %v2276 = vshrl.u32 %v2275, 7
      %v2277 = vsub.s32 0, %v2276
      %v2278 = vrot.slane %v2273, %v2277
      %v2280 = vmul.f32 %v2095, %v2278
      %v2281 = vmul.f32 %v2100, %v2278
      %v2282 = vmul.f32 %v2105, %v2278
      %v2283 = vmul.f32 %v2110, %v2278
      %v2284 = vmul.f32 %v2115, %v2278
      %v2285 = vmul.f32 %v2120, %v2278
      %v2286 = vmul.f32 %v2125, %v2278
      %v2287 = vmul.f32 %v2130, %v2278
      %v2288 = vmul.f32 %v2135, %v2278
      %v2289 = vmul.f32 %v2140, %v2278
      %v2290 = vmul.f32 %v2145, %v2278
      %v2291 = vmul.f32 %v2150, %v2278
      %v2292 = vmul.f32 %v2155, %v2278
      %v2293 = vmul.f32 %v2160, %v2278
      %v2294 = vmul.f32 %v2165, %v2278
      %v2295 = vmul.f32 %v2170, %v2278
      %v2296 = vmul.f32 %v2175, %v2278
      %v2297 = vmul.f32 %v2180, %v2278
      %v2298 = vmul.f32 %v2185, %v2278
      %v2299 = vmul.f32 %v2190, %v2278
      %v2300 = vmul.f32 %v2195, %v2278
      %v2301 = vmul.f32 %v2200, %v2278
      %v2302 = vmul.f32 %v2205, %v2278
      %v2303 = vmul.f32 %v2210, %v2278
      %v2304 = vmul.f32 %v2215, %v2278
      %v2305 = vmul.f32 %v2220, %v2278
      %v2306 = vmul.f32 %v2225, %v2278
      %v2307 = vmul.f32 %v2230, %v2278
      %v2308 = vmul.f32 %v2235, %v2278
      %v2309 = vmul.f32 %v2240, %v2278
      %v2310 = vmul.f32 %v2245, %v2278
      %v2311 = vmul.f32 %v2250, %v2278
      %v2312 = vmul.f32 %v2255, %v2278
      %v2313 = vmul.f32 %v2260, %v2278
      %v2314 = vmul.f32 %v2265, %v2278
      %v2315 = vmul.f32 %v2270, %v2278
      %v2316 = vld [vmem:[%s4] sm:$0x1]
      %v2318 = vlaneseq
      %v2319 = vshrl.u32 %v2318, 7
      %v2320 = vsub.s32 0, %v2319
      %v2321 = vrot.slane %v2316, %v2320
      %v2323 = vadd.f32 %v2280, %v2321
      %v2324 = vadd.f32 %v2281, %v2321
      %v2325 = vadd.f32 %v2282, %v2321
      %v2326 = vadd.f32 %v2283, %v2321
      %v2327 = vadd.f32 %v2284, %v2321
      %v2328 = vadd.f32 %v2285, %v2321
      %v2329 = vadd.f32 %v2286, %v2321
      %v2330 = vadd.f32 %v2287, %v2321
      %v2331 = vadd.f32 %v2288, %v2321
      %v2332 = vadd.f32 %v2289, %v2321
      %v2333 = vadd.f32 %v2290, %v2321
      %v2334 = vadd.f32 %v2291, %v2321
      %v2335 = vadd.f32 %v2292, %v2321
      %v2336 = vadd.f32 %v2293, %v2321
      %v2337 = vadd.f32 %v2294, %v2321
      %v2338 = vadd.f32 %v2295, %v2321
      %v2339 = vadd.f32 %v2296, %v2321
      %v2340 = vadd.f32 %v2297, %v2321
      %v2341 = vadd.f32 %v2298, %v2321
      %v2342 = vadd.f32 %v2299, %v2321
      %v2343 = vadd.f32 %v2300, %v2321
      %v2344 = vadd.f32 %v2301, %v2321
      %v2345 = vadd.f32 %v2302, %v2321
      %v2346 = vadd.f32 %v2303, %v2321
      %v2347 = vadd.f32 %v2304, %v2321
      %v2348 = vadd.f32 %v2305, %v2321
      %v2349 = vadd.f32 %v2306, %v2321
      %v2350 = vadd.f32 %v2307, %v2321
      %v2351 = vadd.f32 %v2308, %v2321
      %v2352 = vadd.f32 %v2309, %v2321
      %v2353 = vadd.f32 %v2310, %v2321
      %v2354 = vadd.f32 %v2311, %v2321
      %v2355 = vadd.f32 %v2312, %v2321
      %v2356 = vadd.f32 %v2313, %v2321
      %v2357 = vadd.f32 %v2314, %v2321
      %v2358 = vadd.f32 %v2315, %v2321
      %v2359 = vmax.f32 %v2323, 0.0
      %v2360 = vmax.f32 %v2324, 0.0
      %v2361 = vmax.f32 %v2325, 0.0
      %v2362 = vmax.f32 %v2326, 0.0
      %v2363 = vmax.f32 %v2327, 0.0
      %v2364 = vmax.f32 %v2328, 0.0
      %v2365 = vmax.f32 %v2329, 0.0
      %v2366 = vmax.f32 %v2330, 0.0
      %v2367 = vmax.f32 %v2331, 0.0
      %v2368 = vmax.f32 %v2332, 0.0
      %v2369 = vmax.f32 %v2333, 0.0
      %v2370 = vmax.f32 %v2334, 0.0
      %v2371 = vmax.f32 %v2335, 0.0
      %v2372 = vmax.f32 %v2336, 0.0
      %v2373 = vmax.f32 %v2337, 0.0
      %v2374 = vmax.f32 %v2338, 0.0
      %v2375 = vmax.f32 %v2339, 0.0
      %v2376 = vmax.f32 %v2340, 0.0
      %v2377 = vmax.f32 %v2341, 0.0
      %v2378 = vmax.f32 %v2342, 0.0
      %v2379 = vmax.f32 %v2343, 0.0
      %v2380 = vmax.f32 %v2344, 0.0
      %v2381 = vmax.f32 %v2345, 0.0
      %v2382 = vmax.f32 %v2346, 0.0
      %v2383 = vmax.f32 %v2347, 0.0
      %v2384 = vmax.f32 %v2348, 0.0
      %v2385 = vmax.f32 %v2349, 0.0
      %v2386 = vmax.f32 %v2350, 0.0
      %v2387 = vmax.f32 %v2351, 0.0
      %v2388 = vmax.f32 %v2352, 0.0
      %v2389 = vmax.f32 %v2353, 0.0
      %v2390 = vmax.f32 %v2354, 0.0
      %v2391 = vmax.f32 %v2355, 0.0
      %v2392 = vmax.f32 %v2356, 0.0
      %v2393 = vmax.f32 %v2357, 0.0
      %v2394 = vmax.f32 %v2358, 0.0
      %vm2395 = vcmask 57344
      %2396 = vst.msk [vmem:[#allocation2] sm:$0x1] %vm2395, 0.0
      %2397 = vst.msk [vmem:[#allocation2 + $0x18] sm:$0x1] %vm2395, 0.0
      %2398 = vst.msk [vmem:[#allocation2 + $0x30] sm:$0x1] %vm2395, 0.0
      %2399 = vst.msk [vmem:[#allocation2 + $0x48] sm:$0x1] %vm2395, 0.0
      %2400 = vst.msk [vmem:[#allocation2 + $0x60] sm:$0x1] %vm2395, 0.0
      %2401 = vst.msk [vmem:[#allocation2 + $0x78] sm:$0x1] %vm2395, 0.0
      %2402 = vst.msk [vmem:[#allocation2 + $0x90] sm:$0x1] %vm2395, 0.0
      %2403 = vst.msk [vmem:[#allocation2 + $0xa8] sm:$0x1] %vm2395, 0.0
      %2404 = vst.msk [vmem:[#allocation2 + $0xc0] sm:$0x1] %vm2395, 0.0
      %2405 = vst.msk [vmem:[#allocation2 + $0xd8] sm:$0x1] %vm2395, 0.0
      %2406 = vst.msk [vmem:[#allocation2 + $0xf0] sm:$0x1] %vm2395, 0.0
      %2407 = vst.msk [vmem:[#allocation2 + $0x108] sm:$0x1] %vm2395, 0.0
      %2408 = vst.msk [vmem:[#allocation2 + $0x120] sm:$0x1] %vm2395, 0.0
      %2409 = vst.msk [vmem:[#allocation2 + $0x138] sm:$0x1] %vm2395, 0.0
      %2410 = vst.msk [vmem:[#allocation2 + $0x150] sm:$0x1] %vm2395, 0.0
      %2411 = vst.msk [vmem:[#allocation2 + $0x168] sm:$0x1] %vm2395, 0.0
      %2412 = vst.msk [vmem:[#allocation2 + $0x180] sm:$0x1] %vm2395, 0.0
      %2413 = vst.msk [vmem:[#allocation2 + $0x198] sm:$0x1] %vm2395, 0.0
      %2414 = vst.msk [vmem:[#allocation2 + $0x11] sm:$0x1] %vm2395, 0.0
      %2415 = vst.msk [vmem:[#allocation2 + $0x29] sm:$0x1] %vm2395, 0.0
      %2416 = vst.msk [vmem:[#allocation2 + $0x41] sm:$0x1] %vm2395, 0.0
      %2417 = vst.msk [vmem:[#allocation2 + $0x59] sm:$0x1] %vm2395, 0.0
      %2418 = vst.msk [vmem:[#allocation2 + $0x71] sm:$0x1] %vm2395, 0.0
      %2419 = vst.msk [vmem:[#allocation2 + $0x89] sm:$0x1] %vm2395, 0.0
      %2420 = vst.msk [vmem:[#allocation2 + $0xa1] sm:$0x1] %vm2395, 0.0
      %2421 = vst.msk [vmem:[#allocation2 + $0xb9] sm:$0x1] %vm2395, 0.0
      %2422 = vst.msk [vmem:[#allocation2 + $0xd1] sm:$0x1] %vm2395, 0.0
      %2423 = vst.msk [vmem:[#allocation2 + $0xe9] sm:$0x1] %vm2395, 0.0
      %2424 = vst.msk [vmem:[#allocation2 + $0x101] sm:$0x1] %vm2395, 0.0
      %2425 = vst.msk [vmem:[#allocation2 + $0x119] sm:$0x1] %vm2395, 0.0
      %2426 = vst.msk [vmem:[#allocation2 + $0x131] sm:$0x1] %vm2395, 0.0
      %2427 = vst.msk [vmem:[#allocation2 + $0x149] sm:$0x1] %vm2395, 0.0
      %2428 = vst.msk [vmem:[#allocation2 + $0x161] sm:$0x1] %vm2395, 0.0
      %2429 = vst.msk [vmem:[#allocation2 + $0x179] sm:$0x1] %vm2395, 0.0
      %2430 = vst.msk [vmem:[#allocation2 + $0x191] sm:$0x1] %vm2395, 0.0
      %2431 = vst.msk [vmem:[#allocation2 + $0x1a9] sm:$0x1] %vm2395, 0.0
      %2432 = vst.msk [vmem:[#allocation2 + $0x1] sm:$0xff] %vm1651, %v2359
      %2433 = vst.msk [vmem:[#allocation2 + $0x9] sm:$0xff] %vm1651, %v2360
      %2434 = vst.msk [vmem:[#allocation2 + $0x19] sm:$0xff] %vm1651, %v2361
      %2435 = vst.msk [vmem:[#allocation2 + $0x21] sm:$0xff] %vm1651, %v2362
      %2436 = vst.msk [vmem:[#allocation2 + $0x31] sm:$0xff] %vm1651, %v2363
      %2437 = vst.msk [vmem:[#allocation2 + $0x39] sm:$0xff] %vm1651, %v2364
      %2438 = vst.msk [vmem:[#allocation2 + $0x49] sm:$0xff] %vm1651, %v2365
      %2439 = vst.msk [vmem:[#allocation2 + $0x51] sm:$0xff] %vm1651, %v2366
      %2440 = vst.msk [vmem:[#allocation2 + $0x61] sm:$0xff] %vm1651, %v2367
      %2441 = vst.msk [vmem:[#allocation2 + $0x69] sm:$0xff] %vm1651, %v2368
      %2442 = vst.msk [vmem:[#allocation2 + $0x79] sm:$0xff] %vm1651, %v2369
      %2443 = vst.msk [vmem:[#allocation2 + $0x81] sm:$0xff] %vm1651, %v2370
      %2444 = vst.msk [vmem:[#allocation2 + $0x91] sm:$0xff] %vm1651, %v2371
      %2445 = vst.msk [vmem:[#allocation2 + $0x99] sm:$0xff] %vm1651, %v2372
      %2446 = vst.msk [vmem:[#allocation2 + $0xa9] sm:$0xff] %vm1651, %v2373
      %2447 = vst.msk [vmem:[#allocation2 + $0xb1] sm:$0xff] %vm1651, %v2374
      %2448 = vst.msk [vmem:[#allocation2 + $0xc1] sm:$0xff] %vm1651, %v2375
      %2449 = vst.msk [vmem:[#allocation2 + $0xc9] sm:$0xff] %vm1651, %v2376
      %2450 = vst.msk [vmem:[#allocation2 + $0xd9] sm:$0xff] %vm1651, %v2377
      %2451 = vst.msk [vmem:[#allocation2 + $0xe1] sm:$0xff] %vm1651, %v2378
      %2452 = vst.msk [vmem:[#allocation2 + $0xf1] sm:$0xff] %vm1651, %v2379
      %2453 = vst.msk [vmem:[#allocation2 + $0xf9] sm:$0xff] %vm1651, %v2380
      %2454 = vst.msk [vmem:[#allocation2 + $0x109] sm:$0xff] %vm1651, %v2381
      %2455 = vst.msk [vmem:[#allocation2 + $0x111] sm:$0xff] %vm1651, %v2382
      %2456 = vst.msk [vmem:[#allocation2 + $0x121] sm:$0xff] %vm1651, %v2383
      %2457 = vst.msk [vmem:[#allocation2 + $0x129] sm:$0xff] %vm1651, %v2384
      %2458 = vst.msk [vmem:[#allocation2 + $0x139] sm:$0xff] %vm1651, %v2385
      %2459 = vst.msk [vmem:[#allocation2 + $0x141] sm:$0xff] %vm1651, %v2386
      %2460 = vst.msk [vmem:[#allocation2 + $0x151] sm:$0xff] %vm1651, %v2387
      %2461 = vst.msk [vmem:[#allocation2 + $0x159] sm:$0xff] %vm1651, %v2388
      %2462 = vst.msk [vmem:[#allocation2 + $0x169] sm:$0xff] %vm1651, %v2389
      %2463 = vst.msk [vmem:[#allocation2 + $0x171] sm:$0xff] %vm1651, %v2390
      %2464 = vst.msk [vmem:[#allocation2 + $0x181] sm:$0xff] %vm1651, %v2391
      %2465 = vst.msk [vmem:[#allocation2 + $0x189] sm:$0xff] %vm1651, %v2392
      %2466 = vst.msk [vmem:[#allocation2 + $0x199] sm:$0xff] %vm1651, %v2393
      %2467 = vst.msk [vmem:[#allocation2 + $0x1a1] sm:$0xff] %vm1651, %v2394
      %p2468 = scmp.eq.s32.totalorder %s24, 0
      // Predicated region
      $region53: #{tpu_custom_call.1} parent=51 // pred_check
        %p2469 = pneg %p2468
      $region54: #{tpu_custom_call.1} parent=51 // pred_check_branch
        %2471 = sbr.rel (%p2469) target = $region56
      $region55: #{tpu_custom_call.1} parent=51 // pred_region
        %2472 = vst.msk [vmem:[#allocation2] sm:$0xff] %vm1651, 0.0
        %2473 = vst.msk [vmem:[#allocation2 + $0x8] sm:$0xff] %vm1651, 0.0
        %vm2474 = vcmask 58368
        %2475 = vst.msk [vmem:[#allocation2 + $0x10] sm:$0x3] %vm2474, 0.0
        %s2476 = scalar_lea.vmem [#allocation2], 408
        %2477 = vst.msk [vmem:[%s2476] sm:$0xff] %vm1651, 0.0
        %2478 = vst.msk [vmem:[%s2476 + $0x8] sm:$0xff] %vm1651, 0.0
        %2479 = vst.msk [vmem:[%s2476 + $0x10] sm:$0x3] %vm2474, 0.0
      $region56: #{tpu_custom_call.1} parent=51 // pred_fallthru
        _
      %v2480 = vld [vmem:[#allocation2] sm:$0xff]
      %v2481 = vld [vmem:[#allocation2 + $0x8] sm:$0xff]
      %v2482 = vld [vmem:[#allocation2 + $0x10] sm:$0x3]
      %v2483 = vld [vmem:[#allocation2 + $0x18] sm:$0xff]
      %v2484 = vld [vmem:[#allocation2 + $0x20] sm:$0xff]
      %v2485 = vld [vmem:[#allocation2 + $0x28] sm:$0x3]
      %v2486 = vld [vmem:[#allocation2 + $0x30] sm:$0xff]
      %v2487 = vld [vmem:[#allocation2 + $0x38] sm:$0xff]
      %v2488 = vld [vmem:[#allocation2 + $0x40] sm:$0x3]
      %v2489 = vld [vmem:[#allocation2 + $0x48] sm:$0xff]
      %v2490 = vld [vmem:[#allocation2 + $0x50] sm:$0xff]
      %v2491 = vld [vmem:[#allocation2 + $0x58] sm:$0x3]
      %v2492 = vld [vmem:[#allocation2 + $0x60] sm:$0xff]
      %v2493 = vld [vmem:[#allocation2 + $0x68] sm:$0xff]
      %v2494 = vld [vmem:[#allocation2 + $0x70] sm:$0x3]
      %v2495 = vld [vmem:[#allocation2 + $0x78] sm:$0xff]
      %v2496 = vld [vmem:[#allocation2 + $0x80] sm:$0xff]
      %v2497 = vld [vmem:[#allocation2 + $0x88] sm:$0x3]
      %v2498 = vld [vmem:[#allocation2 + $0x90] sm:$0xff]
      %v2499 = vld [vmem:[#allocation2 + $0x98] sm:$0xff]
      %v2500 = vld [vmem:[#allocation2 + $0xa0] sm:$0x3]
      %v2501 = vld [vmem:[#allocation2 + $0xa8] sm:$0xff]
      %v2502 = vld [vmem:[#allocation2 + $0xb0] sm:$0xff]
      %v2503 = vld [vmem:[#allocation2 + $0xb8] sm:$0x3]
      %v2504 = vld [vmem:[#allocation2 + $0xc0] sm:$0xff]
      %v2505 = vld [vmem:[#allocation2 + $0xc8] sm:$0xff]
      %v2506 = vld [vmem:[#allocation2 + $0xd0] sm:$0x3]
      %v2507 = vld [vmem:[#allocation2 + $0xd8] sm:$0xff]
      %v2508 = vld [vmem:[#allocation2 + $0xe0] sm:$0xff]
      %v2509 = vld [vmem:[#allocation2 + $0xe8] sm:$0x3]
      %v2510 = vld [vmem:[#allocation2 + $0xf0] sm:$0xff]
      %v2511 = vld [vmem:[#allocation2 + $0xf8] sm:$0xff]
      %v2512 = vld [vmem:[#allocation2 + $0x100] sm:$0x3]
      %v2513 = vld [vmem:[#allocation2 + $0x108] sm:$0xff]
      %v2514 = vld [vmem:[#allocation2 + $0x110] sm:$0xff]
      %v2515 = vld [vmem:[#allocation2 + $0x118] sm:$0x3]
      %v2516 = vld [vmem:[#allocation2 + $0x120] sm:$0xff]
      %v2517 = vld [vmem:[#allocation2 + $0x128] sm:$0xff]
      %v2518 = vld [vmem:[#allocation2 + $0x130] sm:$0x3]
      %v2519 = vld [vmem:[#allocation2 + $0x138] sm:$0xff]
      %v2520 = vld [vmem:[#allocation2 + $0x140] sm:$0xff]
      %v2521 = vld [vmem:[#allocation2 + $0x148] sm:$0x3]
      %v2522 = vld [vmem:[#allocation2 + $0x150] sm:$0xff]
      %v2523 = vld [vmem:[#allocation2 + $0x158] sm:$0xff]
      %v2524 = vld [vmem:[#allocation2 + $0x160] sm:$0x3]
      %v2525 = vld [vmem:[#allocation2 + $0x168] sm:$0xff]
      %v2526 = vld [vmem:[#allocation2 + $0x170] sm:$0xff]
      %v2527 = vld [vmem:[#allocation2 + $0x178] sm:$0x3]
      %v2528 = vld [vmem:[#allocation2 + $0x180] sm:$0xff]
      %v2529 = vld [vmem:[#allocation2 + $0x188] sm:$0xff]
      %v2530 = vld [vmem:[#allocation2 + $0x190] sm:$0x3]
      %v2531 = vld [vmem:[#allocation2 + $0x198] sm:$0xff]
      %v2532 = vld [vmem:[#allocation2 + $0x1a0] sm:$0xff]
      %v2533 = vld [vmem:[#allocation2 + $0x1a8] sm:$0x3]
      %v2582 = vrot.slane %v2480, 1
      %v2583 = vrot.slane %v2481, 1
      %v2584 = vsel %vm542, %v2582, %v2583
      %v2585 = vrot.slane %v2482, 1
      %v2586 = vsel %vm542, %v2583, %v2585
      %v2587 = vrot.slane %v2483, 1
      %v2588 = vrot.slane %v2484, 1
      %v2589 = vsel %vm542, %v2587, %v2588
      %v2590 = vrot.slane %v2485, 1
      %v2591 = vsel %vm542, %v2588, %v2590
      %v2592 = vrot.slane %v2486, 1
      %v2593 = vrot.slane %v2487, 1
      %v2594 = vsel %vm542, %v2592, %v2593
      %v2595 = vrot.slane %v2488, 1
      %v2596 = vsel %vm542, %v2593, %v2595
      %v2597 = vrot.slane %v2489, 1
      %v2598 = vrot.slane %v2490, 1
      %v2599 = vsel %vm542, %v2597, %v2598
      %v2600 = vrot.slane %v2491, 1
      %v2601 = vsel %vm542, %v2598, %v2600
      %v2602 = vrot.slane %v2492, 1
      %v2603 = vrot.slane %v2493, 1
      %v2604 = vsel %vm542, %v2602, %v2603
      %v2605 = vrot.slane %v2494, 1
      %v2606 = vsel %vm542, %v2603, %v2605
      %v2607 = vrot.slane %v2495, 1
      %v2608 = vrot.slane %v2496, 1
      %v2609 = vsel %vm542, %v2607, %v2608
      %v2610 = vrot.slane %v2497, 1
      %v2611 = vsel %vm542, %v2608, %v2610
      %v2612 = vrot.slane %v2498, 1
      %v2613 = vrot.slane %v2499, 1
      %v2614 = vsel %vm542, %v2612, %v2613
      %v2615 = vrot.slane %v2500, 1
      %v2616 = vsel %vm542, %v2613, %v2615
      %v2617 = vrot.slane %v2501, 1
      %v2618 = vrot.slane %v2502, 1
      %v2619 = vsel %vm542, %v2617, %v2618
      %v2620 = vrot.slane %v2503, 1
      %v2621 = vsel %vm542, %v2618, %v2620
      %v2622 = vrot.slane %v2504, 1
      %v2623 = vrot.slane %v2505, 1
      %v2624 = vsel %vm542, %v2622, %v2623
      %v2625 = vrot.slane %v2506, 1
      %v2626 = vsel %vm542, %v2623, %v2625
      %v2627 = vrot.slane %v2507, 1
      %v2628 = vrot.slane %v2508, 1
      %v2629 = vsel %vm542, %v2627, %v2628
      %v2630 = vrot.slane %v2509, 1
      %v2631 = vsel %vm542, %v2628, %v2630
      %v2632 = vrot.slane %v2510, 1
      %v2633 = vrot.slane %v2511, 1
      %v2634 = vsel %vm542, %v2632, %v2633
      %v2635 = vrot.slane %v2512, 1
      %v2636 = vsel %vm542, %v2633, %v2635
      %v2637 = vrot.slane %v2513, 1
      %v2638 = vrot.slane %v2514, 1
      %v2639 = vsel %vm542, %v2637, %v2638
      %v2640 = vrot.slane %v2515, 1
      %v2641 = vsel %vm542, %v2638, %v2640
      %v2642 = vrot.slane %v2516, 1
      %v2643 = vrot.slane %v2517, 1
      %v2644 = vsel %vm542, %v2642, %v2643
      %v2645 = vrot.slane %v2518, 1
      %v2646 = vsel %vm542, %v2643, %v2645
      %v2647 = vrot.slane %v2519, 1
      %v2648 = vrot.slane %v2520, 1
      %v2649 = vsel %vm542, %v2647, %v2648
      %v2650 = vrot.slane %v2521, 1
      %v2651 = vsel %vm542, %v2648, %v2650
      %v2652 = vrot.slane %v2522, 1
      %v2653 = vrot.slane %v2523, 1
      %v2654 = vsel %vm542, %v2652, %v2653
      %v2655 = vrot.slane %v2524, 1
      %v2656 = vsel %vm542, %v2653, %v2655
      %v2657 = vrot.slane %v2525, 1
      %v2658 = vrot.slane %v2526, 1
      %v2659 = vsel %vm542, %v2657, %v2658
      %v2660 = vrot.slane %v2527, 1
      %v2661 = vsel %vm542, %v2658, %v2660
      %2662 = vrot.lane.b32.xlu0 %v2584, 8
      %v2663 = vpop.permute.xlu0 %2662
      %2664 = vrot.lane.b32.xlu0 %v2586, 8
      %v2665 = vpop.permute.xlu0 %2664
      %2666 = vrot.lane.b32.xlu0 %v2589, 8
      %v2667 = vpop.permute.xlu0 %2666
      %2668 = vrot.lane.b32.xlu0 %v2591, 8
      %v2669 = vpop.permute.xlu0 %2668
      %2670 = vrot.lane.b32.xlu0 %v2594, 8
      %v2671 = vpop.permute.xlu0 %2670
      %2672 = vrot.lane.b32.xlu0 %v2596, 8
      %v2673 = vpop.permute.xlu0 %2672
      %2674 = vrot.lane.b32.xlu0 %v2599, 8
      %v2675 = vpop.permute.xlu0 %2674
      %2676 = vrot.lane.b32.xlu0 %v2601, 8
      %v2677 = vpop.permute.xlu0 %2676
      %2678 = vrot.lane.b32.xlu0 %v2604, 8
      %v2679 = vpop.permute.xlu0 %2678
      %2680 = vrot.lane.b32.xlu0 %v2606, 8
      %v2681 = vpop.permute.xlu0 %2680
      %2682 = vrot.lane.b32.xlu0 %v2609, 8
      %v2683 = vpop.permute.xlu0 %2682
      %2684 = vrot.lane.b32.xlu0 %v2611, 8
      %v2685 = vpop.permute.xlu0 %2684
      %2686 = vrot.lane.b32.xlu0 %v2614, 8
      %v2687 = vpop.permute.xlu0 %2686
      %2688 = vrot.lane.b32.xlu0 %v2616, 8
      %v2689 = vpop.permute.xlu0 %2688
      %2690 = vrot.lane.b32.xlu0 %v2619, 8
      %v2691 = vpop.permute.xlu0 %2690
      %2692 = vrot.lane.b32.xlu0 %v2621, 8
      %v2693 = vpop.permute.xlu0 %2692
      %2694 = vrot.lane.b32.xlu0 %v2624, 8
      %v2695 = vpop.permute.xlu0 %2694
      %2696 = vrot.lane.b32.xlu0 %v2626, 8
      %v2697 = vpop.permute.xlu0 %2696
      %2698 = vrot.lane.b32.xlu0 %v2629, 8
      %v2699 = vpop.permute.xlu0 %2698
      %2700 = vrot.lane.b32.xlu0 %v2631, 8
      %v2701 = vpop.permute.xlu0 %2700
      %2702 = vrot.lane.b32.xlu0 %v2634, 8
      %v2703 = vpop.permute.xlu0 %2702
      %2704 = vrot.lane.b32.xlu0 %v2636, 8
      %v2705 = vpop.permute.xlu0 %2704
      %2706 = vrot.lane.b32.xlu0 %v2639, 8
      %v2707 = vpop.permute.xlu0 %2706
      %2708 = vrot.lane.b32.xlu0 %v2641, 8
      %v2709 = vpop.permute.xlu0 %2708
      %2710 = vrot.lane.b32.xlu0 %v2644, 8
      %v2711 = vpop.permute.xlu0 %2710
      %2712 = vrot.lane.b32.xlu0 %v2646, 8
      %v2713 = vpop.permute.xlu0 %2712
      %2714 = vrot.lane.b32.xlu0 %v2649, 8
      %v2715 = vpop.permute.xlu0 %2714
      %2716 = vrot.lane.b32.xlu0 %v2651, 8
      %v2717 = vpop.permute.xlu0 %2716
      %2718 = vrot.lane.b32.xlu0 %v2654, 8
      %v2719 = vpop.permute.xlu0 %2718
      %2720 = vrot.lane.b32.xlu0 %v2656, 8
      %v2721 = vpop.permute.xlu0 %2720
      %2722 = vrot.lane.b32.xlu0 %v2659, 8
      %v2723 = vpop.permute.xlu0 %2722
      %2724 = vrot.lane.b32.xlu0 %v2661, 8
      %v2725 = vpop.permute.xlu0 %2724
      %v2758 = vrot.slane %v2480, 2
      %v2759 = vrot.slane %v2481, 2
      %v2760 = vsel %vm741, %v2758, %v2759
      %v2761 = vrot.slane %v2482, 2
      %v2762 = vsel %vm741, %v2759, %v2761
      %v2763 = vrot.slane %v2483, 2
      %v2764 = vrot.slane %v2484, 2
      %v2765 = vsel %vm741, %v2763, %v2764
      %v2766 = vrot.slane %v2485, 2
      %v2767 = vsel %vm741, %v2764, %v2766
      %v2768 = vrot.slane %v2486, 2
      %v2769 = vrot.slane %v2487, 2
      %v2770 = vsel %vm741, %v2768, %v2769
      %v2771 = vrot.slane %v2488, 2
      %v2772 = vsel %vm741, %v2769, %v2771
      %v2773 = vrot.slane %v2489, 2
      %v2774 = vrot.slane %v2490, 2
      %v2775 = vsel %vm741, %v2773, %v2774
      %v2776 = vrot.slane %v2491, 2
      %v2777 = vsel %vm741, %v2774, %v2776
      %v2778 = vrot.slane %v2492, 2
      %v2779 = vrot.slane %v2493, 2
      %v2780 = vsel %vm741, %v2778, %v2779
      %v2781 = vrot.slane %v2494, 2
      %v2782 = vsel %vm741, %v2779, %v2781
      %v2783 = vrot.slane %v2495, 2
      %v2784 = vrot.slane %v2496, 2
      %v2785 = vsel %vm741, %v2783, %v2784
      %v2786 = vrot.slane %v2497, 2
      %v2787 = vsel %vm741, %v2784, %v2786
      %v2788 = vrot.slane %v2498, 2
      %v2789 = vrot.slane %v2499, 2
      %v2790 = vsel %vm741, %v2788, %v2789
      %v2791 = vrot.slane %v2500, 2
      %v2792 = vsel %vm741, %v2789, %v2791
      %v2793 = vrot.slane %v2501, 2
      %v2794 = vrot.slane %v2502, 2
      %v2795 = vsel %vm741, %v2793, %v2794
      %v2796 = vrot.slane %v2503, 2
      %v2797 = vsel %vm741, %v2794, %v2796
      %v2798 = vrot.slane %v2504, 2
      %v2799 = vrot.slane %v2505, 2
      %v2800 = vsel %vm741, %v2798, %v2799
      %v2801 = vrot.slane %v2506, 2
      %v2802 = vsel %vm741, %v2799, %v2801
      %v2803 = vrot.slane %v2507, 2
      %v2804 = vrot.slane %v2508, 2
      %v2805 = vsel %vm741, %v2803, %v2804
      %v2806 = vrot.slane %v2509, 2
      %v2807 = vsel %vm741, %v2804, %v2806
      %v2808 = vrot.slane %v2510, 2
      %v2809 = vrot.slane %v2511, 2
      %v2810 = vsel %vm741, %v2808, %v2809
      %v2811 = vrot.slane %v2512, 2
      %v2812 = vsel %vm741, %v2809, %v2811
      %v2813 = vrot.slane %v2513, 2
      %v2814 = vrot.slane %v2514, 2
      %v2815 = vsel %vm741, %v2813, %v2814
      %v2816 = vrot.slane %v2515, 2
      %v2817 = vsel %vm741, %v2814, %v2816
      %v2818 = vrot.slane %v2516, 2
      %v2819 = vrot.slane %v2517, 2
      %v2820 = vsel %vm741, %v2818, %v2819
      %v2821 = vrot.slane %v2518, 2
      %v2822 = vsel %vm741, %v2819, %v2821
      %v2823 = vrot.slane %v2519, 2
      %v2824 = vrot.slane %v2520, 2
      %v2825 = vsel %vm741, %v2823, %v2824
      %v2826 = vrot.slane %v2521, 2
      %v2827 = vsel %vm741, %v2824, %v2826
      %v2828 = vrot.slane %v2522, 2
      %v2829 = vrot.slane %v2523, 2
      %v2830 = vsel %vm741, %v2828, %v2829
      %v2831 = vrot.slane %v2524, 2
      %v2832 = vsel %vm741, %v2829, %v2831
      %v2833 = vrot.slane %v2525, 2
      %v2834 = vrot.slane %v2526, 2
      %v2835 = vsel %vm741, %v2833, %v2834
      %v2836 = vrot.slane %v2527, 2
      %v2837 = vsel %vm741, %v2834, %v2836
      %2838 = vrot.lane.b32.xlu0 %v2760, 16
      %v2839 = vpop.permute.xlu0 %2838
      %2840 = vrot.lane.b32.xlu0 %v2762, 16
      %v2841 = vpop.permute.xlu0 %2840
      %2842 = vrot.lane.b32.xlu0 %v2765, 16
      %v2843 = vpop.permute.xlu0 %2842
      %2844 = vrot.lane.b32.xlu0 %v2767, 16
      %v2845 = vpop.permute.xlu0 %2844
      %2846 = vrot.lane.b32.xlu0 %v2770, 16
      %v2847 = vpop.permute.xlu0 %2846
      %2848 = vrot.lane.b32.xlu0 %v2772, 16
      %v2849 = vpop.permute.xlu0 %2848
      %2850 = vrot.lane.b32.xlu0 %v2775, 16
      %v2851 = vpop.permute.xlu0 %2850
      %2852 = vrot.lane.b32.xlu0 %v2777, 16
      %v2853 = vpop.permute.xlu0 %2852
      %2854 = vrot.lane.b32.xlu0 %v2780, 16
      %v2855 = vpop.permute.xlu0 %2854
      %2856 = vrot.lane.b32.xlu0 %v2782, 16
      %v2857 = vpop.permute.xlu0 %2856
      %2858 = vrot.lane.b32.xlu0 %v2785, 16
      %v2859 = vpop.permute.xlu0 %2858
      %2860 = vrot.lane.b32.xlu0 %v2787, 16
      %v2861 = vpop.permute.xlu0 %2860
      %2862 = vrot.lane.b32.xlu0 %v2790, 16
      %v2863 = vpop.permute.xlu0 %2862
      %2864 = vrot.lane.b32.xlu0 %v2792, 16
      %v2865 = vpop.permute.xlu0 %2864
      %2866 = vrot.lane.b32.xlu0 %v2795, 16
      %v2867 = vpop.permute.xlu0 %2866
      %2868 = vrot.lane.b32.xlu0 %v2797, 16
      %v2869 = vpop.permute.xlu0 %2868
      %2870 = vrot.lane.b32.xlu0 %v2800, 16
      %v2871 = vpop.permute.xlu0 %2870
      %2872 = vrot.lane.b32.xlu0 %v2802, 16
      %v2873 = vpop.permute.xlu0 %2872
      %2874 = vrot.lane.b32.xlu0 %v2805, 16
      %v2875 = vpop.permute.xlu0 %2874
      %2876 = vrot.lane.b32.xlu0 %v2807, 16
      %v2877 = vpop.permute.xlu0 %2876
      %2878 = vrot.lane.b32.xlu0 %v2810, 16
      %v2879 = vpop.permute.xlu0 %2878
      %2880 = vrot.lane.b32.xlu0 %v2812, 16
      %v2881 = vpop.permute.xlu0 %2880
      %2882 = vrot.lane.b32.xlu0 %v2815, 16
      %v2883 = vpop.permute.xlu0 %2882
      %2884 = vrot.lane.b32.xlu0 %v2817, 16
      %v2885 = vpop.permute.xlu0 %2884
      %2886 = vrot.lane.b32.xlu0 %v2820, 16
      %v2887 = vpop.permute.xlu0 %2886
      %2888 = vrot.lane.b32.xlu0 %v2822, 16
      %v2889 = vpop.permute.xlu0 %2888
      %2890 = vrot.lane.b32.xlu0 %v2825, 16
      %v2891 = vpop.permute.xlu0 %2890
      %2892 = vrot.lane.b32.xlu0 %v2827, 16
      %v2893 = vpop.permute.xlu0 %2892
      %2894 = vrot.lane.b32.xlu0 %v2830, 16
      %v2895 = vpop.permute.xlu0 %2894
      %2896 = vrot.lane.b32.xlu0 %v2832, 16
      %v2897 = vpop.permute.xlu0 %2896
      %2898 = vrot.lane.b32.xlu0 %v2835, 16
      %v2899 = vpop.permute.xlu0 %2898
      %2900 = vrot.lane.b32.xlu0 %v2837, 16
      %v2901 = vpop.permute.xlu0 %2900
      %2936 = vrot.lane.b32.xlu0 %v2483, 24
      %v2937 = vpop.permute.xlu0 %2936
      %2938 = vrot.lane.b32.xlu0 %v2484, 24
      %v2939 = vpop.permute.xlu0 %2938
      %2940 = vrot.lane.b32.xlu0 %v2486, 24
      %v2941 = vpop.permute.xlu0 %2940
      %2942 = vrot.lane.b32.xlu0 %v2487, 24
      %v2943 = vpop.permute.xlu0 %2942
      %2944 = vrot.lane.b32.xlu0 %v2489, 24
      %v2945 = vpop.permute.xlu0 %2944
      %2946 = vrot.lane.b32.xlu0 %v2490, 24
      %v2947 = vpop.permute.xlu0 %2946
      %2948 = vrot.lane.b32.xlu0 %v2492, 24
      %v2949 = vpop.permute.xlu0 %2948
      %2950 = vrot.lane.b32.xlu0 %v2493, 24
      %v2951 = vpop.permute.xlu0 %2950
      %2952 = vrot.lane.b32.xlu0 %v2495, 24
      %v2953 = vpop.permute.xlu0 %2952
      %2954 = vrot.lane.b32.xlu0 %v2496, 24
      %v2955 = vpop.permute.xlu0 %2954
      %2956 = vrot.lane.b32.xlu0 %v2498, 24
      %v2957 = vpop.permute.xlu0 %2956
      %2958 = vrot.lane.b32.xlu0 %v2499, 24
      %v2959 = vpop.permute.xlu0 %2958
      %2960 = vrot.lane.b32.xlu0 %v2501, 24
      %v2961 = vpop.permute.xlu0 %2960
      %2962 = vrot.lane.b32.xlu0 %v2502, 24
      %v2963 = vpop.permute.xlu0 %2962
      %2964 = vrot.lane.b32.xlu0 %v2504, 24
      %v2965 = vpop.permute.xlu0 %2964
      %2966 = vrot.lane.b32.xlu0 %v2505, 24
      %v2967 = vpop.permute.xlu0 %2966
      %2968 = vrot.lane.b32.xlu0 %v2507, 24
      %v2969 = vpop.permute.xlu0 %2968
      %2970 = vrot.lane.b32.xlu0 %v2508, 24
      %v2971 = vpop.permute.xlu0 %2970
      %2972 = vrot.lane.b32.xlu0 %v2510, 24
      %v2973 = vpop.permute.xlu0 %2972
      %2974 = vrot.lane.b32.xlu0 %v2511, 24
      %v2975 = vpop.permute.xlu0 %2974
      %2976 = vrot.lane.b32.xlu0 %v2513, 24
      %v2977 = vpop.permute.xlu0 %2976
      %2978 = vrot.lane.b32.xlu0 %v2514, 24
      %v2979 = vpop.permute.xlu0 %2978
      %2980 = vrot.lane.b32.xlu0 %v2516, 24
      %v2981 = vpop.permute.xlu0 %2980
      %2982 = vrot.lane.b32.xlu0 %v2517, 24
      %v2983 = vpop.permute.xlu0 %2982
      %2984 = vrot.lane.b32.xlu0 %v2519, 24
      %v2985 = vpop.permute.xlu0 %2984
      %2986 = vrot.lane.b32.xlu0 %v2520, 24
      %v2987 = vpop.permute.xlu0 %2986
      %2988 = vrot.lane.b32.xlu0 %v2522, 24
      %v2989 = vpop.permute.xlu0 %2988
      %2990 = vrot.lane.b32.xlu0 %v2523, 24
      %v2991 = vpop.permute.xlu0 %2990
      %2992 = vrot.lane.b32.xlu0 %v2525, 24
      %v2993 = vpop.permute.xlu0 %2992
      %2994 = vrot.lane.b32.xlu0 %v2526, 24
      %v2995 = vpop.permute.xlu0 %2994
      %2996 = vrot.lane.b32.xlu0 %v2528, 24
      %v2997 = vpop.permute.xlu0 %2996
      %2998 = vrot.lane.b32.xlu0 %v2529, 24
      %v2999 = vpop.permute.xlu0 %2998
      %v3033 = vrot.slane %v2528, 1
      %v3034 = vrot.slane %v2529, 1
      %v3035 = vsel %vm542, %v3033, %v3034
      %v3036 = vrot.slane %v2530, 1
      %v3037 = vsel %vm542, %v3034, %v3036
      %3038 = vrot.lane.b32.xlu0 %v2589, 32
      %v3039 = vpop.permute.xlu0 %3038
      %3040 = vrot.lane.b32.xlu0 %v2591, 32
      %v3041 = vpop.permute.xlu0 %3040
      %3042 = vrot.lane.b32.xlu0 %v2594, 32
      %v3043 = vpop.permute.xlu0 %3042
      %3044 = vrot.lane.b32.xlu0 %v2596, 32
      %v3045 = vpop.permute.xlu0 %3044
      %3046 = vrot.lane.b32.xlu0 %v2599, 32
      %v3047 = vpop.permute.xlu0 %3046
      %3048 = vrot.lane.b32.xlu0 %v2601, 32
      %v3049 = vpop.permute.xlu0 %3048
      %3050 = vrot.lane.b32.xlu0 %v2604, 32
      %v3051 = vpop.permute.xlu0 %3050
      %3052 = vrot.lane.b32.xlu0 %v2606, 32
      %v3053 = vpop.permute.xlu0 %3052
      %3054 = vrot.lane.b32.xlu0 %v2609, 32
      %v3055 = vpop.permute.xlu0 %3054
      %3056 = vrot.lane.b32.xlu0 %v2611, 32
      %v3057 = vpop.permute.xlu0 %3056
      %3058 = vrot.lane.b32.xlu0 %v2614, 32
      %v3059 = vpop.permute.xlu0 %3058
      %3060 = vrot.lane.b32.xlu0 %v2616, 32
      %v3061 = vpop.permute.xlu0 %3060
      %3062 = vrot.lane.b32.xlu0 %v2619, 32
      %v3063 = vpop.permute.xlu0 %3062
      %3064 = vrot.lane.b32.xlu0 %v2621, 32
      %v3065 = vpop.permute.xlu0 %3064
      %3066 = vrot.lane.b32.xlu0 %v2624, 32
      %v3067 = vpop.permute.xlu0 %3066
      %3068 = vrot.lane.b32.xlu0 %v2626, 32
      %v3069 = vpop.permute.xlu0 %3068
      %3070 = vrot.lane.b32.xlu0 %v2629, 32
      %v3071 = vpop.permute.xlu0 %3070
      %3072 = vrot.lane.b32.xlu0 %v2631, 32
      %v3073 = vpop.permute.xlu0 %3072
      %3074 = vrot.lane.b32.xlu0 %v2634, 32
      %v3075 = vpop.permute.xlu0 %3074
      %3076 = vrot.lane.b32.xlu0 %v2636, 32
      %v3077 = vpop.permute.xlu0 %3076
      %3078 = vrot.lane.b32.xlu0 %v2639, 32
      %v3079 = vpop.permute.xlu0 %3078
      %3080 = vrot.lane.b32.xlu0 %v2641, 32
      %v3081 = vpop.permute.xlu0 %3080
      %3082 = vrot.lane.b32.xlu0 %v2644, 32
      %v3083 = vpop.permute.xlu0 %3082
      %3084 = vrot.lane.b32.xlu0 %v2646, 32
      %v3085 = vpop.permute.xlu0 %3084
      %3086 = vrot.lane.b32.xlu0 %v2649, 32
      %v3087 = vpop.permute.xlu0 %3086
      %3088 = vrot.lane.b32.xlu0 %v2651, 32
      %v3089 = vpop.permute.xlu0 %3088
      %3090 = vrot.lane.b32.xlu0 %v2654, 32
      %v3091 = vpop.permute.xlu0 %3090
      %3092 = vrot.lane.b32.xlu0 %v2656, 32
      %v3093 = vpop.permute.xlu0 %3092
      %3094 = vrot.lane.b32.xlu0 %v2659, 32
      %v3095 = vpop.permute.xlu0 %3094
      %3096 = vrot.lane.b32.xlu0 %v2661, 32
      %v3097 = vpop.permute.xlu0 %3096
      %3098 = vrot.lane.b32.xlu0 %v3035, 32
      %v3099 = vpop.permute.xlu0 %3098
      %3100 = vrot.lane.b32.xlu0 %v3037, 32
      %v3101 = vpop.permute.xlu0 %3100
      %v3134 = vrot.slane %v2528, 2
      %v3135 = vrot.slane %v2529, 2
      %v3136 = vsel %vm741, %v3134, %v3135
      %v3137 = vrot.slane %v2530, 2
      %v3138 = vsel %vm741, %v3135, %v3137
      %3139 = vrot.lane.b32.xlu0 %v2765, 40
      %v3140 = vpop.permute.xlu0 %3139
      %3141 = vrot.lane.b32.xlu0 %v2767, 40
      %v3142 = vpop.permute.xlu0 %3141
      %3143 = vrot.lane.b32.xlu0 %v2770, 40
      %v3144 = vpop.permute.xlu0 %3143
      %3145 = vrot.lane.b32.xlu0 %v2772, 40
      %v3146 = vpop.permute.xlu0 %3145
      %3147 = vrot.lane.b32.xlu0 %v2775, 40
      %v3148 = vpop.permute.xlu0 %3147
      %3149 = vrot.lane.b32.xlu0 %v2777, 40
      %v3150 = vpop.permute.xlu0 %3149
      %3151 = vrot.lane.b32.xlu0 %v2780, 40
      %v3152 = vpop.permute.xlu0 %3151
      %3153 = vrot.lane.b32.xlu0 %v2782, 40
      %v3154 = vpop.permute.xlu0 %3153
      %3155 = vrot.lane.b32.xlu0 %v2785, 40
      %v3156 = vpop.permute.xlu0 %3155
      %3157 = vrot.lane.b32.xlu0 %v2787, 40
      %v3158 = vpop.permute.xlu0 %3157
      %3159 = vrot.lane.b32.xlu0 %v2790, 40
      %v3160 = vpop.permute.xlu0 %3159
      %3161 = vrot.lane.b32.xlu0 %v2792, 40
      %v3162 = vpop.permute.xlu0 %3161
      %3163 = vrot.lane.b32.xlu0 %v2795, 40
      %v3164 = vpop.permute.xlu0 %3163
      %3165 = vrot.lane.b32.xlu0 %v2797, 40
      %v3166 = vpop.permute.xlu0 %3165
      %3167 = vrot.lane.b32.xlu0 %v2800, 40
      %v3168 = vpop.permute.xlu0 %3167
      %3169 = vrot.lane.b32.xlu0 %v2802, 40
      %v3170 = vpop.permute.xlu0 %3169
      %3171 = vrot.lane.b32.xlu0 %v2805, 40
      %v3172 = vpop.permute.xlu0 %3171
      %3173 = vrot.lane.b32.xlu0 %v2807, 40
      %v3174 = vpop.permute.xlu0 %3173
      %3175 = vrot.lane.b32.xlu0 %v2810, 40
      %v3176 = vpop.permute.xlu0 %3175
      %3177 = vrot.lane.b32.xlu0 %v2812, 40
      %v3178 = vpop.permute.xlu0 %3177
      %3179 = vrot.lane.b32.xlu0 %v2815, 40
      %v3180 = vpop.permute.xlu0 %3179
      %3181 = vrot.lane.b32.xlu0 %v2817, 40
      %v3182 = vpop.permute.xlu0 %3181
      %3183 = vrot.lane.b32.xlu0 %v2820, 40
      %v3184 = vpop.permute.xlu0 %3183
      %3185 = vrot.lane.b32.xlu0 %v2822, 40
      %v3186 = vpop.permute.xlu0 %3185
      %3187 = vrot.lane.b32.xlu0 %v2825, 40
      %v3188 = vpop.permute.xlu0 %3187
      %3189 = vrot.lane.b32.xlu0 %v2827, 40
      %v3190 = vpop.permute.xlu0 %3189
      %3191 = vrot.lane.b32.xlu0 %v2830, 40
      %v3192 = vpop.permute.xlu0 %3191
      %3193 = vrot.lane.b32.xlu0 %v2832, 40
      %v3194 = vpop.permute.xlu0 %3193
      %3195 = vrot.lane.b32.xlu0 %v2835, 40
      %v3196 = vpop.permute.xlu0 %3195
      %3197 = vrot.lane.b32.xlu0 %v2837, 40
      %v3198 = vpop.permute.xlu0 %3197
      %3199 = vrot.lane.b32.xlu0 %v3136, 40
      %v3200 = vpop.permute.xlu0 %3199
      %3201 = vrot.lane.b32.xlu0 %v3138, 40
      %v3202 = vpop.permute.xlu0 %3201
      %3237 = vrot.lane.b32.xlu0 %v2486, 48
      %v3238 = vpop.permute.xlu0 %3237
      %3239 = vrot.lane.b32.xlu0 %v2487, 48
      %v3240 = vpop.permute.xlu0 %3239
      %3241 = vrot.lane.b32.xlu0 %v2489, 48
      %v3242 = vpop.permute.xlu0 %3241
      %3243 = vrot.lane.b32.xlu0 %v2490, 48
      %v3244 = vpop.permute.xlu0 %3243
      %3245 = vrot.lane.b32.xlu0 %v2492, 48
      %v3246 = vpop.permute.xlu0 %3245
      %3247 = vrot.lane.b32.xlu0 %v2493, 48
      %v3248 = vpop.permute.xlu0 %3247
      %3249 = vrot.lane.b32.xlu0 %v2495, 48
      %v3250 = vpop.permute.xlu0 %3249
      %3251 = vrot.lane.b32.xlu0 %v2496, 48
      %v3252 = vpop.permute.xlu0 %3251
      %3253 = vrot.lane.b32.xlu0 %v2498, 48
      %v3254 = vpop.permute.xlu0 %3253
      %3255 = vrot.lane.b32.xlu0 %v2499, 48
      %v3256 = vpop.permute.xlu0 %3255
      %3257 = vrot.lane.b32.xlu0 %v2501, 48
      %v3258 = vpop.permute.xlu0 %3257
      %3259 = vrot.lane.b32.xlu0 %v2502, 48
      %v3260 = vpop.permute.xlu0 %3259
      %3261 = vrot.lane.b32.xlu0 %v2504, 48
      %v3262 = vpop.permute.xlu0 %3261
      %3263 = vrot.lane.b32.xlu0 %v2505, 48
      %v3264 = vpop.permute.xlu0 %3263
      %3265 = vrot.lane.b32.xlu0 %v2507, 48
      %v3266 = vpop.permute.xlu0 %3265
      %3267 = vrot.lane.b32.xlu0 %v2508, 48
      %v3268 = vpop.permute.xlu0 %3267
      %3269 = vrot.lane.b32.xlu0 %v2510, 48
      %v3270 = vpop.permute.xlu0 %3269
      %3271 = vrot.lane.b32.xlu0 %v2511, 48
      %v3272 = vpop.permute.xlu0 %3271
      %3273 = vrot.lane.b32.xlu0 %v2513, 48
      %v3274 = vpop.permute.xlu0 %3273
      %3275 = vrot.lane.b32.xlu0 %v2514, 48
      %v3276 = vpop.permute.xlu0 %3275
      %3277 = vrot.lane.b32.xlu0 %v2516, 48
      %v3278 = vpop.permute.xlu0 %3277
      %3279 = vrot.lane.b32.xlu0 %v2517, 48
      %v3280 = vpop.permute.xlu0 %3279
      %3281 = vrot.lane.b32.xlu0 %v2519, 48
      %v3282 = vpop.permute.xlu0 %3281
      %3283 = vrot.lane.b32.xlu0 %v2520, 48
      %v3284 = vpop.permute.xlu0 %3283
      %3285 = vrot.lane.b32.xlu0 %v2522, 48
      %v3286 = vpop.permute.xlu0 %3285
      %3287 = vrot.lane.b32.xlu0 %v2523, 48
      %v3288 = vpop.permute.xlu0 %3287
      %3289 = vrot.lane.b32.xlu0 %v2525, 48
      %v3290 = vpop.permute.xlu0 %3289
      %3291 = vrot.lane.b32.xlu0 %v2526, 48
      %v3292 = vpop.permute.xlu0 %3291
      %3293 = vrot.lane.b32.xlu0 %v2528, 48
      %v3294 = vpop.permute.xlu0 %3293
      %3295 = vrot.lane.b32.xlu0 %v2529, 48
      %v3296 = vpop.permute.xlu0 %3295
      %3297 = vrot.lane.b32.xlu0 %v2531, 48
      %v3298 = vpop.permute.xlu0 %3297
      %3299 = vrot.lane.b32.xlu0 %v2532, 48
      %v3300 = vpop.permute.xlu0 %3299
      %v3334 = vrot.slane %v2531, 1
      %v3335 = vrot.slane %v2532, 1
      %v3336 = vsel %vm542, %v3334, %v3335
      %v3337 = vrot.slane %v2533, 1
      %v3338 = vsel %vm542, %v3335, %v3337
      %3339 = vrot.lane.b32.xlu0 %v2594, 56
      %v3340 = vpop.permute.xlu0 %3339
      %3341 = vrot.lane.b32.xlu0 %v2596, 56
      %v3342 = vpop.permute.xlu0 %3341
      %3343 = vrot.lane.b32.xlu0 %v2599, 56
      %v3344 = vpop.permute.xlu0 %3343
      %3345 = vrot.lane.b32.xlu0 %v2601, 56
      %v3346 = vpop.permute.xlu0 %3345
      %3347 = vrot.lane.b32.xlu0 %v2604, 56
      %v3348 = vpop.permute.xlu0 %3347
      %3349 = vrot.lane.b32.xlu0 %v2606, 56
      %v3350 = vpop.permute.xlu0 %3349
      %3351 = vrot.lane.b32.xlu0 %v2609, 56
      %v3352 = vpop.permute.xlu0 %3351
      %3353 = vrot.lane.b32.xlu0 %v2611, 56
      %v3354 = vpop.permute.xlu0 %3353
      %3355 = vrot.lane.b32.xlu0 %v2614, 56
      %v3356 = vpop.permute.xlu0 %3355
      %3357 = vrot.lane.b32.xlu0 %v2616, 56
      %v3358 = vpop.permute.xlu0 %3357
      %3359 = vrot.lane.b32.xlu0 %v2619, 56
      %v3360 = vpop.permute.xlu0 %3359
      %3361 = vrot.lane.b32.xlu0 %v2621, 56
      %v3362 = vpop.permute.xlu0 %3361
      %3363 = vrot.lane.b32.xlu0 %v2624, 56
      %v3364 = vpop.permute.xlu0 %3363
      %3365 = vrot.lane.b32.xlu0 %v2626, 56
      %v3366 = vpop.permute.xlu0 %3365
      %3367 = vrot.lane.b32.xlu0 %v2629, 56
      %v3368 = vpop.permute.xlu0 %3367
      %3369 = vrot.lane.b32.xlu0 %v2631, 56
      %v3370 = vpop.permute.xlu0 %3369
      %3371 = vrot.lane.b32.xlu0 %v2634, 56
      %v3372 = vpop.permute.xlu0 %3371
      %3373 = vrot.lane.b32.xlu0 %v2636, 56
      %v3374 = vpop.permute.xlu0 %3373
      %3375 = vrot.lane.b32.xlu0 %v2639, 56
      %v3376 = vpop.permute.xlu0 %3375
      %3377 = vrot.lane.b32.xlu0 %v2641, 56
      %v3378 = vpop.permute.xlu0 %3377
      %3379 = vrot.lane.b32.xlu0 %v2644, 56
      %v3380 = vpop.permute.xlu0 %3379
      %3381 = vrot.lane.b32.xlu0 %v2646, 56
      %v3382 = vpop.permute.xlu0 %3381
      %3383 = vrot.lane.b32.xlu0 %v2649, 56
      %v3384 = vpop.permute.xlu0 %3383
      %3385 = vrot.lane.b32.xlu0 %v2651, 56
      %v3386 = vpop.permute.xlu0 %3385
      %3387 = vrot.lane.b32.xlu0 %v2654, 56
      %v3388 = vpop.permute.xlu0 %3387
      %3389 = vrot.lane.b32.xlu0 %v2656, 56
      %v3390 = vpop.permute.xlu0 %3389
      %3391 = vrot.lane.b32.xlu0 %v2659, 56
      %v3392 = vpop.permute.xlu0 %3391
      %3393 = vrot.lane.b32.xlu0 %v2661, 56
      %v3394 = vpop.permute.xlu0 %3393
      %3395 = vrot.lane.b32.xlu0 %v3035, 56
      %v3396 = vpop.permute.xlu0 %3395
      %3397 = vrot.lane.b32.xlu0 %v3037, 56
      %v3398 = vpop.permute.xlu0 %3397
      %3399 = vrot.lane.b32.xlu0 %v3336, 56
      %v3400 = vpop.permute.xlu0 %3399
      %3401 = vrot.lane.b32.xlu0 %v3338, 56
      %v3402 = vpop.permute.xlu0 %3401
      %v3435 = vrot.slane %v2531, 2
      %v3436 = vrot.slane %v2532, 2
      %v3437 = vsel %vm741, %v3435, %v3436
      %v3438 = vrot.slane %v2533, 2
      %v3439 = vsel %vm741, %v3436, %v3438
      %3440 = vrot.lane.b32.xlu0 %v2770, 64
      %v3441 = vpop.permute.xlu0 %3440
      %3442 = vrot.lane.b32.xlu0 %v2772, 64
      %v3443 = vpop.permute.xlu0 %3442
      %3444 = vrot.lane.b32.xlu0 %v2775, 64
      %v3445 = vpop.permute.xlu0 %3444
      %3446 = vrot.lane.b32.xlu0 %v2777, 64
      %v3447 = vpop.permute.xlu0 %3446
      %3448 = vrot.lane.b32.xlu0 %v2780, 64
      %v3449 = vpop.permute.xlu0 %3448
      %3450 = vrot.lane.b32.xlu0 %v2782, 64
      %v3451 = vpop.permute.xlu0 %3450
      %3452 = vrot.lane.b32.xlu0 %v2785, 64
      %v3453 = vpop.permute.xlu0 %3452
      %3454 = vrot.lane.b32.xlu0 %v2787, 64
      %v3455 = vpop.permute.xlu0 %3454
      %3456 = vrot.lane.b32.xlu0 %v2790, 64
      %v3457 = vpop.permute.xlu0 %3456
      %3458 = vrot.lane.b32.xlu0 %v2792, 64
      %v3459 = vpop.permute.xlu0 %3458
      %3460 = vrot.lane.b32.xlu0 %v2795, 64
      %v3461 = vpop.permute.xlu0 %3460
      %3462 = vrot.lane.b32.xlu0 %v2797, 64
      %v3463 = vpop.permute.xlu0 %3462
      %3464 = vrot.lane.b32.xlu0 %v2800, 64
      %v3465 = vpop.permute.xlu0 %3464
      %3466 = vrot.lane.b32.xlu0 %v2802, 64
      %v3467 = vpop.permute.xlu0 %3466
      %3468 = vrot.lane.b32.xlu0 %v2805, 64
      %v3469 = vpop.permute.xlu0 %3468
      %3470 = vrot.lane.b32.xlu0 %v2807, 64
      %v3471 = vpop.permute.xlu0 %3470
      %3472 = vrot.lane.b32.xlu0 %v2810, 64
      %v3473 = vpop.permute.xlu0 %3472
      %3474 = vrot.lane.b32.xlu0 %v2812, 64
      %v3475 = vpop.permute.xlu0 %3474
      %3476 = vrot.lane.b32.xlu0 %v2815, 64
      %v3477 = vpop.permute.xlu0 %3476
      %3478 = vrot.lane.b32.xlu0 %v2817, 64
      %v3479 = vpop.permute.xlu0 %3478
      %3480 = vrot.lane.b32.xlu0 %v2820, 64
      %v3481 = vpop.permute.xlu0 %3480
      %3482 = vrot.lane.b32.xlu0 %v2822, 64
      %v3483 = vpop.permute.xlu0 %3482
      %3484 = vrot.lane.b32.xlu0 %v2825, 64
      %v3485 = vpop.permute.xlu0 %3484
      %3486 = vrot.lane.b32.xlu0 %v2827, 64
      %v3487 = vpop.permute.xlu0 %3486
      %3488 = vrot.lane.b32.xlu0 %v2830, 64
      %v3489 = vpop.permute.xlu0 %3488
      %3490 = vrot.lane.b32.xlu0 %v2832, 64
      %v3491 = vpop.permute.xlu0 %3490
      %3492 = vrot.lane.b32.xlu0 %v2835, 64
      %v3493 = vpop.permute.xlu0 %3492
      %3494 = vrot.lane.b32.xlu0 %v2837, 64
      %v3495 = vpop.permute.xlu0 %3494
      %3496 = vrot.lane.b32.xlu0 %v3136, 64
      %v3497 = vpop.permute.xlu0 %3496
      %3498 = vrot.lane.b32.xlu0 %v3138, 64
      %v3499 = vpop.permute.xlu0 %3498
      %3500 = vrot.lane.b32.xlu0 %v3437, 64
      %v3501 = vpop.permute.xlu0 %3500
      %3502 = vrot.lane.b32.xlu0 %v3439, 64
      %v3503 = vpop.permute.xlu0 %3502
      %v3536 = vsel %vm1651, %v2480, %v2663
      %v3537 = vsel %vm1651, %v2481, %v2665
      %v3538 = vsel %vm1651, %v2483, %v2667
      %v3539 = vsel %vm1651, %v2484, %v2669
      %v3540 = vsel %vm1651, %v2486, %v2671
      %v3541 = vsel %vm1651, %v2487, %v2673
      %v3542 = vsel %vm1651, %v2489, %v2675
      %v3543 = vsel %vm1651, %v2490, %v2677
      %v3544 = vsel %vm1651, %v2492, %v2679
      %v3545 = vsel %vm1651, %v2493, %v2681
      %v3546 = vsel %vm1651, %v2495, %v2683
      %v3547 = vsel %vm1651, %v2496, %v2685
      %v3548 = vsel %vm1651, %v2498, %v2687
      %v3549 = vsel %vm1651, %v2499, %v2689
      %v3550 = vsel %vm1651, %v2501, %v2691
      %v3551 = vsel %vm1651, %v2502, %v2693
      %v3552 = vsel %vm1651, %v2504, %v2695
      %v3553 = vsel %vm1651, %v2505, %v2697
      %v3554 = vsel %vm1651, %v2507, %v2699
      %v3555 = vsel %vm1651, %v2508, %v2701
      %v3556 = vsel %vm1651, %v2510, %v2703
      %v3557 = vsel %vm1651, %v2511, %v2705
      %v3558 = vsel %vm1651, %v2513, %v2707
      %v3559 = vsel %vm1651, %v2514, %v2709
      %v3560 = vsel %vm1651, %v2516, %v2711
      %v3561 = vsel %vm1651, %v2517, %v2713
      %v3562 = vsel %vm1651, %v2519, %v2715
      %v3563 = vsel %vm1651, %v2520, %v2717
      %v3564 = vsel %vm1651, %v2522, %v2719
      %v3565 = vsel %vm1651, %v2523, %v2721
      %v3566 = vsel %vm1651, %v2525, %v2723
      %v3567 = vsel %vm1651, %v2526, %v2725
      %v3568 = vsel %vm1725, %v3536, %v2839
      %v3569 = vsel %vm1725, %v3537, %v2841
      %v3570 = vsel %vm1725, %v3538, %v2843
      %v3571 = vsel %vm1725, %v3539, %v2845
      %v3572 = vsel %vm1725, %v3540, %v2847
      %v3573 = vsel %vm1725, %v3541, %v2849
      %v3574 = vsel %vm1725, %v3542, %v2851
      %v3575 = vsel %vm1725, %v3543, %v2853
      %v3576 = vsel %vm1725, %v3544, %v2855
      %v3577 = vsel %vm1725, %v3545, %v2857
      %v3578 = vsel %vm1725, %v3546, %v2859
      %v3579 = vsel %vm1725, %v3547, %v2861
      %v3580 = vsel %vm1725, %v3548, %v2863
      %v3581 = vsel %vm1725, %v3549, %v2865
      %v3582 = vsel %vm1725, %v3550, %v2867
      %v3583 = vsel %vm1725, %v3551, %v2869
      %v3584 = vsel %vm1725, %v3552, %v2871
      %v3585 = vsel %vm1725, %v3553, %v2873
      %v3586 = vsel %vm1725, %v3554, %v2875
      %v3587 = vsel %vm1725, %v3555, %v2877
      %v3588 = vsel %vm1725, %v3556, %v2879
      %v3589 = vsel %vm1725, %v3557, %v2881
      %v3590 = vsel %vm1725, %v3558, %v2883
      %v3591 = vsel %vm1725, %v3559, %v2885
      %v3592 = vsel %vm1725, %v3560, %v2887
      %v3593 = vsel %vm1725, %v3561, %v2889
      %v3594 = vsel %vm1725, %v3562, %v2891
      %v3595 = vsel %vm1725, %v3563, %v2893
      %v3596 = vsel %vm1725, %v3564, %v2895
      %v3597 = vsel %vm1725, %v3565, %v2897
      %v3598 = vsel %vm1725, %v3566, %v2899
      %v3599 = vsel %vm1725, %v3567, %v2901
      %v3600 = vsel %vm1799, %v3568, %v2937
      %v3601 = vsel %vm1799, %v3569, %v2939
      %v3602 = vsel %vm1799, %v3570, %v2941
      %v3603 = vsel %vm1799, %v3571, %v2943
      %v3604 = vsel %vm1799, %v3572, %v2945
      %v3605 = vsel %vm1799, %v3573, %v2947
      %v3606 = vsel %vm1799, %v3574, %v2949
      %v3607 = vsel %vm1799, %v3575, %v2951
      %v3608 = vsel %vm1799, %v3576, %v2953
      %v3609 = vsel %vm1799, %v3577, %v2955
      %v3610 = vsel %vm1799, %v3578, %v2957
      %v3611 = vsel %vm1799, %v3579, %v2959
      %v3612 = vsel %vm1799, %v3580, %v2961
      %v3613 = vsel %vm1799, %v3581, %v2963
      %v3614 = vsel %vm1799, %v3582, %v2965
      %v3615 = vsel %vm1799, %v3583, %v2967
      %v3616 = vsel %vm1799, %v3584, %v2969
      %v3617 = vsel %vm1799, %v3585, %v2971
      %v3618 = vsel %vm1799, %v3586, %v2973
      %v3619 = vsel %vm1799, %v3587, %v2975
      %v3620 = vsel %vm1799, %v3588, %v2977
      %v3621 = vsel %vm1799, %v3589, %v2979
      %v3622 = vsel %vm1799, %v3590, %v2981
      %v3623 = vsel %vm1799, %v3591, %v2983
      %v3624 = vsel %vm1799, %v3592, %v2985
      %v3625 = vsel %vm1799, %v3593, %v2987
      %v3626 = vsel %vm1799, %v3594, %v2989
      %v3627 = vsel %vm1799, %v3595, %v2991
      %v3628 = vsel %vm1799, %v3596, %v2993
      %v3629 = vsel %vm1799, %v3597, %v2995
      %v3630 = vsel %vm1799, %v3598, %v2997
      %v3631 = vsel %vm1799, %v3599, %v2999
      %v3632 = vsel %vm1873, %v3600, %v3039
      %v3633 = vsel %vm1873, %v3601, %v3041
      %v3634 = vsel %vm1873, %v3602, %v3043
      %v3635 = vsel %vm1873, %v3603, %v3045
      %v3636 = vsel %vm1873, %v3604, %v3047
      %v3637 = vsel %vm1873, %v3605, %v3049
      %v3638 = vsel %vm1873, %v3606, %v3051
      %v3639 = vsel %vm1873, %v3607, %v3053
      %v3640 = vsel %vm1873, %v3608, %v3055
      %v3641 = vsel %vm1873, %v3609, %v3057
      %v3642 = vsel %vm1873, %v3610, %v3059
      %v3643 = vsel %vm1873, %v3611, %v3061
      %v3644 = vsel %vm1873, %v3612, %v3063
      %v3645 = vsel %vm1873, %v3613, %v3065
      %v3646 = vsel %vm1873, %v3614, %v3067
      %v3647 = vsel %vm1873, %v3615, %v3069
      %v3648 = vsel %vm1873, %v3616, %v3071
      %v3649 = vsel %vm1873, %v3617, %v3073
      %v3650 = vsel %vm1873, %v3618, %v3075
      %v3651 = vsel %vm1873, %v3619, %v3077
      %v3652 = vsel %vm1873, %v3620, %v3079
      %v3653 = vsel %vm1873, %v3621, %v3081
      %v3654 = vsel %vm1873, %v3622, %v3083
      %v3655 = vsel %vm1873, %v3623, %v3085
      %v3656 = vsel %vm1873, %v3624, %v3087
      %v3657 = vsel %vm1873, %v3625, %v3089
      %v3658 = vsel %vm1873, %v3626, %v3091
      %v3659 = vsel %vm1873, %v3627, %v3093
      %v3660 = vsel %vm1873, %v3628, %v3095
      %v3661 = vsel %vm1873, %v3629, %v3097
      %v3662 = vsel %vm1873, %v3630, %v3099
      %v3663 = vsel %vm1873, %v3631, %v3101
      %vm3664 = vcmask 326656
      %v3665 = vsel %vm3664, %v3632, %v3140
      %v3666 = vsel %vm3664, %v3633, %v3142
      %v3667 = vsel %vm3664, %v3634, %v3144
      %v3668 = vsel %vm3664, %v3635, %v3146
      %v3669 = vsel %vm3664, %v3636, %v3148
      %v3670 = vsel %vm3664, %v3637, %v3150
      %v3671 = vsel %vm3664, %v3638, %v3152
      %v3672 = vsel %vm3664, %v3639, %v3154
      %v3673 = vsel %vm3664, %v3640, %v3156
      %v3674 = vsel %vm3664, %v3641, %v3158
      %v3675 = vsel %vm3664, %v3642, %v3160
      %v3676 = vsel %vm3664, %v3643, %v3162
      %v3677 = vsel %vm3664, %v3644, %v3164
      %v3678 = vsel %vm3664, %v3645, %v3166
      %v3679 = vsel %vm3664, %v3646, %v3168
      %v3680 = vsel %vm3664, %v3647, %v3170
      %v3681 = vsel %vm3664, %v3648, %v3172
      %v3682 = vsel %vm3664, %v3649, %v3174
      %v3683 = vsel %vm3664, %v3650, %v3176
      %v3684 = vsel %vm3664, %v3651, %v3178
      %v3685 = vsel %vm3664, %v3652, %v3180
      %v3686 = vsel %vm3664, %v3653, %v3182
      %v3687 = vsel %vm3664, %v3654, %v3184
      %v3688 = vsel %vm3664, %v3655, %v3186
      %v3689 = vsel %vm3664, %v3656, %v3188
      %v3690 = vsel %vm3664, %v3657, %v3190
      %v3691 = vsel %vm3664, %v3658, %v3192
      %v3692 = vsel %vm3664, %v3659, %v3194
      %v3693 = vsel %vm3664, %v3660, %v3196
      %v3694 = vsel %vm3664, %v3661, %v3198
      %v3695 = vsel %vm3664, %v3662, %v3200
      %v3696 = vsel %vm3664, %v3663, %v3202
      %vm3697 = vcmask 392192
      %v3698 = vsel %vm3697, %v3665, %v3238
      %v3699 = vsel %vm3697, %v3666, %v3240
      %v3700 = vsel %vm3697, %v3667, %v3242
      %v3701 = vsel %vm3697, %v3668, %v3244
      %v3702 = vsel %vm3697, %v3669, %v3246
      %v3703 = vsel %vm3697, %v3670, %v3248
      %v3704 = vsel %vm3697, %v3671, %v3250
      %v3705 = vsel %vm3697, %v3672, %v3252
      %v3706 = vsel %vm3697, %v3673, %v3254
      %v3707 = vsel %vm3697, %v3674, %v3256
      %v3708 = vsel %vm3697, %v3675, %v3258
      %v3709 = vsel %vm3697, %v3676, %v3260
      %v3710 = vsel %vm3697, %v3677, %v3262
      %v3711 = vsel %vm3697, %v3678, %v3264
      %v3712 = vsel %vm3697, %v3679, %v3266
      %v3713 = vsel %vm3697, %v3680, %v3268
      %v3714 = vsel %vm3697, %v3681, %v3270
      %v3715 = vsel %vm3697, %v3682, %v3272
      %v3716 = vsel %vm3697, %v3683, %v3274
      %v3717 = vsel %vm3697, %v3684, %v3276
      %v3718 = vsel %vm3697, %v3685, %v3278
      %v3719 = vsel %vm3697, %v3686, %v3280
      %v3720 = vsel %vm3697, %v3687, %v3282
      %v3721 = vsel %vm3697, %v3688, %v3284
      %v3722 = vsel %vm3697, %v3689, %v3286
      %v3723 = vsel %vm3697, %v3690, %v3288
      %v3724 = vsel %vm3697, %v3691, %v3290
      %v3725 = vsel %vm3697, %v3692, %v3292
      %v3726 = vsel %vm3697, %v3693, %v3294
      %v3727 = vsel %vm3697, %v3694, %v3296
      %v3728 = vsel %vm3697, %v3695, %v3298
      %v3729 = vsel %vm3697, %v3696, %v3300
      %vm3730 = vcmask 457728
      %v3731 = vsel %vm3730, %v3698, %v3340
      %v3732 = vsel %vm3730, %v3699, %v3342
      %v3733 = vsel %vm3730, %v3700, %v3344
      %v3734 = vsel %vm3730, %v3701, %v3346
      %v3735 = vsel %vm3730, %v3702, %v3348
      %v3736 = vsel %vm3730, %v3703, %v3350
      %v3737 = vsel %vm3730, %v3704, %v3352
      %v3738 = vsel %vm3730, %v3705, %v3354
      %v3739 = vsel %vm3730, %v3706, %v3356
      %v3740 = vsel %vm3730, %v3707, %v3358
      %v3741 = vsel %vm3730, %v3708, %v3360
      %v3742 = vsel %vm3730, %v3709, %v3362
      %v3743 = vsel %vm3730, %v3710, %v3364
      %v3744 = vsel %vm3730, %v3711, %v3366
      %v3745 = vsel %vm3730, %v3712, %v3368
      %v3746 = vsel %vm3730, %v3713, %v3370
      %v3747 = vsel %vm3730, %v3714, %v3372
      %v3748 = vsel %vm3730, %v3715, %v3374
      %v3749 = vsel %vm3730, %v3716, %v3376
      %v3750 = vsel %vm3730, %v3717, %v3378
      %v3751 = vsel %vm3730, %v3718, %v3380
      %v3752 = vsel %vm3730, %v3719, %v3382
      %v3753 = vsel %vm3730, %v3720, %v3384
      %v3754 = vsel %vm3730, %v3721, %v3386
      %v3755 = vsel %vm3730, %v3722, %v3388
      %v3756 = vsel %vm3730, %v3723, %v3390
      %v3757 = vsel %vm3730, %v3724, %v3392
      %v3758 = vsel %vm3730, %v3725, %v3394
      %v3759 = vsel %vm3730, %v3726, %v3396
      %v3760 = vsel %vm3730, %v3727, %v3398
      %v3761 = vsel %vm3730, %v3728, %v3400
      %v3762 = vsel %vm3730, %v3729, %v3402
      %vm3763 = vcmask 523264
      %v3764 = vsel %vm3763, %v3731, %v3441
      %v3765 = vsel %vm3763, %v3732, %v3443
      %v3766 = vsel %vm3763, %v3733, %v3445
      %v3767 = vsel %vm3763, %v3734, %v3447
      %v3768 = vsel %vm3763, %v3735, %v3449
      %v3769 = vsel %vm3763, %v3736, %v3451
      %v3770 = vsel %vm3763, %v3737, %v3453
      %v3771 = vsel %vm3763, %v3738, %v3455
      %v3772 = vsel %vm3763, %v3739, %v3457
      %v3773 = vsel %vm3763, %v3740, %v3459
      %v3774 = vsel %vm3763, %v3741, %v3461
      %v3775 = vsel %vm3763, %v3742, %v3463
      %v3776 = vsel %vm3763, %v3743, %v3465
      %v3777 = vsel %vm3763, %v3744, %v3467
      %v3778 = vsel %vm3763, %v3745, %v3469
      %v3779 = vsel %vm3763, %v3746, %v3471
      %v3780 = vsel %vm3763, %v3747, %v3473
      %v3781 = vsel %vm3763, %v3748, %v3475
      %v3782 = vsel %vm3763, %v3749, %v3477
      %v3783 = vsel %vm3763, %v3750, %v3479
      %v3784 = vsel %vm3763, %v3751, %v3481
      %v3785 = vsel %vm3763, %v3752, %v3483
      %v3786 = vsel %vm3763, %v3753, %v3485
      %v3787 = vsel %vm3763, %v3754, %v3487
      %v3788 = vsel %vm3763, %v3755, %v3489
      %v3789 = vsel %vm3763, %v3756, %v3491
      %v3790 = vsel %vm3763, %v3757, %v3493
      %v3791 = vsel %vm3763, %v3758, %v3495
      %v3792 = vsel %vm3763, %v3759, %v3497
      %v3793 = vsel %vm3763, %v3760, %v3499
      %v3794 = vsel %vm3763, %v3761, %v3501
      %v3795 = vsel %vm3763, %v3762, %v3503
      %v3796 = vld [vmem:[%s5] sm:$0xff]
      %v3797 = vld [vmem:[%s5 + $0x8] sm:$0xff]
      %v3798 = vld [vmem:[%s5 + $0x10] sm:$0xff]
      %v3799 = vld [vmem:[%s5 + $0x18] sm:$0xff]
      %v3800 = vld [vmem:[%s5 + $0x20] sm:$0xff]
      %v3801 = vld [vmem:[%s5 + $0x28] sm:$0xff]
      %v3802 = vld [vmem:[%s5 + $0x30] sm:$0xff]
      %v3803 = vld [vmem:[%s5 + $0x38] sm:$0xff]
      %v3804 = vld [vmem:[%s5 + $0x40] sm:$0xff]
      %vm3805 = vcmask 588800
      %v3807 = vsel %vm3805, %v3764, 0
      %v3810 = vsel %vm3805, %v3765, 0
      %v3813 = vsel %vm3805, %v3766, 0
      %v3816 = vsel %vm3805, %v3767, 0
      %v3819 = vsel %vm3805, %v3768, 0
      %v3822 = vsel %vm3805, %v3769, 0
      %v3825 = vsel %vm3805, %v3770, 0
      %v3828 = vsel %vm3805, %v3771, 0
      %v3831 = vsel %vm3805, %v3772, 0
      %v3834 = vsel %vm3805, %v3773, 0
      %v3837 = vsel %vm3805, %v3774, 0
      %v3840 = vsel %vm3805, %v3775, 0
      %v3843 = vsel %vm3805, %v3776, 0
      %v3846 = vsel %vm3805, %v3777, 0
      %v3849 = vsel %vm3805, %v3778, 0
      %v3852 = vsel %vm3805, %v3779, 0
      %v3855 = vsel %vm3805, %v3780, 0
      %v3858 = vsel %vm3805, %v3781, 0
      %v3861 = vsel %vm3805, %v3782, 0
      %v3864 = vsel %vm3805, %v3783, 0
      %v3867 = vsel %vm3805, %v3784, 0
      %v3870 = vsel %vm3805, %v3785, 0
      %v3873 = vsel %vm3805, %v3786, 0
      %v3876 = vsel %vm3805, %v3787, 0
      %v3879 = vsel %vm3805, %v3788, 0
      %v3882 = vsel %vm3805, %v3789, 0
      %v3885 = vsel %vm3805, %v3790, 0
      %v3888 = vsel %vm3805, %v3791, 0
      %v3891 = vsel %vm3805, %v3792, 0
      %v3894 = vsel %vm3805, %v3793, 0
      %v3897 = vsel %vm3805, %v3794, 0
      %v3900 = vsel %vm3805, %v3795, 0
      %3902 = vmatprep.subr.mxu0 0.0
      %3903 = vmatpush1.msra.mxu0 0.0
      %3904 = vmatprep.subr.mxu0 0.0
      %3905 = vmatpush1.msra.mxu0 0.0
      %3906 = vmatprep.subr.mxu0 0.0
      %3907 = vmatpush1.msra.mxu0 0.0
      %3908 = vmatprep.subr.mxu0 0.0
      %3909 = vmatpush1.msra.mxu0 0.0
      %3910 = vmatprep.subr.mxu0 0.0
      %3911 = vmatpush1.msra.mxu0 0.0
      %3912 = vmatprep.subr.mxu0 0.0
      %3913 = vmatpush1.msra.mxu0 0.0
      %3914 = vmatprep.subr.mxu0 0.0
      %3915 = vmatpush1.msra.mxu0 0.0
      %3916 = vmatprep.subr.mxu0 0.0
      %3917 = vmatpush1.msra.mxu0 %v3804
      %3918 = vmatprep.subr.mxu0 0.0
      %3919 = vmatpush1.msra.mxu0 %v3803
      %3920 = vmatprep.subr.mxu0 0.0
      %3921 = vmatpush1.msra.mxu0 %v3802
      %3922 = vmatprep.subr.mxu0 0.0
      %3923 = vmatpush1.msra.mxu0 %v3801
      %3924 = vmatprep.subr.mxu0 0.0
      %3925 = vmatpush1.msra.mxu0 %v3800
      %3926 = vmatprep.subr.mxu0 0.0
      %3927 = vmatpush1.msra.mxu0 %v3799
      %3928 = vmatprep.subr.mxu0 0.0
      %3929 = vmatpush1.msra.mxu0 %v3798
      %3930 = vmatprep.subr.mxu0 0.0
      %3931 = vmatpush1.msra.mxu0 %v3797
      %3932 = vmatprep.subr.mxu0 0.0
      %3933 = vmatpush1.msra.mxu0 %v3796
      %3934 = vmatprep.subr.mxu0 0.0
      %3935 = vmatpush2.msra.mxu0 0.0
      %3936 = vmatprep.subr.mxu0 0.0
      %3937 = vmatpush2.msra.mxu0 0.0
      %3938 = vmatprep.subr.mxu0 0.0
      %3939 = vmatpush2.msra.mxu0 0.0
      %3940 = vmatprep.subr.mxu0 0.0
      %3941 = vmatpush2.msra.mxu0 0.0
      %3942 = vmatprep.subr.mxu0 0.0
      %3943 = vmatpush2.msra.mxu0 0.0
      %3944 = vmatprep.subr.mxu0 0.0
      %3945 = vmatpush2.msra.mxu0 0.0
      %3946 = vmatprep.subr.mxu0 0.0
      %3947 = vmatpush2.msra.mxu0 0.0
      %3948 = vmatprep.subr.mxu0 0.0
      %3949 = vmatpush2.msra.mxu0 0.0
      %3950 = vmatprep.subr.mxu0 0.0
      %3951 = vmatpush2.msra.mxu0 0.0
      %3952 = vmatprep.subr.mxu0 0.0
      %3953 = vmatpush2.msra.mxu0 0.0
      %3954 = vmatprep.subr.mxu0 0.0
      %3955 = vmatpush2.msra.mxu0 0.0
      %3956 = vmatprep.subr.mxu0 0.0
      %3957 = vmatpush2.msra.mxu0 0.0
      %3958 = vmatprep.subr.mxu0 0.0
      %3959 = vmatpush2.msra.mxu0 0.0
      %3960 = vmatprep.subr.mxu0 0.0
      %3961 = vmatpush2.msra.mxu0 0.0
      %3962 = vmatprep.subr.mxu0 0.0
      %3963 = vmatpush2.msra.mxu0 0.0
      %3964 = vmatprep.subr.mxu0 0.0
      %3965 = vmatpush2.msra.mxu0 0.0
      %3966 = vmatprep.mubr.f32.mxu0 0.0
      %3967 = vmatmul.mubr.f32.gmra.mxu0 %v3807
      %v3968 = vpop.f32.mrf.mxu0
      %v3969 = vadd.f32 0.0, %v3968
      %v3970 = vpop.f32.mrf.mxu0
      %3971 = vmatprep.mubr.f32.mxu0 0.0
      %3972 = vmatmul.mubr.f32.gmra.mxu0 %v3810
      %v3973 = vpop.f32.mrf.mxu0
      %v3974 = vadd.f32 0.0, %v3973
      %v3975 = vpop.f32.mrf.mxu0
      %3976 = vmatprep.mubr.f32.mxu0 0.0
      %3977 = vmatmul.mubr.f32.gmra.mxu0 %v3813
      %v3978 = vpop.f32.mrf.mxu0
      %v3979 = vadd.f32 0.0, %v3978
      %v3980 = vpop.f32.mrf.mxu0
      %3981 = vmatprep.mubr.f32.mxu0 0.0
      %3982 = vmatmul.mubr.f32.gmra.mxu0 %v3816
      %v3983 = vpop.f32.mrf.mxu0
      %v3984 = vadd.f32 0.0, %v3983
      %v3985 = vpop.f32.mrf.mxu0
      %3986 = vmatprep.mubr.f32.mxu0 0.0
      %3987 = vmatmul.mubr.f32.gmra.mxu0 %v3819
      %v3988 = vpop.f32.mrf.mxu0
      %v3989 = vadd.f32 0.0, %v3988
      %v3990 = vpop.f32.mrf.mxu0
      %3991 = vmatprep.mubr.f32.mxu0 0.0
      %3992 = vmatmul.mubr.f32.gmra.mxu0 %v3822
      %v3993 = vpop.f32.mrf.mxu0
      %v3994 = vadd.f32 0.0, %v3993
      %v3995 = vpop.f32.mrf.mxu0
      %3996 = vmatprep.mubr.f32.mxu0 0.0
      %3997 = vmatmul.mubr.f32.gmra.mxu0 %v3825
      %v3998 = vpop.f32.mrf.mxu0
      %v3999 = vadd.f32 0.0, %v3998
      %v4000 = vpop.f32.mrf.mxu0
      %4001 = vmatprep.mubr.f32.mxu0 0.0
      %4002 = vmatmul.mubr.f32.gmra.mxu0 %v3828
      %v4003 = vpop.f32.mrf.mxu0
      %v4004 = vadd.f32 0.0, %v4003
      %v4005 = vpop.f32.mrf.mxu0
      %4006 = vmatprep.mubr.f32.mxu0 0.0
      %4007 = vmatmul.mubr.f32.gmra.mxu0 %v3831
      %v4008 = vpop.f32.mrf.mxu0
      %v4009 = vadd.f32 0.0, %v4008
      %v4010 = vpop.f32.mrf.mxu0
      %4011 = vmatprep.mubr.f32.mxu0 0.0
      %4012 = vmatmul.mubr.f32.gmra.mxu0 %v3834
      %v4013 = vpop.f32.mrf.mxu0
      %v4014 = vadd.f32 0.0, %v4013
      %v4015 = vpop.f32.mrf.mxu0
      %4016 = vmatprep.mubr.f32.mxu0 0.0
      %4017 = vmatmul.mubr.f32.gmra.mxu0 %v3837
      %v4018 = vpop.f32.mrf.mxu0
      %v4019 = vadd.f32 0.0, %v4018
      %v4020 = vpop.f32.mrf.mxu0
      %4021 = vmatprep.mubr.f32.mxu0 0.0
      %4022 = vmatmul.mubr.f32.gmra.mxu0 %v3840
      %v4023 = vpop.f32.mrf.mxu0
      %v4024 = vadd.f32 0.0, %v4023
      %v4025 = vpop.f32.mrf.mxu0
      %4026 = vmatprep.mubr.f32.mxu0 0.0
      %4027 = vmatmul.mubr.f32.gmra.mxu0 %v3843
      %v4028 = vpop.f32.mrf.mxu0
      %v4029 = vadd.f32 0.0, %v4028
      %v4030 = vpop.f32.mrf.mxu0
      %4031 = vmatprep.mubr.f32.mxu0 0.0
      %4032 = vmatmul.mubr.f32.gmra.mxu0 %v3846
      %v4033 = vpop.f32.mrf.mxu0
      %v4034 = vadd.f32 0.0, %v4033
      %v4035 = vpop.f32.mrf.mxu0
      %4036 = vmatprep.mubr.f32.mxu0 0.0
      %4037 = vmatmul.mubr.f32.gmra.mxu0 %v3849
      %v4038 = vpop.f32.mrf.mxu0
      %v4039 = vadd.f32 0.0, %v4038
      %v4040 = vpop.f32.mrf.mxu0
      %4041 = vmatprep.mubr.f32.mxu0 0.0
      %4042 = vmatmul.mubr.f32.gmra.mxu0 %v3852
      %v4043 = vpop.f32.mrf.mxu0
      %v4044 = vadd.f32 0.0, %v4043
      %v4045 = vpop.f32.mrf.mxu0
      %4046 = vmatprep.mubr.f32.mxu0 0.0
      %4047 = vmatmul.mubr.f32.gmra.mxu0 %v3855
      %v4048 = vpop.f32.mrf.mxu0
      %v4049 = vadd.f32 0.0, %v4048
      %v4050 = vpop.f32.mrf.mxu0
      %4051 = vmatprep.mubr.f32.mxu0 0.0
      %4052 = vmatmul.mubr.f32.gmra.mxu0 %v3858
      %v4053 = vpop.f32.mrf.mxu0
      %v4054 = vadd.f32 0.0, %v4053
      %v4055 = vpop.f32.mrf.mxu0
      %4056 = vmatprep.mubr.f32.mxu0 0.0
      %4057 = vmatmul.mubr.f32.gmra.mxu0 %v3861
      %v4058 = vpop.f32.mrf.mxu0
      %v4059 = vadd.f32 0.0, %v4058
      %v4060 = vpop.f32.mrf.mxu0
      %4061 = vmatprep.mubr.f32.mxu0 0.0
      %4062 = vmatmul.mubr.f32.gmra.mxu0 %v3864
      %v4063 = vpop.f32.mrf.mxu0
      %v4064 = vadd.f32 0.0, %v4063
      %v4065 = vpop.f32.mrf.mxu0
      %4066 = vmatprep.mubr.f32.mxu0 0.0
      %4067 = vmatmul.mubr.f32.gmra.mxu0 %v3867
      %v4068 = vpop.f32.mrf.mxu0
      %v4069 = vadd.f32 0.0, %v4068
      %v4070 = vpop.f32.mrf.mxu0
      %4071 = vmatprep.mubr.f32.mxu0 0.0
      %4072 = vmatmul.mubr.f32.gmra.mxu0 %v3870
      %v4073 = vpop.f32.mrf.mxu0
      %v4074 = vadd.f32 0.0, %v4073
      %v4075 = vpop.f32.mrf.mxu0
      %4076 = vmatprep.mubr.f32.mxu0 0.0
      %4077 = vmatmul.mubr.f32.gmra.mxu0 %v3873
      %v4078 = vpop.f32.mrf.mxu0
      %v4079 = vadd.f32 0.0, %v4078
      %v4080 = vpop.f32.mrf.mxu0
      %4081 = vmatprep.mubr.f32.mxu0 0.0
      %4082 = vmatmul.mubr.f32.gmra.mxu0 %v3876
      %v4083 = vpop.f32.mrf.mxu0
      %v4084 = vadd.f32 0.0, %v4083
      %v4085 = vpop.f32.mrf.mxu0
      %4086 = vmatprep.mubr.f32.mxu0 0.0
      %4087 = vmatmul.mubr.f32.gmra.mxu0 %v3879
      %v4088 = vpop.f32.mrf.mxu0
      %v4089 = vadd.f32 0.0, %v4088
      %v4090 = vpop.f32.mrf.mxu0
      %4091 = vmatprep.mubr.f32.mxu0 0.0
      %4092 = vmatmul.mubr.f32.gmra.mxu0 %v3882
      %v4093 = vpop.f32.mrf.mxu0
      %v4094 = vadd.f32 0.0, %v4093
      %v4095 = vpop.f32.mrf.mxu0
      %4096 = vmatprep.mubr.f32.mxu0 0.0
      %4097 = vmatmul.mubr.f32.gmra.mxu0 %v3885
      %v4098 = vpop.f32.mrf.mxu0
      %v4099 = vadd.f32 0.0, %v4098
      %v4100 = vpop.f32.mrf.mxu0
      %4101 = vmatprep.mubr.f32.mxu0 0.0
      %4102 = vmatmul.mubr.f32.gmra.mxu0 %v3888
      %v4103 = vpop.f32.mrf.mxu0
      %v4104 = vadd.f32 0.0, %v4103
      %v4105 = vpop.f32.mrf.mxu0
      %4106 = vmatprep.mubr.f32.mxu0 0.0
      %4107 = vmatmul.mubr.f32.gmra.mxu0 %v3891
      %v4108 = vpop.f32.mrf.mxu0
      %v4109 = vadd.f32 0.0, %v4108
      %v4110 = vpop.f32.mrf.mxu0
      %4111 = vmatprep.mubr.f32.mxu0 0.0
      %4112 = vmatmul.mubr.f32.gmra.mxu0 %v3894
      %v4113 = vpop.f32.mrf.mxu0
      %v4114 = vadd.f32 0.0, %v4113
      %v4115 = vpop.f32.mrf.mxu0
      %4116 = vmatprep.mubr.f32.mxu0 0.0
      %4117 = vmatmul.mubr.f32.gmra.mxu0 %v3897
      %v4118 = vpop.f32.mrf.mxu0
      %v4119 = vadd.f32 0.0, %v4118
      %v4120 = vpop.f32.mrf.mxu0
      %4121 = vmatprep.mubr.f32.mxu0 0.0
      %4122 = vmatmul.mubr.f32.gmra.mxu0 %v3900
      %v4123 = vpop.f32.mrf.mxu0
      %v4124 = vadd.f32 0.0, %v4123
      %v4125 = vpop.f32.mrf.mxu0
      %4126 = vdwg.mxu0
      %v4127 = vld [vmem:[%s6] sm:$0x1]
      %v4129 = vlaneseq
      %v4130 = vshrl.u32 %v4129, 7
      %v4131 = vsub.s32 0, %v4130
      %v4132 = vrot.slane %v4127, %v4131
      %v4134 = vmul.f32 %v3969, %v4132
      %v4135 = vmul.f32 %v3974, %v4132
      %v4136 = vmul.f32 %v3979, %v4132
      %v4137 = vmul.f32 %v3984, %v4132
      %v4138 = vmul.f32 %v3989, %v4132
      %v4139 = vmul.f32 %v3994, %v4132
      %v4140 = vmul.f32 %v3999, %v4132
      %v4141 = vmul.f32 %v4004, %v4132
      %v4142 = vmul.f32 %v4009, %v4132
      %v4143 = vmul.f32 %v4014, %v4132
      %v4144 = vmul.f32 %v4019, %v4132
      %v4145 = vmul.f32 %v4024, %v4132
      %v4146 = vmul.f32 %v4029, %v4132
      %v4147 = vmul.f32 %v4034, %v4132
      %v4148 = vmul.f32 %v4039, %v4132
      %v4149 = vmul.f32 %v4044, %v4132
      %v4150 = vmul.f32 %v4049, %v4132
      %v4151 = vmul.f32 %v4054, %v4132
      %v4152 = vmul.f32 %v4059, %v4132
      %v4153 = vmul.f32 %v4064, %v4132
      %v4154 = vmul.f32 %v4069, %v4132
      %v4155 = vmul.f32 %v4074, %v4132
      %v4156 = vmul.f32 %v4079, %v4132
      %v4157 = vmul.f32 %v4084, %v4132
      %v4158 = vmul.f32 %v4089, %v4132
      %v4159 = vmul.f32 %v4094, %v4132
      %v4160 = vmul.f32 %v4099, %v4132
      %v4161 = vmul.f32 %v4104, %v4132
      %v4162 = vmul.f32 %v4109, %v4132
      %v4163 = vmul.f32 %v4114, %v4132
      %v4164 = vmul.f32 %v4119, %v4132
      %v4165 = vmul.f32 %v4124, %v4132
      %v4166 = vld [vmem:[%s7] sm:$0x1]
      %v4168 = vlaneseq
      %v4169 = vshrl.u32 %v4168, 7
      %v4170 = vsub.s32 0, %v4169
      %v4171 = vrot.slane %v4166, %v4170
      %v4173 = vadd.f32 %v4134, %v4171
      %v4174 = vadd.f32 %v4135, %v4171
      %v4175 = vadd.f32 %v4136, %v4171
      %v4176 = vadd.f32 %v4137, %v4171
      %v4177 = vadd.f32 %v4138, %v4171
      %v4178 = vadd.f32 %v4139, %v4171
      %v4179 = vadd.f32 %v4140, %v4171
      %v4180 = vadd.f32 %v4141, %v4171
      %v4181 = vadd.f32 %v4142, %v4171
      %v4182 = vadd.f32 %v4143, %v4171
      %v4183 = vadd.f32 %v4144, %v4171
      %v4184 = vadd.f32 %v4145, %v4171
      %v4185 = vadd.f32 %v4146, %v4171
      %v4186 = vadd.f32 %v4147, %v4171
      %v4187 = vadd.f32 %v4148, %v4171
      %v4188 = vadd.f32 %v4149, %v4171
      %v4189 = vadd.f32 %v4150, %v4171
      %v4190 = vadd.f32 %v4151, %v4171
      %v4191 = vadd.f32 %v4152, %v4171
      %v4192 = vadd.f32 %v4153, %v4171
      %v4193 = vadd.f32 %v4154, %v4171
      %v4194 = vadd.f32 %v4155, %v4171
      %v4195 = vadd.f32 %v4156, %v4171
      %v4196 = vadd.f32 %v4157, %v4171
      %v4197 = vadd.f32 %v4158, %v4171
      %v4198 = vadd.f32 %v4159, %v4171
      %v4199 = vadd.f32 %v4160, %v4171
      %v4200 = vadd.f32 %v4161, %v4171
      %v4201 = vadd.f32 %v4162, %v4171
      %v4202 = vadd.f32 %v4163, %v4171
      %v4203 = vadd.f32 %v4164, %v4171
      %v4204 = vadd.f32 %v4165, %v4171
      %v4205 = vmax.f32 %v4173, 0.0
      %v4206 = vmax.f32 %v4174, 0.0
      %v4207 = vmax.f32 %v4175, 0.0
      %v4208 = vmax.f32 %v4176, 0.0
      %v4209 = vmax.f32 %v4177, 0.0
      %v4210 = vmax.f32 %v4178, 0.0
      %v4211 = vmax.f32 %v4179, 0.0
      %v4212 = vmax.f32 %v4180, 0.0
      %v4213 = vmax.f32 %v4181, 0.0
      %v4214 = vmax.f32 %v4182, 0.0
      %v4215 = vmax.f32 %v4183, 0.0
      %v4216 = vmax.f32 %v4184, 0.0
      %v4217 = vmax.f32 %v4185, 0.0
      %v4218 = vmax.f32 %v4186, 0.0
      %v4219 = vmax.f32 %v4187, 0.0
      %v4220 = vmax.f32 %v4188, 0.0
      %v4221 = vmax.f32 %v4189, 0.0
      %v4222 = vmax.f32 %v4190, 0.0
      %v4223 = vmax.f32 %v4191, 0.0
      %v4224 = vmax.f32 %v4192, 0.0
      %v4225 = vmax.f32 %v4193, 0.0
      %v4226 = vmax.f32 %v4194, 0.0
      %v4227 = vmax.f32 %v4195, 0.0
      %v4228 = vmax.f32 %v4196, 0.0
      %v4229 = vmax.f32 %v4197, 0.0
      %v4230 = vmax.f32 %v4198, 0.0
      %v4231 = vmax.f32 %v4199, 0.0
      %v4232 = vmax.f32 %v4200, 0.0
      %v4233 = vmax.f32 %v4201, 0.0
      %v4234 = vmax.f32 %v4202, 0.0
      %v4235 = vmax.f32 %v4203, 0.0
      %v4236 = vmax.f32 %v4204, 0.0
      %4237 = vst.msk [vmem:[%s426] sm:$0xff] %vm1651, %v4205
      %4238 = vst.msk [vmem:[%s426 + $0x8] sm:$0xff] %vm1651, %v4206
      %4239 = vst.msk [vmem:[%s426 + $0x10] sm:$0xff] %vm1651, %v4207
      %4240 = vst.msk [vmem:[%s426 + $0x18] sm:$0xff] %vm1651, %v4208
      %4241 = vst.msk [vmem:[%s426 + $0x20] sm:$0xff] %vm1651, %v4209
      %4242 = vst.msk [vmem:[%s426 + $0x28] sm:$0xff] %vm1651, %v4210
      %4243 = vst.msk [vmem:[%s426 + $0x30] sm:$0xff] %vm1651, %v4211
      %4244 = vst.msk [vmem:[%s426 + $0x38] sm:$0xff] %vm1651, %v4212
      %4245 = vst.msk [vmem:[%s426 + $0x40] sm:$0xff] %vm1651, %v4213
      %4246 = vst.msk [vmem:[%s426 + $0x48] sm:$0xff] %vm1651, %v4214
      %4247 = vst.msk [vmem:[%s426 + $0x50] sm:$0xff] %vm1651, %v4215
      %4248 = vst.msk [vmem:[%s426 + $0x58] sm:$0xff] %vm1651, %v4216
      %4249 = vst.msk [vmem:[%s426 + $0x60] sm:$0xff] %vm1651, %v4217
      %4250 = vst.msk [vmem:[%s426 + $0x68] sm:$0xff] %vm1651, %v4218
      %4251 = vst.msk [vmem:[%s426 + $0x70] sm:$0xff] %vm1651, %v4219
      %4252 = vst.msk [vmem:[%s426 + $0x78] sm:$0xff] %vm1651, %v4220
      %4253 = vst.msk [vmem:[%s426 + $0x80] sm:$0xff] %vm1651, %v4221
      %4254 = vst.msk [vmem:[%s426 + $0x88] sm:$0xff] %vm1651, %v4222
      %4255 = vst.msk [vmem:[%s426 + $0x90] sm:$0xff] %vm1651, %v4223
      %4256 = vst.msk [vmem:[%s426 + $0x98] sm:$0xff] %vm1651, %v4224
      %4257 = vst.msk [vmem:[%s426 + $0xa0] sm:$0xff] %vm1651, %v4225
      %4258 = vst.msk [vmem:[%s426 + $0xa8] sm:$0xff] %vm1651, %v4226
      %4259 = vst.msk [vmem:[%s426 + $0xb0] sm:$0xff] %vm1651, %v4227
      %4260 = vst.msk [vmem:[%s426 + $0xb8] sm:$0xff] %vm1651, %v4228
      %4261 = vst.msk [vmem:[%s426 + $0xc0] sm:$0xff] %vm1651, %v4229
      %4262 = vst.msk [vmem:[%s426 + $0xc8] sm:$0xff] %vm1651, %v4230
      %4263 = vst.msk [vmem:[%s426 + $0xd0] sm:$0xff] %vm1651, %v4231
      %4264 = vst.msk [vmem:[%s426 + $0xd8] sm:$0xff] %vm1651, %v4232
      %4265 = vst.msk [vmem:[%s426 + $0xe0] sm:$0xff] %vm1651, %v4233
      %4266 = vst.msk [vmem:[%s426 + $0xe8] sm:$0xff] %vm1651, %v4234
      %4267 = vst.msk [vmem:[%s426 + $0xf0] sm:$0xff] %vm1651, %v4235
      %4268 = vst.msk [vmem:[%s426 + $0xf8] sm:$0xff] %vm1651, %v4236
      %s4269 = smul.u32 16, %s24
      %p4270 = scmp.lt.s32.totalorder %s23, 1
      %s4271 = scalar_select %p4270, %s23, 1
      %p4272 = scmp.lt.s32.totalorder %s4269, 15
      %s4273 = scalar_select %p4272, %s4269, 15
      %s4274 = smul.addr %s4273, 2
      %s4275 = smul.addr %s4271, 32
      %s4276 = sadd.s32 %s4274, %s4275
      %s4277 = smul.addr %s4276, 8
      %s4278 = scalar_lea.vmem %s8, %s4277
      // Predicated region
      $region57: #{tpu_custom_call.1} parent=51 // pred_check
        %p4279 = pneg %p237
      $region58: #{tpu_custom_call.1} parent=51 // pred_check_branch
        %4281 = sbr.rel (%p4279) target = $region60
      $region59: #{tpu_custom_call.1} parent=51 // pred_region
        %s4282 = smul.u32 16, %s24
      $region60: #{tpu_custom_call.1} parent=51 // pred_fallthru
        _
    $region52: #{tpu_custom_call.1} parent=5 // pred_fallthru
      _
    %p4283 = scmp.le.s32.totalorder 2, %s14
    // Predicated region
    $region61: #{tpu_custom_call.1} parent=5 // pred_check
      %p4284 = pneg %p4283
    $region62: #{tpu_custom_call.1} parent=5 // pred_check_branch
      %4286 = sbr.rel (%p4284) target = $region64
    $region63: #{tpu_custom_call.1} parent=5 // pred_region
      %s4287 = ssub.s32 %s14, 2
      // Predicated region
      $region65: #{tpu_custom_call.1} parent=63 // pred_check
        %p4288 = pneg %p243
      $region66: #{tpu_custom_call.1} parent=63 // pred_check_branch
        %4290 = sbr.rel (%p4288) target = $region68
      $region67: #{tpu_custom_call.1} parent=63 // pred_region
        %s4291 = smul.u32 16, %s26
        %p4292 = scmp.lt.s32.totalorder %s25, 1
        %s4293 = scalar_select %p4292, %s25, 1
        %p4294 = scmp.lt.s32.totalorder %s4291, 15
        %s4295 = scalar_select %p4294, %s4291, 15
        %s4296 = smul.addr %s4295, 2
        %s4297 = smul.addr %s4293, 32
        %s4298 = sadd.s32 %s4296, %s4297
        %s4299 = smul.addr %s4298, 8
        %s4300 = scalar_lea.vmem %s8, %s4299
      $region68: #{tpu_custom_call.1} parent=63 // pred_fallthru
        _
    $region64: #{tpu_custom_call.1} parent=5 // pred_fallthru
      _
  $region6: #{tpu_custom_call.1} parent=0 // loop_footer
    %s18 = sadd.s32 1, %s14
  $region7: #{tpu_custom_call.1} parent=0 // loop_footer_branch
    %13 = sbr.rel target = $region3
  $region8: #{tpu_custom_call.1} parent=0 // loop_exit
    _

</llo_original>
